<compile_context>
chip_gen: v6e
topology: v6e:2x2x1
jax: 0.10.0
libtpu: 0.0.40
codegen_flags: <defaults>
</compile_context>

<pallas_src>
import jax
import jax.numpy as jnp
import numpy as np
from jax import lax
from jax.experimental import pallas as pl
from jax.experimental.pallas import tpu as pltpu


def _gru_head_kernel(x_ref,          # (L0, B, F)   input sequence (one copy)
                     wih_ref,        # (F, 3F)      W_ih^T, gate order [r|z|n]
                     whh_ref,        # (F, 3F)      W_hh^T, gate order [r|z|n]
                     bi_ref,         # (1, 3F)      [bir+bhr | biz+bhz | bin]
                     bhn_ref,        # (1, F)       bhn (kept separate)
                     cw_ref,         # (F, S)       1x1 conv weight
                     cb_ref,         # (1, S)       conv bias
                     out_ref,        # (L, B, S)    L = modules * L0
                     gi_scr,         # (L0, B, 3F)  hoisted input projections
                     h1_scr):        # (L, B, F)    GRU hidden states
    L0, B, F = x_ref.shape
    L = h1_scr.shape[0]
    modules = L // L0
    S = out_ref.shape[-1]

    x = x_ref[...]                                   # (L0, B, F)
    wih = wih_ref[...]
    whh = whh_ref[...]
    bi = bi_ref[...]
    bhn = bhn_ref[...]

    # ---- hoisted input projection: one lane-dense matmul for all timesteps.
    gi = jnp.dot(x.reshape(L0 * B, F), wih,
                 preferred_element_type=jnp.float32) + bi     # (L0*B, 3F)
    gi_scr[...] = gi.reshape(L0, B, 3 * F)

    # ---- serial GRU recurrence: one fused (B,F)@(F,3F) MXU push per step.
    # PyTorch gate order (r, z, n); x repeats `modules` times, so gi for step
    # m*L0 + t equals gi[t] and the hidden state carries across module copies.
    def make_body(moff):
        def body(t, h):
            gi_t = gi_scr[t]                                      # (B, 3F)
            gh = jnp.dot(h, whh, preferred_element_type=jnp.float32)
            r = jax.nn.sigmoid(gi_t[:, 0:F] + gh[:, 0:F])
            z = jax.nn.sigmoid(gi_t[:, F:2 * F] + gh[:, F:2 * F])
            n = jnp.tanh(gi_t[:, 2 * F:] + r * (gh[:, 2 * F:] + bhn))
            h_new = (1.0 - z) * n + z * h
            h1_scr[moff + t] = h_new
            return h_new
        return body

    h = jnp.zeros((B, F), dtype=jnp.float32)
    for m in range(modules):                        # static, small
        h = lax.fori_loop(0, L0, make_body(m * L0), h, unroll=True)

    # ---- vectorized softmax over time + gating + relu + 1x1 conv.
    h1 = h1_scr[...]                                 # (L, B, F)
    mmax = jnp.max(h1, axis=0)                       # (B, F)
    e = jnp.exp(h1 - mmax[None])                     # (L, B, F)
    denom = jnp.sum(e, axis=0)                       # (B, F)
    attn = e * pl.reciprocal(denom, approx=True)[None]
    xrep = jnp.concatenate([x] * modules, axis=0)    # (L, B, F) == x.repeat
    y = jnp.maximum(xrep * attn, 0.0)                # relu
    out = jnp.dot(y.reshape(L * B, F), cw_ref[...],
                  preferred_element_type=jnp.float32) + cb_ref[...]
    out_ref[...] = out.reshape(L, B, S)


def gru_head_v3(x, params, modules):
    """x: (seq_len, batch, features) float32 (PyTorch time-major GRU input).

    Returns (batch, states, modules*seq_len), matching the PyTorch module.
    """
    L0, B, F = x.shape
    S = params["conv_w"].shape[0]
    L = modules * L0

    # Pad batch to a full sublane group (multiple of 8); pad rows are dropped
    # after the kernel.
    Bp = ((B + 7) // 8) * 8
    xp = x.astype(jnp.float32)
    if Bp != B:
        xp = jnp.pad(xp, ((0, 0), (0, Bp - B), (0, 0)))

    # Fused per-gate weights / merged biases (gate order r, z, n).
    w_ih, w_hh = params["w_ih"], params["w_hh"]          # (3F, F)
    b_ih, b_hh = params["b_ih"], params["b_hh"]          # (3F,)
    wih = jnp.asarray(w_ih.T, jnp.float32)               # (F, 3F)
    whh = jnp.asarray(w_hh.T, jnp.float32)               # (F, 3F)
    bi = jnp.concatenate([b_ih[0:F] + b_hh[0:F],
                          b_ih[F:2 * F] + b_hh[F:2 * F],
                          b_ih[2 * F:]])[None, :].astype(jnp.float32)  # (1,3F)
    bhn = b_hh[2 * F:][None, :].astype(jnp.float32)      # (1, F)
    cw = params["conv_w"][:, :, 0].T.astype(jnp.float32)  # (F, S)
    cb = params["conv_b"][None, :].astype(jnp.float32)    # (1, S)

    vmem = pl.BlockSpec(memory_space=pltpu.MemorySpace.VMEM)
    out = pl.pallas_call(
        _gru_head_kernel,
        out_shape=jax.ShapeDtypeStruct((L, Bp, S), jnp.float32),
        in_specs=[vmem] * 7,
        out_specs=vmem,
        scratch_shapes=[pltpu.VMEM((L0, Bp, 3 * F), jnp.float32),
                        pltpu.VMEM((L, Bp, F), jnp.float32)],
    )(xp, wih, whh, bi, bhn, cw, cb)

    out = out[:, :B]                                     # drop batch padding
    # glue: permute to the PyTorch Conv1d output layout (batch, states, L)
    return jnp.transpose(out, (1, 2, 0))


def reference_forward(x, params, modules):
    """Pure-JAX reference mirroring the PyTorch module exactly."""
    hp = jax.lax.Precision.HIGHEST
    F = x.shape[-1]
    x_rep = jnp.tile(x, (modules, 1, 1))
    w_ih, w_hh = params["w_ih"], params["w_hh"]
    b_ih, b_hh = params["b_ih"], params["b_hh"]

    def cell(h, xt):
        gi = jnp.dot(xt, w_ih.T, precision=hp) + b_ih
        gh = jnp.dot(h, w_hh.T, precision=hp) + b_hh
        i_r, i_z, i_n = jnp.split(gi, 3, axis=-1)
        h_r, h_z, h_n = jnp.split(gh, 3, axis=-1)
        r = jax.nn.sigmoid(i_r + h_r)
        z = jax.nn.sigmoid(i_z + h_z)
        n = jnp.tanh(i_n + r * h_n)
        h_new = (1.0 - z) * n + z * h
        return h_new, h_new

    h0 = jnp.zeros((x.shape[1], F), jnp.float32)
    _, hs = lax.scan(cell, h0, x_rep)                    # (L, B, F)

    xp = jnp.transpose(x_rep, (1, 2, 0))                 # (B, F, L)
    x1p = jnp.transpose(hs, (1, 2, 0))
    y = jnp.maximum(xp * jax.nn.softmax(x1p, axis=-1), 0.0)
    cw = params["conv_w"][:, :, 0]                       # (S, F)
    cb = params["conv_b"]
    return jnp.einsum("sf,bfl->bsl", cw, y, precision=hp) + cb[None, :, None]


if __name__ == "__main__":
    seq_len, batch, features = 8, 4, 32
    modules, states = 2, 2

    key = jax.random.PRNGKey(0)
    ks = jax.random.split(key, 7)
    scale = 0.2
    params = {
        "w_ih": scale * jax.random.normal(ks[0], (3 * features, features), jnp.float32),
        "w_hh": scale * jax.random.normal(ks[1], (3 * features, features), jnp.float32),
        "b_ih": scale * jax.random.normal(ks[2], (3 * features,), jnp.float32),
        "b_hh": scale * jax.random.normal(ks[3], (3 * features,), jnp.float32),
        "conv_w": scale * jax.random.normal(ks[4], (states, features, 1), jnp.float32),
        "conv_b": scale * jax.random.normal(ks[5], (states,), jnp.float32),
    }
    x = jax.random.normal(ks[6], (seq_len, batch, features), jnp.float32)

    out = jax.block_until_ready(gru_head_v3(x, params, modules))
    ref = jax.block_until_ready(reference_forward(x, params, modules))

    assert out.shape == (batch, states, modules * seq_len), out.shape
    max_err = float(np.max(np.abs(np.asarray(out) - np.asarray(ref))))
    assert np.allclose(np.asarray(out), np.asarray(ref), atol=1e-2, rtol=1e-2), max_err
    print("KERNEL_OK")
</pallas_src>

<mosaic_0001>
module attributes {stable_mosaic.version = 11 : i64} {
  func.func @_gru_head_kernel(%arg0: memref<8x8x32xf32, #tpu.memory_space<vmem>>, %arg1: memref<32x96xf32, #tpu.memory_space<vmem>>, %arg2: memref<32x96xf32, #tpu.memory_space<vmem>>, %arg3: memref<1x96xf32, #tpu.memory_space<vmem>>, %arg4: memref<1x32xf32, #tpu.memory_space<vmem>>, %arg5: memref<32x2xf32, #tpu.memory_space<vmem>>, %arg6: memref<1x2xf32, #tpu.memory_space<vmem>>, %arg7: memref<16x8x2xf32, #tpu.memory_space<vmem>>, %arg8: memref<8x8x96xf32, #tpu.memory_space<vmem>>, %arg9: memref<16x8x32xf32, #tpu.memory_space<vmem>>) attributes {dimension_semantics = [], scalar_prefetch = 0 : i64, scratch_operands = 2 : i64, tpu.core_type = #tpu.core_type<tc>} {
    %c0 = arith.constant 0 : index
    %c0_0 = arith.constant 0 : index
    %c0_1 = arith.constant 0 : index
    %0 = vector.load %arg0[%c0, %c0_0, %c0_1] : memref<8x8x32xf32, #tpu.memory_space<vmem>>, vector<8x8x32xf32>
    %c0_2 = arith.constant 0 : index
    %c0_3 = arith.constant 0 : index
    %1 = vector.load %arg1[%c0_2, %c0_3] : memref<32x96xf32, #tpu.memory_space<vmem>>, vector<32x96xf32>
    %c0_4 = arith.constant 0 : index
    %c0_5 = arith.constant 0 : index
    %2 = vector.load %arg2[%c0_4, %c0_5] : memref<32x96xf32, #tpu.memory_space<vmem>>, vector<32x96xf32>
    %c0_6 = arith.constant 0 : index
    %c0_7 = arith.constant 0 : index
    %3 = vector.load %arg3[%c0_6, %c0_7] : memref<1x96xf32, #tpu.memory_space<vmem>>, vector<1x96xf32>
    %c0_8 = arith.constant 0 : index
    %c0_9 = arith.constant 0 : index
    %4 = vector.load %arg4[%c0_8, %c0_9] : memref<1x32xf32, #tpu.memory_space<vmem>>, vector<1x32xf32>
    %5 = vector.shape_cast %0 : vector<8x8x32xf32> to vector<64x32xf32>
    %cst = arith.constant dense<0.000000e+00> : vector<64x96xf32>
    %6 = tpu.matmul %5, %1, %cst {dimension_numbers = #tpu.dot_dimension_numbers<[1], [0], [0], [1], [0, 0, 1, 1], [], []>} : vector<64x32xf32>, vector<32x96xf32>, vector<64x96xf32> -> vector<64x96xf32>
    %7 = vector.broadcast %3 : vector<1x96xf32> to vector<64x96xf32>
    %8 = arith.addf %6, %7 : vector<64x96xf32>
    %9 = vector.shape_cast %8 : vector<64x96xf32> to vector<8x8x96xf32>
    %c0_10 = arith.constant 0 : index
    %c0_11 = arith.constant 0 : index
    %c0_12 = arith.constant 0 : index
    %10 = vector.load %arg8[%c0_10, %c0_11, %c0_12] : memref<8x8x96xf32, #tpu.memory_space<vmem>>, vector<8x8x96xf32>
    tpu.vector_store %arg8[%c0_10, %c0_11, %c0_12], %9 {strides = array<i32>} : memref<8x8x96xf32, #tpu.memory_space<vmem>>, vector<8x8x96xf32>,
    %cst_13 = arith.constant 0.000000e+00 : f32
    %11 = vector.broadcast %cst_13 : f32 to vector<8x32xf32>
    %c0_i32 = arith.constant 0 : i32
    %12 = arith.index_cast %c0_i32 : i32 to index
    %c0_14 = arith.constant 0 : index
    %c0_15 = arith.constant 0 : index
    %13 = vector.load %arg8[%12, %c0_14, %c0_15] : memref<8x8x96xf32, #tpu.memory_space<vmem>>, vector<1x8x96xf32>
    %14 = vector.shape_cast %13 : vector<1x8x96xf32> to vector<8x96xf32>
    %cst_16 = arith.constant dense<0.000000e+00> : vector<8x96xf32>
    %15 = tpu.matmul %11, %2, %cst_16 {dimension_numbers = #tpu.dot_dimension_numbers<[1], [0], [0], [1], [0, 0, 1, 1], [], []>} : vector<8x32xf32>, vector<32x96xf32>, vector<8x96xf32> -> vector<8x96xf32>
    %16 = vector.extract_strided_slice %14 {offsets = [0, 0], sizes = [8, 32], strides = [1, 1]} : vector<8x96xf32> to vector<8x32xf32>
    %17 = vector.extract_strided_slice %15 {offsets = [0, 0], sizes = [8, 32], strides = [1, 1]} : vector<8x96xf32> to vector<8x32xf32>
    %18 = arith.addf %16, %17 : vector<8x32xf32>
    %19 = arith.negf %18 : vector<8x32xf32>
    %20 = math.exp %19 : vector<8x32xf32>
    %cst_17 = arith.constant 1.000000e+00 : f32
    %21 = vector.broadcast %cst_17 : f32 to vector<8x32xf32>
    %22 = arith.addf %21, %20 : vector<8x32xf32>
    %23 = arith.divf %21, %22 : vector<8x32xf32>
    %24 = vector.extract_strided_slice %14 {offsets = [0, 32], sizes = [8, 32], strides = [1, 1]} : vector<8x96xf32> to vector<8x32xf32>
    %25 = vector.extract_strided_slice %15 {offsets = [0, 32], sizes = [8, 32], strides = [1, 1]} : vector<8x96xf32> to vector<8x32xf32>
    %26 = arith.addf %24, %25 : vector<8x32xf32>
    %27 = arith.negf %26 : vector<8x32xf32>
    %28 = math.exp %27 : vector<8x32xf32>
    %cst_18 = arith.constant 1.000000e+00 : f32
    %29 = vector.broadcast %cst_18 : f32 to vector<8x32xf32>
    %30 = arith.addf %29, %28 : vector<8x32xf32>
    %31 = arith.divf %29, %30 : vector<8x32xf32>
    %32 = vector.extract_strided_slice %14 {offsets = [0, 64], sizes = [8, 32], strides = [1, 1]} : vector<8x96xf32> to vector<8x32xf32>
    %33 = vector.extract_strided_slice %15 {offsets = [0, 64], sizes = [8, 32], strides = [1, 1]} : vector<8x96xf32> to vector<8x32xf32>
    %34 = vector.broadcast %4 : vector<1x32xf32> to vector<8x32xf32>
    %35 = arith.addf %33, %34 : vector<8x32xf32>
    %36 = arith.mulf %23, %35 : vector<8x32xf32>
    %37 = arith.addf %32, %36 : vector<8x32xf32>
    %38 = math.tanh %37 : vector<8x32xf32>
    %cst_19 = arith.constant 1.000000e+00 : f32
    %39 = vector.broadcast %cst_19 : f32 to vector<8x32xf32>
    %40 = arith.subf %39, %31 : vector<8x32xf32>
    %41 = arith.mulf %40, %38 : vector<8x32xf32>
    %42 = arith.mulf %31, %11 : vector<8x32xf32>
    %43 = arith.addf %41, %42 : vector<8x32xf32>
    %c0_i32_20 = arith.constant 0 : i32
    %44 = arith.addi %c0_i32_20, %c0_i32 : i32
    %45 = arith.index_cast %44 : i32 to index
    %c0_21 = arith.constant 0 : index
    %c0_22 = arith.constant 0 : index
    %46 = vector.load %arg9[%45, %c0_21, %c0_22] : memref<16x8x32xf32, #tpu.memory_space<vmem>>, vector<1x8x32xf32>
    %47 = vector.shape_cast %46 : vector<1x8x32xf32> to vector<8x32xf32>
    %48 = vector.shape_cast %43 : vector<8x32xf32> to vector<1x8x32xf32>
    tpu.vector_store %arg9[%45, %c0_21, %c0_22], %48 {strides = array<i32>} : memref<16x8x32xf32, #tpu.memory_space<vmem>>, vector<1x8x32xf32>,
    %c1_i32 = arith.constant 1 : i32
    %49 = arith.index_cast %c1_i32 : i32 to index
    %c0_23 = arith.constant 0 : index
    %c0_24 = arith.constant 0 : index
    %50 = vector.load %arg8[%49, %c0_23, %c0_24] : memref<8x8x96xf32, #tpu.memory_space<vmem>>, vector<1x8x96xf32>
    %51 = vector.shape_cast %50 : vector<1x8x96xf32> to vector<8x96xf32>
    %cst_25 = arith.constant dense<0.000000e+00> : vector<8x96xf32>
    %52 = tpu.matmul %43, %2, %cst_25 {dimension_numbers = #tpu.dot_dimension_numbers<[1], [0], [0], [1], [0, 0, 1, 1], [], []>} : vector<8x32xf32>, vector<32x96xf32>, vector<8x96xf32> -> vector<8x96xf32>
    %53 = vector.extract_strided_slice %51 {offsets = [0, 0], sizes = [8, 32], strides = [1, 1]} : vector<8x96xf32> to vector<8x32xf32>
    %54 = vector.extract_strided_slice %52 {offsets = [0, 0], sizes = [8, 32], strides = [1, 1]} : vector<8x96xf32> to vector<8x32xf32>
    %55 = arith.addf %53, %54 : vector<8x32xf32>
    %56 = arith.negf %55 : vector<8x32xf32>
    %57 = math.exp %56 : vector<8x32xf32>
    %cst_26 = arith.constant 1.000000e+00 : f32
    %58 = vector.broadcast %cst_26 : f32 to vector<8x32xf32>
    %59 = arith.addf %58, %57 : vector<8x32xf32>
    %60 = arith.divf %58, %59 : vector<8x32xf32>
    %61 = vector.extract_strided_slice %51 {offsets = [0, 32], sizes = [8, 32], strides = [1, 1]} : vector<8x96xf32> to vector<8x32xf32>
    %62 = vector.extract_strided_slice %52 {offsets = [0, 32], sizes = [8, 32], strides = [1, 1]} : vector<8x96xf32> to vector<8x32xf32>
    %63 = arith.addf %61, %62 : vector<8x32xf32>
    %64 = arith.negf %63 : vector<8x32xf32>
    %65 = math.exp %64 : vector<8x32xf32>
    %cst_27 = arith.constant 1.000000e+00 : f32
    %66 = vector.broadcast %cst_27 : f32 to vector<8x32xf32>
    %67 = arith.addf %66, %65 : vector<8x32xf32>
    %68 = arith.divf %66, %67 : vector<8x32xf32>
    %69 = vector.extract_strided_slice %51 {offsets = [0, 64], sizes = [8, 32], strides = [1, 1]} : vector<8x96xf32> to vector<8x32xf32>
    %70 = vector.extract_strided_slice %52 {offsets = [0, 64], sizes = [8, 32], strides = [1, 1]} : vector<8x96xf32> to vector<8x32xf32>
    %71 = vector.broadcast %4 : vector<1x32xf32> to vector<8x32xf32>
    %72 = arith.addf %70, %71 : vector<8x32xf32>
    %73 = arith.mulf %60, %72 : vector<8x32xf32>
    %74 = arith.addf %69, %73 : vector<8x32xf32>
    %75 = math.tanh %74 : vector<8x32xf32>
    %cst_28 = arith.constant 1.000000e+00 : f32
    %76 = vector.broadcast %cst_28 : f32 to vector<8x32xf32>
    %77 = arith.subf %76, %68 : vector<8x32xf32>
    %78 = arith.mulf %77, %75 : vector<8x32xf32>
    %79 = arith.mulf %68, %43 : vector<8x32xf32>
    %80 = arith.addf %78, %79 : vector<8x32xf32>
    %c0_i32_29 = arith.constant 0 : i32
    %81 = arith.addi %c0_i32_29, %c1_i32 : i32
    %82 = arith.index_cast %81 : i32 to index
    %c0_30 = arith.constant 0 : index
    %c0_31 = arith.constant 0 : index
    %83 = vector.load %arg9[%82, %c0_30, %c0_31] : memref<16x8x32xf32, #tpu.memory_space<vmem>>, vector<1x8x32xf32>
    %84 = vector.shape_cast %83 : vector<1x8x32xf32> to vector<8x32xf32>
    %85 = vector.shape_cast %80 : vector<8x32xf32> to vector<1x8x32xf32>
    tpu.vector_store %arg9[%82, %c0_30, %c0_31], %85 {strides = array<i32>} : memref<16x8x32xf32, #tpu.memory_space<vmem>>, vector<1x8x32xf32>,
    %c2_i32 = arith.constant 2 : i32
    %86 = arith.index_cast %c2_i32 : i32 to index
    %c0_32 = arith.constant 0 : index
    %c0_33 = arith.constant 0 : index
    %87 = vector.load %arg8[%86, %c0_32, %c0_33] : memref<8x8x96xf32, #tpu.memory_space<vmem>>, vector<1x8x96xf32>
    %88 = vector.shape_cast %87 : vector<1x8x96xf32> to vector<8x96xf32>
    %cst_34 = arith.constant dense<0.000000e+00> : vector<8x96xf32>
    %89 = tpu.matmul %80, %2, %cst_34 {dimension_numbers = #tpu.dot_dimension_numbers<[1], [0], [0], [1], [0, 0, 1, 1], [], []>} : vector<8x32xf32>, vector<32x96xf32>, vector<8x96xf32> -> vector<8x96xf32>
    %90 = vector.extract_strided_slice %88 {offsets = [0, 0], sizes = [8, 32], strides = [1, 1]} : vector<8x96xf32> to vector<8x32xf32>
    %91 = vector.extract_strided_slice %89 {offsets = [0, 0], sizes = [8, 32], strides = [1, 1]} : vector<8x96xf32> to vector<8x32xf32>
    %92 = arith.addf %90, %91 : vector<8x32xf32>
    %93 = arith.negf %92 : vector<8x32xf32>
    %94 = math.exp %93 : vector<8x32xf32>
    %cst_35 = arith.constant 1.000000e+00 : f32
    %95 = vector.broadcast %cst_35 : f32 to vector<8x32xf32>
    %96 = arith.addf %95, %94 : vector<8x32xf32>
    %97 = arith.divf %95, %96 : vector<8x32xf32>
    %98 = vector.extract_strided_slice %88 {offsets = [0, 32], sizes = [8, 32], strides = [1, 1]} : vector<8x96xf32> to vector<8x32xf32>
    %99 = vector.extract_strided_slice %89 {offsets = [0, 32], sizes = [8, 32], strides = [1, 1]} : vector<8x96xf32> to vector<8x32xf32>
    %100 = arith.addf %98, %99 : vector<8x32xf32>
    %101 = arith.negf %100 : vector<8x32xf32>
    %102 = math.exp %101 : vector<8x32xf32>
    %cst_36 = arith.constant 1.000000e+00 : f32
    %103 = vector.broadcast %cst_36 : f32 to vector<8x32xf32>
    %104 = arith.addf %103, %102 : vector<8x32xf32>
    %105 = arith.divf %103, %104 : vector<8x32xf32>
    %106 = vector.extract_strided_slice %88 {offsets = [0, 64], sizes = [8, 32], strides = [1, 1]} : vector<8x96xf32> to vector<8x32xf32>
    %107 = vector.extract_strided_slice %89 {offsets = [0, 64], sizes = [8, 32], strides = [1, 1]} : vector<8x96xf32> to vector<8x32xf32>
    %108 = vector.broadcast %4 : vector<1x32xf32> to vector<8x32xf32>
    %109 = arith.addf %107, %108 : vector<8x32xf32>
    %110 = arith.mulf %97, %109 : vector<8x32xf32>
    %111 = arith.addf %106, %110 : vector<8x32xf32>
    %112 = math.tanh %111 : vector<8x32xf32>
    %cst_37 = arith.constant 1.000000e+00 : f32
    %113 = vector.broadcast %cst_37 : f32 to vector<8x32xf32>
    %114 = arith.subf %113, %105 : vector<8x32xf32>
    %115 = arith.mulf %114, %112 : vector<8x32xf32>
    %116 = arith.mulf %105, %80 : vector<8x32xf32>
    %117 = arith.addf %115, %116 : vector<8x32xf32>
    %c0_i32_38 = arith.constant 0 : i32
    %118 = arith.addi %c0_i32_38, %c2_i32 : i32
    %119 = arith.index_cast %118 : i32 to index
    %c0_39 = arith.constant 0 : index
    %c0_40 = arith.constant 0 : index
    %120 = vector.load %arg9[%119, %c0_39, %c0_40] : memref<16x8x32xf32, #tpu.memory_space<vmem>>, vector<1x8x32xf32>
    %121 = vector.shape_cast %120 : vector<1x8x32xf32> to vector<8x32xf32>
    %122 = vector.shape_cast %117 : vector<8x32xf32> to vector<1x8x32xf32>
    tpu.vector_store %arg9[%119, %c0_39, %c0_40], %122 {strides = array<i32>} : memref<16x8x32xf32, #tpu.memory_space<vmem>>, vector<1x8x32xf32>,
    %c3_i32 = arith.constant 3 : i32
    %123 = arith.index_cast %c3_i32 : i32 to index
    %c0_41 = arith.constant 0 : index
    %c0_42 = arith.constant 0 : index
    %124 = vector.load %arg8[%123, %c0_41, %c0_42] : memref<8x8x96xf32, #tpu.memory_space<vmem>>, vector<1x8x96xf32>
    %125 = vector.shape_cast %124 : vector<1x8x96xf32> to vector<8x96xf32>
    %cst_43 = arith.constant dense<0.000000e+00> : vector<8x96xf32>
    %126 = tpu.matmul %117, %2, %cst_43 {dimension_numbers = #tpu.dot_dimension_numbers<[1], [0], [0], [1], [0, 0, 1, 1], [], []>} : vector<8x32xf32>, vector<32x96xf32>, vector<8x96xf32> -> vector<8x96xf32>
    %127 = vector.extract_strided_slice %125 {offsets = [0, 0], sizes = [8, 32], strides = [1, 1]} : vector<8x96xf32> to vector<8x32xf32>
    %128 = vector.extract_strided_slice %126 {offsets = [0, 0], sizes = [8, 32], strides = [1, 1]} : vector<8x96xf32> to vector<8x32xf32>
    %129 = arith.addf %127, %128 : vector<8x32xf32>
    %130 = arith.negf %129 : vector<8x32xf32>
    %131 = math.exp %130 : vector<8x32xf32>
    %cst_44 = arith.constant 1.000000e+00 : f32
    %132 = vector.broadcast %cst_44 : f32 to vector<8x32xf32>
    %133 = arith.addf %132, %131 : vector<8x32xf32>
    %134 = arith.divf %132, %133 : vector<8x32xf32>
    %135 = vector.extract_strided_slice %125 {offsets = [0, 32], sizes = [8, 32], strides = [1, 1]} : vector<8x96xf32> to vector<8x32xf32>
    %136 = vector.extract_strided_slice %126 {offsets = [0, 32], sizes = [8, 32], strides = [1, 1]} : vector<8x96xf32> to vector<8x32xf32>
    %137 = arith.addf %135, %136 : vector<8x32xf32>
    %138 = arith.negf %137 : vector<8x32xf32>
    %139 = math.exp %138 : vector<8x32xf32>
    %cst_45 = arith.constant 1.000000e+00 : f32
    %140 = vector.broadcast %cst_45 : f32 to vector<8x32xf32>
    %141 = arith.addf %140, %139 : vector<8x32xf32>
    %142 = arith.divf %140, %141 : vector<8x32xf32>
    %143 = vector.extract_strided_slice %125 {offsets = [0, 64], sizes = [8, 32], strides = [1, 1]} : vector<8x96xf32> to vector<8x32xf32>
    %144 = vector.extract_strided_slice %126 {offsets = [0, 64], sizes = [8, 32], strides = [1, 1]} : vector<8x96xf32> to vector<8x32xf32>
    %145 = vector.broadcast %4 : vector<1x32xf32> to vector<8x32xf32>
    %146 = arith.addf %144, %145 : vector<8x32xf32>
    %147 = arith.mulf %134, %146 : vector<8x32xf32>
    %148 = arith.addf %143, %147 : vector<8x32xf32>
    %149 = math.tanh %148 : vector<8x32xf32>
    %cst_46 = arith.constant 1.000000e+00 : f32
    %150 = vector.broadcast %cst_46 : f32 to vector<8x32xf32>
    %151 = arith.subf %150, %142 : vector<8x32xf32>
    %152 = arith.mulf %151, %149 : vector<8x32xf32>
    %153 = arith.mulf %142, %117 : vector<8x32xf32>
    %154 = arith.addf %152, %153 : vector<8x32xf32>
    %c0_i32_47 = arith.constant 0 : i32
    %155 = arith.addi %c0_i32_47, %c3_i32 : i32
    %156 = arith.index_cast %155 : i32 to index
    %c0_48 = arith.constant 0 : index
    %c0_49 = arith.constant 0 : index
    %157 = vector.load %arg9[%156, %c0_48, %c0_49] : memref<16x8x32xf32, #tpu.memory_space<vmem>>, vector<1x8x32xf32>
    %158 = vector.shape_cast %157 : vector<1x8x32xf32> to vector<8x32xf32>
    %159 = vector.shape_cast %154 : vector<8x32xf32> to vector<1x8x32xf32>
    tpu.vector_store %arg9[%156, %c0_48, %c0_49], %159 {strides = array<i32>} : memref<16x8x32xf32, #tpu.memory_space<vmem>>, vector<1x8x32xf32>,
    %c4_i32 = arith.constant 4 : i32
    %160 = arith.index_cast %c4_i32 : i32 to index
    %c0_50 = arith.constant 0 : index
    %c0_51 = arith.constant 0 : index
    %161 = vector.load %arg8[%160, %c0_50, %c0_51] : memref<8x8x96xf32, #tpu.memory_space<vmem>>, vector<1x8x96xf32>
    %162 = vector.shape_cast %161 : vector<1x8x96xf32> to vector<8x96xf32>
    %cst_52 = arith.constant dense<0.000000e+00> : vector<8x96xf32>
    %163 = tpu.matmul %154, %2, %cst_52 {dimension_numbers = #tpu.dot_dimension_numbers<[1], [0], [0], [1], [0, 0, 1, 1], [], []>} : vector<8x32xf32>, vector<32x96xf32>, vector<8x96xf32> -> vector<8x96xf32>
    %164 = vector.extract_strided_slice %162 {offsets = [0, 0], sizes = [8, 32], strides = [1, 1]} : vector<8x96xf32> to vector<8x32xf32>
    %165 = vector.extract_strided_slice %163 {offsets = [0, 0], sizes = [8, 32], strides = [1, 1]} : vector<8x96xf32> to vector<8x32xf32>
    %166 = arith.addf %164, %165 : vector<8x32xf32>
    %167 = arith.negf %166 : vector<8x32xf32>
    %168 = math.exp %167 : vector<8x32xf32>
    %cst_53 = arith.constant 1.000000e+00 : f32
    %169 = vector.broadcast %cst_53 : f32 to vector<8x32xf32>
    %170 = arith.addf %169, %168 : vector<8x32xf32>
    %171 = arith.divf %169, %170 : vector<8x32xf32>
    %172 = vector.extract_strided_slice %162 {offsets = [0, 32], sizes = [8, 32], strides = [1, 1]} : vector<8x96xf32> to vector<8x32xf32>
    %173 = vector.extract_strided_slice %163 {offsets = [0, 32], sizes = [8, 32], strides = [1, 1]} : vector<8x96xf32> to vector<8x32xf32>
    %174 = arith.addf %172, %173 : vector<8x32xf32>
    %175 = arith.negf %174 : vector<8x32xf32>
    %176 = math.exp %175 : vector<8x32xf32>
    %cst_54 = arith.constant 1.000000e+00 : f32
    %177 = vector.broadcast %cst_54 : f32 to vector<8x32xf32>
    %178 = arith.addf %177, %176 : vector<8x32xf32>
    %179 = arith.divf %177, %178 : vector<8x32xf32>
    %180 = vector.extract_strided_slice %162 {offsets = [0, 64], sizes = [8, 32], strides = [1, 1]} : vector<8x96xf32> to vector<8x32xf32>
    %181 = vector.extract_strided_slice %163 {offsets = [0, 64], sizes = [8, 32], strides = [1, 1]} : vector<8x96xf32> to vector<8x32xf32>
    %182 = vector.broadcast %4 : vector<1x32xf32> to vector<8x32xf32>
    %183 = arith.addf %181, %182 : vector<8x32xf32>
    %184 = arith.mulf %171, %183 : vector<8x32xf32>
    %185 = arith.addf %180, %184 : vector<8x32xf32>
    %186 = math.tanh %185 : vector<8x32xf32>
    %cst_55 = arith.constant 1.000000e+00 : f32
    %187 = vector.broadcast %cst_55 : f32 to vector<8x32xf32>
    %188 = arith.subf %187, %179 : vector<8x32xf32>
    %189 = arith.mulf %188, %186 : vector<8x32xf32>
    %190 = arith.mulf %179, %154 : vector<8x32xf32>
    %191 = arith.addf %189, %190 : vector<8x32xf32>
    %c0_i32_56 = arith.constant 0 : i32
    %192 = arith.addi %c0_i32_56, %c4_i32 : i32
    %193 = arith.index_cast %192 : i32 to index
    %c0_57 = arith.constant 0 : index
    %c0_58 = arith.constant 0 : index
    %194 = vector.load %arg9[%193, %c0_57, %c0_58] : memref<16x8x32xf32, #tpu.memory_space<vmem>>, vector<1x8x32xf32>
    %195 = vector.shape_cast %194 : vector<1x8x32xf32> to vector<8x32xf32>
    %196 = vector.shape_cast %191 : vector<8x32xf32> to vector<1x8x32xf32>
    tpu.vector_store %arg9[%193, %c0_57, %c0_58], %196 {strides = array<i32>} : memref<16x8x32xf32, #tpu.memory_space<vmem>>, vector<1x8x32xf32>,
    %c5_i32 = arith.constant 5 : i32
    %197 = arith.index_cast %c5_i32 : i32 to index
    %c0_59 = arith.constant 0 : index
    %c0_60 = arith.constant 0 : index
    %198 = vector.load %arg8[%197, %c0_59, %c0_60] : memref<8x8x96xf32, #tpu.memory_space<vmem>>, vector<1x8x96xf32>
    %199 = vector.shape_cast %198 : vector<1x8x96xf32> to vector<8x96xf32>
    %cst_61 = arith.constant dense<0.000000e+00> : vector<8x96xf32>
    %200 = tpu.matmul %191, %2, %cst_61 {dimension_numbers = #tpu.dot_dimension_numbers<[1], [0], [0], [1], [0, 0, 1, 1], [], []>} : vector<8x32xf32>, vector<32x96xf32>, vector<8x96xf32> -> vector<8x96xf32>
    %201 = vector.extract_strided_slice %199 {offsets = [0, 0], sizes = [8, 32], strides = [1, 1]} : vector<8x96xf32> to vector<8x32xf32>
    %202 = vector.extract_strided_slice %200 {offsets = [0, 0], sizes = [8, 32], strides = [1, 1]} : vector<8x96xf32> to vector<8x32xf32>
    %203 = arith.addf %201, %202 : vector<8x32xf32>
    %204 = arith.negf %203 : vector<8x32xf32>
    %205 = math.exp %204 : vector<8x32xf32>
    %cst_62 = arith.constant 1.000000e+00 : f32
    %206 = vector.broadcast %cst_62 : f32 to vector<8x32xf32>
    %207 = arith.addf %206, %205 : vector<8x32xf32>
    %208 = arith.divf %206, %207 : vector<8x32xf32>
    %209 = vector.extract_strided_slice %199 {offsets = [0, 32], sizes = [8, 32], strides = [1, 1]} : vector<8x96xf32> to vector<8x32xf32>
    %210 = vector.extract_strided_slice %200 {offsets = [0, 32], sizes = [8, 32], strides = [1, 1]} : vector<8x96xf32> to vector<8x32xf32>
    %211 = arith.addf %209, %210 : vector<8x32xf32>
    %212 = arith.negf %211 : vector<8x32xf32>
    %213 = math.exp %212 : vector<8x32xf32>
    %cst_63 = arith.constant 1.000000e+00 : f32
    %214 = vector.broadcast %cst_63 : f32 to vector<8x32xf32>
    %215 = arith.addf %214, %213 : vector<8x32xf32>
    %216 = arith.divf %214, %215 : vector<8x32xf32>
    %217 = vector.extract_strided_slice %199 {offsets = [0, 64], sizes = [8, 32], strides = [1, 1]} : vector<8x96xf32> to vector<8x32xf32>
    %218 = vector.extract_strided_slice %200 {offsets = [0, 64], sizes = [8, 32], strides = [1, 1]} : vector<8x96xf32> to vector<8x32xf32>
    %219 = vector.broadcast %4 : vector<1x32xf32> to vector<8x32xf32>
    %220 = arith.addf %218, %219 : vector<8x32xf32>
    %221 = arith.mulf %208, %220 : vector<8x32xf32>
    %222 = arith.addf %217, %221 : vector<8x32xf32>
    %223 = math.tanh %222 : vector<8x32xf32>
    %cst_64 = arith.constant 1.000000e+00 : f32
    %224 = vector.broadcast %cst_64 : f32 to vector<8x32xf32>
    %225 = arith.subf %224, %216 : vector<8x32xf32>
    %226 = arith.mulf %225, %223 : vector<8x32xf32>
    %227 = arith.mulf %216, %191 : vector<8x32xf32>
    %228 = arith.addf %226, %227 : vector<8x32xf32>
    %c0_i32_65 = arith.constant 0 : i32
    %229 = arith.addi %c0_i32_65, %c5_i32 : i32
    %230 = arith.index_cast %229 : i32 to index
    %c0_66 = arith.constant 0 : index
    %c0_67 = arith.constant 0 : index
    %231 = vector.load %arg9[%230, %c0_66, %c0_67] : memref<16x8x32xf32, #tpu.memory_space<vmem>>, vector<1x8x32xf32>
    %232 = vector.shape_cast %231 : vector<1x8x32xf32> to vector<8x32xf32>
    %233 = vector.shape_cast %228 : vector<8x32xf32> to vector<1x8x32xf32>
    tpu.vector_store %arg9[%230, %c0_66, %c0_67], %233 {strides = array<i32>} : memref<16x8x32xf32, #tpu.memory_space<vmem>>, vector<1x8x32xf32>,
    %c6_i32 = arith.constant 6 : i32
    %234 = arith.index_cast %c6_i32 : i32 to index
    %c0_68 = arith.constant 0 : index
    %c0_69 = arith.constant 0 : index
    %235 = vector.load %arg8[%234, %c0_68, %c0_69] : memref<8x8x96xf32, #tpu.memory_space<vmem>>, vector<1x8x96xf32>
    %236 = vector.shape_cast %235 : vector<1x8x96xf32> to vector<8x96xf32>
    %cst_70 = arith.constant dense<0.000000e+00> : vector<8x96xf32>
    %237 = tpu.matmul %228, %2, %cst_70 {dimension_numbers = #tpu.dot_dimension_numbers<[1], [0], [0], [1], [0, 0, 1, 1], [], []>} : vector<8x32xf32>, vector<32x96xf32>, vector<8x96xf32> -> vector<8x96xf32>
    %238 = vector.extract_strided_slice %236 {offsets = [0, 0], sizes = [8, 32], strides = [1, 1]} : vector<8x96xf32> to vector<8x32xf32>
    %239 = vector.extract_strided_slice %237 {offsets = [0, 0], sizes = [8, 32], strides = [1, 1]} : vector<8x96xf32> to vector<8x32xf32>
    %240 = arith.addf %238, %239 : vector<8x32xf32>
    %241 = arith.negf %240 : vector<8x32xf32>
    %242 = math.exp %241 : vector<8x32xf32>
    %cst_71 = arith.constant 1.000000e+00 : f32
    %243 = vector.broadcast %cst_71 : f32 to vector<8x32xf32>
    %244 = arith.addf %243, %242 : vector<8x32xf32>
    %245 = arith.divf %243, %244 : vector<8x32xf32>
    %246 = vector.extract_strided_slice %236 {offsets = [0, 32], sizes = [8, 32], strides = [1, 1]} : vector<8x96xf32> to vector<8x32xf32>
    %247 = vector.extract_strided_slice %237 {offsets = [0, 32], sizes = [8, 32], strides = [1, 1]} : vector<8x96xf32> to vector<8x32xf32>
    %248 = arith.addf %246, %247 : vector<8x32xf32>
    %249 = arith.negf %248 : vector<8x32xf32>
    %250 = math.exp %249 : vector<8x32xf32>
    %cst_72 = arith.constant 1.000000e+00 : f32
    %251 = vector.broadcast %cst_72 : f32 to vector<8x32xf32>
    %252 = arith.addf %251, %250 : vector<8x32xf32>
    %253 = arith.divf %251, %252 : vector<8x32xf32>
    %254 = vector.extract_strided_slice %236 {offsets = [0, 64], sizes = [8, 32], strides = [1, 1]} : vector<8x96xf32> to vector<8x32xf32>
    %255 = vector.extract_strided_slice %237 {offsets = [0, 64], sizes = [8, 32], strides = [1, 1]} : vector<8x96xf32> to vector<8x32xf32>
    %256 = vector.broadcast %4 : vector<1x32xf32> to vector<8x32xf32>
    %257 = arith.addf %255, %256 : vector<8x32xf32>
    %258 = arith.mulf %245, %257 : vector<8x32xf32>
    %259 = arith.addf %254, %258 : vector<8x32xf32>
    %260 = math.tanh %259 : vector<8x32xf32>
    %cst_73 = arith.constant 1.000000e+00 : f32
    %261 = vector.broadcast %cst_73 : f32 to vector<8x32xf32>
    %262 = arith.subf %261, %253 : vector<8x32xf32>
    %263 = arith.mulf %262, %260 : vector<8x32xf32>
    %264 = arith.mulf %253, %228 : vector<8x32xf32>
    %265 = arith.addf %263, %264 : vector<8x32xf32>
    %c0_i32_74 = arith.constant 0 : i32
    %266 = arith.addi %c0_i32_74, %c6_i32 : i32
    %267 = arith.index_cast %266 : i32 to index
    %c0_75 = arith.constant 0 : index
    %c0_76 = arith.constant 0 : index
    %268 = vector.load %arg9[%267, %c0_75, %c0_76] : memref<16x8x32xf32, #tpu.memory_space<vmem>>, vector<1x8x32xf32>
    %269 = vector.shape_cast %268 : vector<1x8x32xf32> to vector<8x32xf32>
    %270 = vector.shape_cast %265 : vector<8x32xf32> to vector<1x8x32xf32>
    tpu.vector_store %arg9[%267, %c0_75, %c0_76], %270 {strides = array<i32>} : memref<16x8x32xf32, #tpu.memory_space<vmem>>, vector<1x8x32xf32>,
    %c7_i32 = arith.constant 7 : i32
    %271 = arith.index_cast %c7_i32 : i32 to index
    %c0_77 = arith.constant 0 : index
    %c0_78 = arith.constant 0 : index
    %272 = vector.load %arg8[%271, %c0_77, %c0_78] : memref<8x8x96xf32, #tpu.memory_space<vmem>>, vector<1x8x96xf32>
    %273 = vector.shape_cast %272 : vector<1x8x96xf32> to vector<8x96xf32>
    %cst_79 = arith.constant dense<0.000000e+00> : vector<8x96xf32>
    %274 = tpu.matmul %265, %2, %cst_79 {dimension_numbers = #tpu.dot_dimension_numbers<[1], [0], [0], [1], [0, 0, 1, 1], [], []>} : vector<8x32xf32>, vector<32x96xf32>, vector<8x96xf32> -> vector<8x96xf32>
    %275 = vector.extract_strided_slice %273 {offsets = [0, 0], sizes = [8, 32], strides = [1, 1]} : vector<8x96xf32> to vector<8x32xf32>
    %276 = vector.extract_strided_slice %274 {offsets = [0, 0], sizes = [8, 32], strides = [1, 1]} : vector<8x96xf32> to vector<8x32xf32>
    %277 = arith.addf %275, %276 : vector<8x32xf32>
    %278 = arith.negf %277 : vector<8x32xf32>
    %279 = math.exp %278 : vector<8x32xf32>
    %cst_80 = arith.constant 1.000000e+00 : f32
    %280 = vector.broadcast %cst_80 : f32 to vector<8x32xf32>
    %281 = arith.addf %280, %279 : vector<8x32xf32>
    %282 = arith.divf %280, %281 : vector<8x32xf32>
    %283 = vector.extract_strided_slice %273 {offsets = [0, 32], sizes = [8, 32], strides = [1, 1]} : vector<8x96xf32> to vector<8x32xf32>
    %284 = vector.extract_strided_slice %274 {offsets = [0, 32], sizes = [8, 32], strides = [1, 1]} : vector<8x96xf32> to vector<8x32xf32>
    %285 = arith.addf %283, %284 : vector<8x32xf32>
    %286 = arith.negf %285 : vector<8x32xf32>
    %287 = math.exp %286 : vector<8x32xf32>
    %cst_81 = arith.constant 1.000000e+00 : f32
    %288 = vector.broadcast %cst_81 : f32 to vector<8x32xf32>
    %289 = arith.addf %288, %287 : vector<8x32xf32>
    %290 = arith.divf %288, %289 : vector<8x32xf32>
    %291 = vector.extract_strided_slice %273 {offsets = [0, 64], sizes = [8, 32], strides = [1, 1]} : vector<8x96xf32> to vector<8x32xf32>
    %292 = vector.extract_strided_slice %274 {offsets = [0, 64], sizes = [8, 32], strides = [1, 1]} : vector<8x96xf32> to vector<8x32xf32>
    %293 = vector.broadcast %4 : vector<1x32xf32> to vector<8x32xf32>
    %294 = arith.addf %292, %293 : vector<8x32xf32>
    %295 = arith.mulf %282, %294 : vector<8x32xf32>
    %296 = arith.addf %291, %295 : vector<8x32xf32>
    %297 = math.tanh %296 : vector<8x32xf32>
    %cst_82 = arith.constant 1.000000e+00 : f32
    %298 = vector.broadcast %cst_82 : f32 to vector<8x32xf32>
    %299 = arith.subf %298, %290 : vector<8x32xf32>
    %300 = arith.mulf %299, %297 : vector<8x32xf32>
    %301 = arith.mulf %290, %265 : vector<8x32xf32>
    %302 = arith.addf %300, %301 : vector<8x32xf32>
    %c0_i32_83 = arith.constant 0 : i32
    %303 = arith.addi %c0_i32_83, %c7_i32 : i32
    %304 = arith.index_cast %303 : i32 to index
    %c0_84 = arith.constant 0 : index
    %c0_85 = arith.constant 0 : index
    %305 = vector.load %arg9[%304, %c0_84, %c0_85] : memref<16x8x32xf32, #tpu.memory_space<vmem>>, vector<1x8x32xf32>
    %306 = vector.shape_cast %305 : vector<1x8x32xf32> to vector<8x32xf32>
    %307 = vector.shape_cast %302 : vector<8x32xf32> to vector<1x8x32xf32>
    tpu.vector_store %arg9[%304, %c0_84, %c0_85], %307 {strides = array<i32>} : memref<16x8x32xf32, #tpu.memory_space<vmem>>, vector<1x8x32xf32>,
    %c8_i32 = arith.constant 8 : i32
    %c0_i32_86 = arith.constant 0 : i32
    %308 = arith.index_cast %c0_i32_86 : i32 to index
    %c0_87 = arith.constant 0 : index
    %c0_88 = arith.constant 0 : index
    %309 = vector.load %arg8[%308, %c0_87, %c0_88] : memref<8x8x96xf32, #tpu.memory_space<vmem>>, vector<1x8x96xf32>
    %310 = vector.shape_cast %309 : vector<1x8x96xf32> to vector<8x96xf32>
    %cst_89 = arith.constant dense<0.000000e+00> : vector<8x96xf32>
    %311 = tpu.matmul %302, %2, %cst_89 {dimension_numbers = #tpu.dot_dimension_numbers<[1], [0], [0], [1], [0, 0, 1, 1], [], []>} : vector<8x32xf32>, vector<32x96xf32>, vector<8x96xf32> -> vector<8x96xf32>
    %312 = vector.extract_strided_slice %310 {offsets = [0, 0], sizes = [8, 32], strides = [1, 1]} : vector<8x96xf32> to vector<8x32xf32>
    %313 = vector.extract_strided_slice %311 {offsets = [0, 0], sizes = [8, 32], strides = [1, 1]} : vector<8x96xf32> to vector<8x32xf32>
    %314 = arith.addf %312, %313 : vector<8x32xf32>
    %315 = arith.negf %314 : vector<8x32xf32>
    %316 = math.exp %315 : vector<8x32xf32>
    %cst_90 = arith.constant 1.000000e+00 : f32
    %317 = vector.broadcast %cst_90 : f32 to vector<8x32xf32>
    %318 = arith.addf %317, %316 : vector<8x32xf32>
    %319 = arith.divf %317, %318 : vector<8x32xf32>
    %320 = vector.extract_strided_slice %310 {offsets = [0, 32], sizes = [8, 32], strides = [1, 1]} : vector<8x96xf32> to vector<8x32xf32>
    %321 = vector.extract_strided_slice %311 {offsets = [0, 32], sizes = [8, 32], strides = [1, 1]} : vector<8x96xf32> to vector<8x32xf32>
    %322 = arith.addf %320, %321 : vector<8x32xf32>
    %323 = arith.negf %322 : vector<8x32xf32>
    %324 = math.exp %323 : vector<8x32xf32>
    %cst_91 = arith.constant 1.000000e+00 : f32
    %325 = vector.broadcast %cst_91 : f32 to vector<8x32xf32>
    %326 = arith.addf %325, %324 : vector<8x32xf32>
    %327 = arith.divf %325, %326 : vector<8x32xf32>
    %328 = vector.extract_strided_slice %310 {offsets = [0, 64], sizes = [8, 32], strides = [1, 1]} : vector<8x96xf32> to vector<8x32xf32>
    %329 = vector.extract_strided_slice %311 {offsets = [0, 64], sizes = [8, 32], strides = [1, 1]} : vector<8x96xf32> to vector<8x32xf32>
    %330 = vector.broadcast %4 : vector<1x32xf32> to vector<8x32xf32>
    %331 = arith.addf %329, %330 : vector<8x32xf32>
    %332 = arith.mulf %319, %331 : vector<8x32xf32>
    %333 = arith.addf %328, %332 : vector<8x32xf32>
    %334 = math.tanh %333 : vector<8x32xf32>
    %cst_92 = arith.constant 1.000000e+00 : f32
    %335 = vector.broadcast %cst_92 : f32 to vector<8x32xf32>
    %336 = arith.subf %335, %327 : vector<8x32xf32>
    %337 = arith.mulf %336, %334 : vector<8x32xf32>
    %338 = arith.mulf %327, %302 : vector<8x32xf32>
    %339 = arith.addf %337, %338 : vector<8x32xf32>
    %c8_i32_93 = arith.constant 8 : i32
    %340 = arith.addi %c8_i32_93, %c0_i32_86 : i32
    %341 = arith.index_cast %340 : i32 to index
    %c0_94 = arith.constant 0 : index
    %c0_95 = arith.constant 0 : index
    %342 = vector.load %arg9[%341, %c0_94, %c0_95] : memref<16x8x32xf32, #tpu.memory_space<vmem>>, vector<1x8x32xf32>
    %343 = vector.shape_cast %342 : vector<1x8x32xf32> to vector<8x32xf32>
    %344 = vector.shape_cast %339 : vector<8x32xf32> to vector<1x8x32xf32>
    tpu.vector_store %arg9[%341, %c0_94, %c0_95], %344 {strides = array<i32>} : memref<16x8x32xf32, #tpu.memory_space<vmem>>, vector<1x8x32xf32>,
    %c1_i32_96 = arith.constant 1 : i32
    %345 = arith.index_cast %c1_i32_96 : i32 to index
    %c0_97 = arith.constant 0 : index
    %c0_98 = arith.constant 0 : index
    %346 = vector.load %arg8[%345, %c0_97, %c0_98] : memref<8x8x96xf32, #tpu.memory_space<vmem>>, vector<1x8x96xf32>
    %347 = vector.shape_cast %346 : vector<1x8x96xf32> to vector<8x96xf32>
    %cst_99 = arith.constant dense<0.000000e+00> : vector<8x96xf32>
    %348 = tpu.matmul %339, %2, %cst_99 {dimension_numbers = #tpu.dot_dimension_numbers<[1], [0], [0], [1], [0, 0, 1, 1], [], []>} : vector<8x32xf32>, vector<32x96xf32>, vector<8x96xf32> -> vector<8x96xf32>
    %349 = vector.extract_strided_slice %347 {offsets = [0, 0], sizes = [8, 32], strides = [1, 1]} : vector<8x96xf32> to vector<8x32xf32>
    %350 = vector.extract_strided_slice %348 {offsets = [0, 0], sizes = [8, 32], strides = [1, 1]} : vector<8x96xf32> to vector<8x32xf32>
    %351 = arith.addf %349, %350 : vector<8x32xf32>
    %352 = arith.negf %351 : vector<8x32xf32>
    %353 = math.exp %352 : vector<8x32xf32>
    %cst_100 = arith.constant 1.000000e+00 : f32
    %354 = vector.broadcast %cst_100 : f32 to vector<8x32xf32>
    %355 = arith.addf %354, %353 : vector<8x32xf32>
    %356 = arith.divf %354, %355 : vector<8x32xf32>
    %357 = vector.extract_strided_slice %347 {offsets = [0, 32], sizes = [8, 32], strides = [1, 1]} : vector<8x96xf32> to vector<8x32xf32>
    %358 = vector.extract_strided_slice %348 {offsets = [0, 32], sizes = [8, 32], strides = [1, 1]} : vector<8x96xf32> to vector<8x32xf32>
    %359 = arith.addf %357, %358 : vector<8x32xf32>
    %360 = arith.negf %359 : vector<8x32xf32>
    %361 = math.exp %360 : vector<8x32xf32>
    %cst_101 = arith.constant 1.000000e+00 : f32
    %362 = vector.broadcast %cst_101 : f32 to vector<8x32xf32>
    %363 = arith.addf %362, %361 : vector<8x32xf32>
    %364 = arith.divf %362, %363 : vector<8x32xf32>
    %365 = vector.extract_strided_slice %347 {offsets = [0, 64], sizes = [8, 32], strides = [1, 1]} : vector<8x96xf32> to vector<8x32xf32>
    %366 = vector.extract_strided_slice %348 {offsets = [0, 64], sizes = [8, 32], strides = [1, 1]} : vector<8x96xf32> to vector<8x32xf32>
    %367 = vector.broadcast %4 : vector<1x32xf32> to vector<8x32xf32>
    %368 = arith.addf %366, %367 : vector<8x32xf32>
    %369 = arith.mulf %356, %368 : vector<8x32xf32>
    %370 = arith.addf %365, %369 : vector<8x32xf32>
    %371 = math.tanh %370 : vector<8x32xf32>
    %cst_102 = arith.constant 1.000000e+00 : f32
    %372 = vector.broadcast %cst_102 : f32 to vector<8x32xf32>
    %373 = arith.subf %372, %364 : vector<8x32xf32>
    %374 = arith.mulf %373, %371 : vector<8x32xf32>
    %375 = arith.mulf %364, %339 : vector<8x32xf32>
    %376 = arith.addf %374, %375 : vector<8x32xf32>
    %c8_i32_103 = arith.constant 8 : i32
    %377 = arith.addi %c8_i32_103, %c1_i32_96 : i32
    %378 = arith.index_cast %377 : i32 to index
    %c0_104 = arith.constant 0 : index
    %c0_105 = arith.constant 0 : index
    %379 = vector.load %arg9[%378, %c0_104, %c0_105] : memref<16x8x32xf32, #tpu.memory_space<vmem>>, vector<1x8x32xf32>
    %380 = vector.shape_cast %379 : vector<1x8x32xf32> to vector<8x32xf32>
    %381 = vector.shape_cast %376 : vector<8x32xf32> to vector<1x8x32xf32>
    tpu.vector_store %arg9[%378, %c0_104, %c0_105], %381 {strides = array<i32>} : memref<16x8x32xf32, #tpu.memory_space<vmem>>, vector<1x8x32xf32>,
    %c2_i32_106 = arith.constant 2 : i32
    %382 = arith.index_cast %c2_i32_106 : i32 to index
    %c0_107 = arith.constant 0 : index
    %c0_108 = arith.constant 0 : index
    %383 = vector.load %arg8[%382, %c0_107, %c0_108] : memref<8x8x96xf32, #tpu.memory_space<vmem>>, vector<1x8x96xf32>
    %384 = vector.shape_cast %383 : vector<1x8x96xf32> to vector<8x96xf32>
    %cst_109 = arith.constant dense<0.000000e+00> : vector<8x96xf32>
    %385 = tpu.matmul %376, %2, %cst_109 {dimension_numbers = #tpu.dot_dimension_numbers<[1], [0], [0], [1], [0, 0, 1, 1], [], []>} : vector<8x32xf32>, vector<32x96xf32>, vector<8x96xf32> -> vector<8x96xf32>
    %386 = vector.extract_strided_slice %384 {offsets = [0, 0], sizes = [8, 32], strides = [1, 1]} : vector<8x96xf32> to vector<8x32xf32>
    %387 = vector.extract_strided_slice %385 {offsets = [0, 0], sizes = [8, 32], strides = [1, 1]} : vector<8x96xf32> to vector<8x32xf32>
    %388 = arith.addf %386, %387 : vector<8x32xf32>
    %389 = arith.negf %388 : vector<8x32xf32>
    %390 = math.exp %389 : vector<8x32xf32>
    %cst_110 = arith.constant 1.000000e+00 : f32
    %391 = vector.broadcast %cst_110 : f32 to vector<8x32xf32>
    %392 = arith.addf %391, %390 : vector<8x32xf32>
    %393 = arith.divf %391, %392 : vector<8x32xf32>
    %394 = vector.extract_strided_slice %384 {offsets = [0, 32], sizes = [8, 32], strides = [1, 1]} : vector<8x96xf32> to vector<8x32xf32>
    %395 = vector.extract_strided_slice %385 {offsets = [0, 32], sizes = [8, 32], strides = [1, 1]} : vector<8x96xf32> to vector<8x32xf32>
    %396 = arith.addf %394, %395 : vector<8x32xf32>
    %397 = arith.negf %396 : vector<8x32xf32>
    %398 = math.exp %397 : vector<8x32xf32>
    %cst_111 = arith.constant 1.000000e+00 : f32
    %399 = vector.broadcast %cst_111 : f32 to vector<8x32xf32>
    %400 = arith.addf %399, %398 : vector<8x32xf32>
    %401 = arith.divf %399, %400 : vector<8x32xf32>
    %402 = vector.extract_strided_slice %384 {offsets = [0, 64], sizes = [8, 32], strides = [1, 1]} : vector<8x96xf32> to vector<8x32xf32>
    %403 = vector.extract_strided_slice %385 {offsets = [0, 64], sizes = [8, 32], strides = [1, 1]} : vector<8x96xf32> to vector<8x32xf32>
    %404 = vector.broadcast %4 : vector<1x32xf32> to vector<8x32xf32>
    %405 = arith.addf %403, %404 : vector<8x32xf32>
    %406 = arith.mulf %393, %405 : vector<8x32xf32>
    %407 = arith.addf %402, %406 : vector<8x32xf32>
    %408 = math.tanh %407 : vector<8x32xf32>
    %cst_112 = arith.constant 1.000000e+00 : f32
    %409 = vector.broadcast %cst_112 : f32 to vector<8x32xf32>
    %410 = arith.subf %409, %401 : vector<8x32xf32>
    %411 = arith.mulf %410, %408 : vector<8x32xf32>
    %412 = arith.mulf %401, %376 : vector<8x32xf32>
    %413 = arith.addf %411, %412 : vector<8x32xf32>
    %c8_i32_113 = arith.constant 8 : i32
    %414 = arith.addi %c8_i32_113, %c2_i32_106 : i32
    %415 = arith.index_cast %414 : i32 to index
    %c0_114 = arith.constant 0 : index
    %c0_115 = arith.constant 0 : index
    %416 = vector.load %arg9[%415, %c0_114, %c0_115] : memref<16x8x32xf32, #tpu.memory_space<vmem>>, vector<1x8x32xf32>
    %417 = vector.shape_cast %416 : vector<1x8x32xf32> to vector<8x32xf32>
    %418 = vector.shape_cast %413 : vector<8x32xf32> to vector<1x8x32xf32>
    tpu.vector_store %arg9[%415, %c0_114, %c0_115], %418 {strides = array<i32>} : memref<16x8x32xf32, #tpu.memory_space<vmem>>, vector<1x8x32xf32>,
    %c3_i32_116 = arith.constant 3 : i32
    %419 = arith.index_cast %c3_i32_116 : i32 to index
    %c0_117 = arith.constant 0 : index
    %c0_118 = arith.constant 0 : index
    %420 = vector.load %arg8[%419, %c0_117, %c0_118] : memref<8x8x96xf32, #tpu.memory_space<vmem>>, vector<1x8x96xf32>
    %421 = vector.shape_cast %420 : vector<1x8x96xf32> to vector<8x96xf32>
    %cst_119 = arith.constant dense<0.000000e+00> : vector<8x96xf32>
    %422 = tpu.matmul %413, %2, %cst_119 {dimension_numbers = #tpu.dot_dimension_numbers<[1], [0], [0], [1], [0, 0, 1, 1], [], []>} : vector<8x32xf32>, vector<32x96xf32>, vector<8x96xf32> -> vector<8x96xf32>
    %423 = vector.extract_strided_slice %421 {offsets = [0, 0], sizes = [8, 32], strides = [1, 1]} : vector<8x96xf32> to vector<8x32xf32>
    %424 = vector.extract_strided_slice %422 {offsets = [0, 0], sizes = [8, 32], strides = [1, 1]} : vector<8x96xf32> to vector<8x32xf32>
    %425 = arith.addf %423, %424 : vector<8x32xf32>
    %426 = arith.negf %425 : vector<8x32xf32>
    %427 = math.exp %426 : vector<8x32xf32>
    %cst_120 = arith.constant 1.000000e+00 : f32
    %428 = vector.broadcast %cst_120 : f32 to vector<8x32xf32>
    %429 = arith.addf %428, %427 : vector<8x32xf32>
    %430 = arith.divf %428, %429 : vector<8x32xf32>
    %431 = vector.extract_strided_slice %421 {offsets = [0, 32], sizes = [8, 32], strides = [1, 1]} : vector<8x96xf32> to vector<8x32xf32>
    %432 = vector.extract_strided_slice %422 {offsets = [0, 32], sizes = [8, 32], strides = [1, 1]} : vector<8x96xf32> to vector<8x32xf32>
    %433 = arith.addf %431, %432 : vector<8x32xf32>
    %434 = arith.negf %433 : vector<8x32xf32>
    %435 = math.exp %434 : vector<8x32xf32>
    %cst_121 = arith.constant 1.000000e+00 : f32
    %436 = vector.broadcast %cst_121 : f32 to vector<8x32xf32>
    %437 = arith.addf %436, %435 : vector<8x32xf32>
    %438 = arith.divf %436, %437 : vector<8x32xf32>
    %439 = vector.extract_strided_slice %421 {offsets = [0, 64], sizes = [8, 32], strides = [1, 1]} : vector<8x96xf32> to vector<8x32xf32>
    %440 = vector.extract_strided_slice %422 {offsets = [0, 64], sizes = [8, 32], strides = [1, 1]} : vector<8x96xf32> to vector<8x32xf32>
    %441 = vector.broadcast %4 : vector<1x32xf32> to vector<8x32xf32>
    %442 = arith.addf %440, %441 : vector<8x32xf32>
    %443 = arith.mulf %430, %442 : vector<8x32xf32>
    %444 = arith.addf %439, %443 : vector<8x32xf32>
    %445 = math.tanh %444 : vector<8x32xf32>
    %cst_122 = arith.constant 1.000000e+00 : f32
    %446 = vector.broadcast %cst_122 : f32 to vector<8x32xf32>
    %447 = arith.subf %446, %438 : vector<8x32xf32>
    %448 = arith.mulf %447, %445 : vector<8x32xf32>
    %449 = arith.mulf %438, %413 : vector<8x32xf32>
    %450 = arith.addf %448, %449 : vector<8x32xf32>
    %c8_i32_123 = arith.constant 8 : i32
    %451 = arith.addi %c8_i32_123, %c3_i32_116 : i32
    %452 = arith.index_cast %451 : i32 to index
    %c0_124 = arith.constant 0 : index
    %c0_125 = arith.constant 0 : index
    %453 = vector.load %arg9[%452, %c0_124, %c0_125] : memref<16x8x32xf32, #tpu.memory_space<vmem>>, vector<1x8x32xf32>
    %454 = vector.shape_cast %453 : vector<1x8x32xf32> to vector<8x32xf32>
    %455 = vector.shape_cast %450 : vector<8x32xf32> to vector<1x8x32xf32>
    tpu.vector_store %arg9[%452, %c0_124, %c0_125], %455 {strides = array<i32>} : memref<16x8x32xf32, #tpu.memory_space<vmem>>, vector<1x8x32xf32>,
    %c4_i32_126 = arith.constant 4 : i32
    %456 = arith.index_cast %c4_i32_126 : i32 to index
    %c0_127 = arith.constant 0 : index
    %c0_128 = arith.constant 0 : index
    %457 = vector.load %arg8[%456, %c0_127, %c0_128] : memref<8x8x96xf32, #tpu.memory_space<vmem>>, vector<1x8x96xf32>
    %458 = vector.shape_cast %457 : vector<1x8x96xf32> to vector<8x96xf32>
    %cst_129 = arith.constant dense<0.000000e+00> : vector<8x96xf32>
    %459 = tpu.matmul %450, %2, %cst_129 {dimension_numbers = #tpu.dot_dimension_numbers<[1], [0], [0], [1], [0, 0, 1, 1], [], []>} : vector<8x32xf32>, vector<32x96xf32>, vector<8x96xf32> -> vector<8x96xf32>
    %460 = vector.extract_strided_slice %458 {offsets = [0, 0], sizes = [8, 32], strides = [1, 1]} : vector<8x96xf32> to vector<8x32xf32>
    %461 = vector.extract_strided_slice %459 {offsets = [0, 0], sizes = [8, 32], strides = [1, 1]} : vector<8x96xf32> to vector<8x32xf32>
    %462 = arith.addf %460, %461 : vector<8x32xf32>
    %463 = arith.negf %462 : vector<8x32xf32>
    %464 = math.exp %463 : vector<8x32xf32>
    %cst_130 = arith.constant 1.000000e+00 : f32
    %465 = vector.broadcast %cst_130 : f32 to vector<8x32xf32>
    %466 = arith.addf %465, %464 : vector<8x32xf32>
    %467 = arith.divf %465, %466 : vector<8x32xf32>
    %468 = vector.extract_strided_slice %458 {offsets = [0, 32], sizes = [8, 32], strides = [1, 1]} : vector<8x96xf32> to vector<8x32xf32>
    %469 = vector.extract_strided_slice %459 {offsets = [0, 32], sizes = [8, 32], strides = [1, 1]} : vector<8x96xf32> to vector<8x32xf32>
    %470 = arith.addf %468, %469 : vector<8x32xf32>
    %471 = arith.negf %470 : vector<8x32xf32>
    %472 = math.exp %471 : vector<8x32xf32>
    %cst_131 = arith.constant 1.000000e+00 : f32
    %473 = vector.broadcast %cst_131 : f32 to vector<8x32xf32>
    %474 = arith.addf %473, %472 : vector<8x32xf32>
    %475 = arith.divf %473, %474 : vector<8x32xf32>
    %476 = vector.extract_strided_slice %458 {offsets = [0, 64], sizes = [8, 32], strides = [1, 1]} : vector<8x96xf32> to vector<8x32xf32>
    %477 = vector.extract_strided_slice %459 {offsets = [0, 64], sizes = [8, 32], strides = [1, 1]} : vector<8x96xf32> to vector<8x32xf32>
    %478 = vector.broadcast %4 : vector<1x32xf32> to vector<8x32xf32>
    %479 = arith.addf %477, %478 : vector<8x32xf32>
    %480 = arith.mulf %467, %479 : vector<8x32xf32>
    %481 = arith.addf %476, %480 : vector<8x32xf32>
    %482 = math.tanh %481 : vector<8x32xf32>
    %cst_132 = arith.constant 1.000000e+00 : f32
    %483 = vector.broadcast %cst_132 : f32 to vector<8x32xf32>
    %484 = arith.subf %483, %475 : vector<8x32xf32>
    %485 = arith.mulf %484, %482 : vector<8x32xf32>
    %486 = arith.mulf %475, %450 : vector<8x32xf32>
    %487 = arith.addf %485, %486 : vector<8x32xf32>
    %c8_i32_133 = arith.constant 8 : i32
    %488 = arith.addi %c8_i32_133, %c4_i32_126 : i32
    %489 = arith.index_cast %488 : i32 to index
    %c0_134 = arith.constant 0 : index
    %c0_135 = arith.constant 0 : index
    %490 = vector.load %arg9[%489, %c0_134, %c0_135] : memref<16x8x32xf32, #tpu.memory_space<vmem>>, vector<1x8x32xf32>
    %491 = vector.shape_cast %490 : vector<1x8x32xf32> to vector<8x32xf32>
    %492 = vector.shape_cast %487 : vector<8x32xf32> to vector<1x8x32xf32>
    tpu.vector_store %arg9[%489, %c0_134, %c0_135], %492 {strides = array<i32>} : memref<16x8x32xf32, #tpu.memory_space<vmem>>, vector<1x8x32xf32>,
    %c5_i32_136 = arith.constant 5 : i32
    %493 = arith.index_cast %c5_i32_136 : i32 to index
    %c0_137 = arith.constant 0 : index
    %c0_138 = arith.constant 0 : index
    %494 = vector.load %arg8[%493, %c0_137, %c0_138] : memref<8x8x96xf32, #tpu.memory_space<vmem>>, vector<1x8x96xf32>
    %495 = vector.shape_cast %494 : vector<1x8x96xf32> to vector<8x96xf32>
    %cst_139 = arith.constant dense<0.000000e+00> : vector<8x96xf32>
    %496 = tpu.matmul %487, %2, %cst_139 {dimension_numbers = #tpu.dot_dimension_numbers<[1], [0], [0], [1], [0, 0, 1, 1], [], []>} : vector<8x32xf32>, vector<32x96xf32>, vector<8x96xf32> -> vector<8x96xf32>
    %497 = vector.extract_strided_slice %495 {offsets = [0, 0], sizes = [8, 32], strides = [1, 1]} : vector<8x96xf32> to vector<8x32xf32>
    %498 = vector.extract_strided_slice %496 {offsets = [0, 0], sizes = [8, 32], strides = [1, 1]} : vector<8x96xf32> to vector<8x32xf32>
    %499 = arith.addf %497, %498 : vector<8x32xf32>
    %500 = arith.negf %499 : vector<8x32xf32>
    %501 = math.exp %500 : vector<8x32xf32>
    %cst_140 = arith.constant 1.000000e+00 : f32
    %502 = vector.broadcast %cst_140 : f32 to vector<8x32xf32>
    %503 = arith.addf %502, %501 : vector<8x32xf32>
    %504 = arith.divf %502, %503 : vector<8x32xf32>
    %505 = vector.extract_strided_slice %495 {offsets = [0, 32], sizes = [8, 32], strides = [1, 1]} : vector<8x96xf32> to vector<8x32xf32>
    %506 = vector.extract_strided_slice %496 {offsets = [0, 32], sizes = [8, 32], strides = [1, 1]} : vector<8x96xf32> to vector<8x32xf32>
    %507 = arith.addf %505, %506 : vector<8x32xf32>
    %508 = arith.negf %507 : vector<8x32xf32>
    %509 = math.exp %508 : vector<8x32xf32>
    %cst_141 = arith.constant 1.000000e+00 : f32
    %510 = vector.broadcast %cst_141 : f32 to vector<8x32xf32>
    %511 = arith.addf %510, %509 : vector<8x32xf32>
    %512 = arith.divf %510, %511 : vector<8x32xf32>
    %513 = vector.extract_strided_slice %495 {offsets = [0, 64], sizes = [8, 32], strides = [1, 1]} : vector<8x96xf32> to vector<8x32xf32>
    %514 = vector.extract_strided_slice %496 {offsets = [0, 64], sizes = [8, 32], strides = [1, 1]} : vector<8x96xf32> to vector<8x32xf32>
    %515 = vector.broadcast %4 : vector<1x32xf32> to vector<8x32xf32>
    %516 = arith.addf %514, %515 : vector<8x32xf32>
    %517 = arith.mulf %504, %516 : vector<8x32xf32>
    %518 = arith.addf %513, %517 : vector<8x32xf32>
    %519 = math.tanh %518 : vector<8x32xf32>
    %cst_142 = arith.constant 1.000000e+00 : f32
    %520 = vector.broadcast %cst_142 : f32 to vector<8x32xf32>
    %521 = arith.subf %520, %512 : vector<8x32xf32>
    %522 = arith.mulf %521, %519 : vector<8x32xf32>
    %523 = arith.mulf %512, %487 : vector<8x32xf32>
    %524 = arith.addf %522, %523 : vector<8x32xf32>
    %c8_i32_143 = arith.constant 8 : i32
    %525 = arith.addi %c8_i32_143, %c5_i32_136 : i32
    %526 = arith.index_cast %525 : i32 to index
    %c0_144 = arith.constant 0 : index
    %c0_145 = arith.constant 0 : index
    %527 = vector.load %arg9[%526, %c0_144, %c0_145] : memref<16x8x32xf32, #tpu.memory_space<vmem>>, vector<1x8x32xf32>
    %528 = vector.shape_cast %527 : vector<1x8x32xf32> to vector<8x32xf32>
    %529 = vector.shape_cast %524 : vector<8x32xf32> to vector<1x8x32xf32>
    tpu.vector_store %arg9[%526, %c0_144, %c0_145], %529 {strides = array<i32>} : memref<16x8x32xf32, #tpu.memory_space<vmem>>, vector<1x8x32xf32>,
    %c6_i32_146 = arith.constant 6 : i32
    %530 = arith.index_cast %c6_i32_146 : i32 to index
    %c0_147 = arith.constant 0 : index
    %c0_148 = arith.constant 0 : index
    %531 = vector.load %arg8[%530, %c0_147, %c0_148] : memref<8x8x96xf32, #tpu.memory_space<vmem>>, vector<1x8x96xf32>
    %532 = vector.shape_cast %531 : vector<1x8x96xf32> to vector<8x96xf32>
    %cst_149 = arith.constant dense<0.000000e+00> : vector<8x96xf32>
    %533 = tpu.matmul %524, %2, %cst_149 {dimension_numbers = #tpu.dot_dimension_numbers<[1], [0], [0], [1], [0, 0, 1, 1], [], []>} : vector<8x32xf32>, vector<32x96xf32>, vector<8x96xf32> -> vector<8x96xf32>
    %534 = vector.extract_strided_slice %532 {offsets = [0, 0], sizes = [8, 32], strides = [1, 1]} : vector<8x96xf32> to vector<8x32xf32>
    %535 = vector.extract_strided_slice %533 {offsets = [0, 0], sizes = [8, 32], strides = [1, 1]} : vector<8x96xf32> to vector<8x32xf32>
    %536 = arith.addf %534, %535 : vector<8x32xf32>
    %537 = arith.negf %536 : vector<8x32xf32>
    %538 = math.exp %537 : vector<8x32xf32>
    %cst_150 = arith.constant 1.000000e+00 : f32
    %539 = vector.broadcast %cst_150 : f32 to vector<8x32xf32>
    %540 = arith.addf %539, %538 : vector<8x32xf32>
    %541 = arith.divf %539, %540 : vector<8x32xf32>
    %542 = vector.extract_strided_slice %532 {offsets = [0, 32], sizes = [8, 32], strides = [1, 1]} : vector<8x96xf32> to vector<8x32xf32>
    %543 = vector.extract_strided_slice %533 {offsets = [0, 32], sizes = [8, 32], strides = [1, 1]} : vector<8x96xf32> to vector<8x32xf32>
    %544 = arith.addf %542, %543 : vector<8x32xf32>
    %545 = arith.negf %544 : vector<8x32xf32>
    %546 = math.exp %545 : vector<8x32xf32>
    %cst_151 = arith.constant 1.000000e+00 : f32
    %547 = vector.broadcast %cst_151 : f32 to vector<8x32xf32>
    %548 = arith.addf %547, %546 : vector<8x32xf32>
    %549 = arith.divf %547, %548 : vector<8x32xf32>
    %550 = vector.extract_strided_slice %532 {offsets = [0, 64], sizes = [8, 32], strides = [1, 1]} : vector<8x96xf32> to vector<8x32xf32>
    %551 = vector.extract_strided_slice %533 {offsets = [0, 64], sizes = [8, 32], strides = [1, 1]} : vector<8x96xf32> to vector<8x32xf32>
    %552 = vector.broadcast %4 : vector<1x32xf32> to vector<8x32xf32>
    %553 = arith.addf %551, %552 : vector<8x32xf32>
    %554 = arith.mulf %541, %553 : vector<8x32xf32>
    %555 = arith.addf %550, %554 : vector<8x32xf32>
    %556 = math.tanh %555 : vector<8x32xf32>
    %cst_152 = arith.constant 1.000000e+00 : f32
    %557 = vector.broadcast %cst_152 : f32 to vector<8x32xf32>
    %558 = arith.subf %557, %549 : vector<8x32xf32>
    %559 = arith.mulf %558, %556 : vector<8x32xf32>
    %560 = arith.mulf %549, %524 : vector<8x32xf32>
    %561 = arith.addf %559, %560 : vector<8x32xf32>
    %c8_i32_153 = arith.constant 8 : i32
    %562 = arith.addi %c8_i32_153, %c6_i32_146 : i32
    %563 = arith.index_cast %562 : i32 to index
    %c0_154 = arith.constant 0 : index
    %c0_155 = arith.constant 0 : index
    %564 = vector.load %arg9[%563, %c0_154, %c0_155] : memref<16x8x32xf32, #tpu.memory_space<vmem>>, vector<1x8x32xf32>
    %565 = vector.shape_cast %564 : vector<1x8x32xf32> to vector<8x32xf32>
    %566 = vector.shape_cast %561 : vector<8x32xf32> to vector<1x8x32xf32>
    tpu.vector_store %arg9[%563, %c0_154, %c0_155], %566 {strides = array<i32>} : memref<16x8x32xf32, #tpu.memory_space<vmem>>, vector<1x8x32xf32>,
    %c7_i32_156 = arith.constant 7 : i32
    %567 = arith.index_cast %c7_i32_156 : i32 to index
    %c0_157 = arith.constant 0 : index
    %c0_158 = arith.constant 0 : index
    %568 = vector.load %arg8[%567, %c0_157, %c0_158] : memref<8x8x96xf32, #tpu.memory_space<vmem>>, vector<1x8x96xf32>
    %569 = vector.shape_cast %568 : vector<1x8x96xf32> to vector<8x96xf32>
    %cst_159 = arith.constant dense<0.000000e+00> : vector<8x96xf32>
    %570 = tpu.matmul %561, %2, %cst_159 {dimension_numbers = #tpu.dot_dimension_numbers<[1], [0], [0], [1], [0, 0, 1, 1], [], []>} : vector<8x32xf32>, vector<32x96xf32>, vector<8x96xf32> -> vector<8x96xf32>
    %571 = vector.extract_strided_slice %569 {offsets = [0, 0], sizes = [8, 32], strides = [1, 1]} : vector<8x96xf32> to vector<8x32xf32>
    %572 = vector.extract_strided_slice %570 {offsets = [0, 0], sizes = [8, 32], strides = [1, 1]} : vector<8x96xf32> to vector<8x32xf32>
    %573 = arith.addf %571, %572 : vector<8x32xf32>
    %574 = arith.negf %573 : vector<8x32xf32>
    %575 = math.exp %574 : vector<8x32xf32>
    %cst_160 = arith.constant 1.000000e+00 : f32
    %576 = vector.broadcast %cst_160 : f32 to vector<8x32xf32>
    %577 = arith.addf %576, %575 : vector<8x32xf32>
    %578 = arith.divf %576, %577 : vector<8x32xf32>
    %579 = vector.extract_strided_slice %569 {offsets = [0, 32], sizes = [8, 32], strides = [1, 1]} : vector<8x96xf32> to vector<8x32xf32>
    %580 = vector.extract_strided_slice %570 {offsets = [0, 32], sizes = [8, 32], strides = [1, 1]} : vector<8x96xf32> to vector<8x32xf32>
    %581 = arith.addf %579, %580 : vector<8x32xf32>
    %582 = arith.negf %581 : vector<8x32xf32>
    %583 = math.exp %582 : vector<8x32xf32>
    %cst_161 = arith.constant 1.000000e+00 : f32
    %584 = vector.broadcast %cst_161 : f32 to vector<8x32xf32>
    %585 = arith.addf %584, %583 : vector<8x32xf32>
    %586 = arith.divf %584, %585 : vector<8x32xf32>
    %587 = vector.extract_strided_slice %569 {offsets = [0, 64], sizes = [8, 32], strides = [1, 1]} : vector<8x96xf32> to vector<8x32xf32>
    %588 = vector.extract_strided_slice %570 {offsets = [0, 64], sizes = [8, 32], strides = [1, 1]} : vector<8x96xf32> to vector<8x32xf32>
    %589 = vector.broadcast %4 : vector<1x32xf32> to vector<8x32xf32>
    %590 = arith.addf %588, %589 : vector<8x32xf32>
    %591 = arith.mulf %578, %590 : vector<8x32xf32>
    %592 = arith.addf %587, %591 : vector<8x32xf32>
    %593 = math.tanh %592 : vector<8x32xf32>
    %cst_162 = arith.constant 1.000000e+00 : f32
    %594 = vector.broadcast %cst_162 : f32 to vector<8x32xf32>
    %595 = arith.subf %594, %586 : vector<8x32xf32>
    %596 = arith.mulf %595, %593 : vector<8x32xf32>
    %597 = arith.mulf %586, %561 : vector<8x32xf32>
    %598 = arith.addf %596, %597 : vector<8x32xf32>
    %c8_i32_163 = arith.constant 8 : i32
    %599 = arith.addi %c8_i32_163, %c7_i32_156 : i32
    %600 = arith.index_cast %599 : i32 to index
    %c0_164 = arith.constant 0 : index
    %c0_165 = arith.constant 0 : index
    %601 = vector.load %arg9[%600, %c0_164, %c0_165] : memref<16x8x32xf32, #tpu.memory_space<vmem>>, vector<1x8x32xf32>
    %602 = vector.shape_cast %601 : vector<1x8x32xf32> to vector<8x32xf32>
    %603 = vector.shape_cast %598 : vector<8x32xf32> to vector<1x8x32xf32>
    tpu.vector_store %arg9[%600, %c0_164, %c0_165], %603 {strides = array<i32>} : memref<16x8x32xf32, #tpu.memory_space<vmem>>, vector<1x8x32xf32>,
    %c8_i32_166 = arith.constant 8 : i32
    %c0_167 = arith.constant 0 : index
    %c0_168 = arith.constant 0 : index
    %c0_169 = arith.constant 0 : index
    %604 = vector.load %arg9[%c0_167, %c0_168, %c0_169] : memref<16x8x32xf32, #tpu.memory_space<vmem>>, vector<16x8x32xf32>
    %cst_170 = arith.constant dense<0xFF800000> : vector<8x32xf32>
    %605 = vector.multi_reduction <maximumf>, %604, %cst_170 [0] : vector<16x8x32xf32> to vector<8x32xf32>
    %606 = vector.shape_cast %605 : vector<8x32xf32> to vector<1x8x32xf32>
    %607 = vector.broadcast %606 : vector<1x8x32xf32> to vector<16x8x32xf32>
    %608 = arith.subf %604, %607 : vector<16x8x32xf32>
    %609 = math.exp %608 : vector<16x8x32xf32>
    %cst_171 = arith.constant dense<0.000000e+00> : vector<8x32xf32>
    %610 = vector.multi_reduction <add>, %609, %cst_171 [0] : vector<16x8x32xf32> to vector<8x32xf32>
    %611 = tpu.reciprocal %610 {approx = true} : vector<8x32xf32> -> vector<8x32xf32>
    %612 = vector.shape_cast %611 : vector<8x32xf32> to vector<1x8x32xf32>
    %613 = vector.broadcast %612 : vector<1x8x32xf32> to vector<16x8x32xf32>
    %614 = arith.mulf %609, %613 : vector<16x8x32xf32>
    %615 = tpu.concatenate %0, %0 in 0 : vector<8x8x32xf32>, vector<8x8x32xf32> -> vector<16x8x32xf32>
    %616 = arith.mulf %615, %614 : vector<16x8x32xf32>
    %cst_172 = arith.constant 0.000000e+00 : f32
    %617 = vector.broadcast %cst_172 : f32 to vector<16x8x32xf32>
    %618 = arith.maximumf %616, %617 : vector<16x8x32xf32>
    %619 = vector.shape_cast %618 : vector<16x8x32xf32> to vector<128x32xf32>
    %c0_173 = arith.constant 0 : index
    %c0_174 = arith.constant 0 : index
    %620 = vector.load %arg5[%c0_173, %c0_174] : memref<32x2xf32, #tpu.memory_space<vmem>>, vector<32x2xf32>
    %cst_175 = arith.constant dense<0.000000e+00> : vector<128x2xf32>
    %621 = tpu.matmul %619, %620, %cst_175 {dimension_numbers = #tpu.dot_dimension_numbers<[1], [0], [0], [1], [0, 0, 1, 1], [], []>} : vector<128x32xf32>, vector<32x2xf32>, vector<128x2xf32> -> vector<128x2xf32>
    %c0_176 = arith.constant 0 : index
    %c0_177 = arith.constant 0 : index
    %622 = vector.load %arg6[%c0_176, %c0_177] : memref<1x2xf32, #tpu.memory_space<vmem>>, vector<1x2xf32>
    %623 = vector.broadcast %622 : vector<1x2xf32> to vector<128x2xf32>
    %624 = arith.addf %621, %623 : vector<128x2xf32>
    %625 = vector.shape_cast %624 : vector<128x2xf32> to vector<16x8x2xf32>
    %c0_178 = arith.constant 0 : index
    %c0_179 = arith.constant 0 : index
    %c0_180 = arith.constant 0 : index
    %626 = vector.load %arg7[%c0_178, %c0_179, %c0_180] : memref<16x8x2xf32, #tpu.memory_space<vmem>>, vector<16x8x2xf32>
    tpu.vector_store %arg7[%c0_178, %c0_179, %c0_180], %625 {strides = array<i32>} : memref<16x8x2xf32, #tpu.memory_space<vmem>>, vector<16x8x2xf32>,
    return
  }
}

</mosaic_0001>

<llo_original>
// kernel: tpu_custom_call.1
$region0: #{tpu_custom_call.1}
  #allocation0 [shape = 'u32[]', space=smem, size = 0x4, offset = 0x4, fixed_abs, tag = 'smem constant byte address 0x4 - core index']
  #allocation1 [shape = 'u32[144,128]{1,0:T(1,128)}', space=vmem, size = 0x12000, scoped, tag = 'internal scratch']
  #allocation2 [shape = 'f32[8,8,96]{2,1,0:T(8,128)}', space=vmem, size = 0x8000, scoped, tag = 'scratch operand']
  #allocation3 [shape = 'f32[16,8,32]{2,1,0:T(8,128)}', space=vmem, size = 0x10000, scoped, tag = 'scratch operand']
  %s0 = inlined_call_operand.hbm [shape: f32[8,8,32], index: 0, kind: input, shape index: {}]
  %s1 = inlined_call_operand.vmem [shape: f32[32,96], index: 1, kind: input, shape index: {}]
  %s2 = inlined_call_operand.hbm [shape: f32[32,96], index: 2, kind: input, shape index: {}]
  %s3 = inlined_call_operand.vmem [shape: f32[1,96], index: 3, kind: input, shape index: {}]
  %s4 = inlined_call_operand.vmem [shape: f32[1,32], index: 4, kind: input, shape index: {}]
  %s5 = inlined_call_operand.vmem [shape: f32[32,2], index: 5, kind: input, shape index: {}]
  %s6 = inlined_call_operand.vmem [shape: f32[1,2], index: 6, kind: input, shape index: {}]
  %s7 = inlined_call_operand.vmem [shape: f32[16,8,2], index: 7, kind: output, shape index: {}]
  %s8 = sld [smem:[#allocation0]]
  $region46: #{tpu_custom_call.1} parent=0
    _
  %s10 = ssub.s32 1, %s8
  %s11 = scalar_select 0, %s10, %s8
  $region1: #{tpu_custom_call.1} parent=0
    #allocation4 [shape = 'u8[32768]{0}', space=vmem, size = 0x8000, scoped, tag = 'input window, operand 0, single buffered']
    #allocation5 [shape = 's32[1]{0}', space=sflag, size = 0x4, scoped, tag = 'scoped memory for tpu_custom_call.1']
    #allocation6 [shape = 'u8[16384]{0}', space=vmem, size = 0x4000, scoped, tag = 'input window, operand 2, single buffered']
    #allocation7 [shape = 's32[1]{0}', space=sflag, size = 0x4, scoped, tag = 'scoped memory for tpu_custom_call.1']
    %12 = vsyncpa [#allocation5], 0
    %13 = vsyncpa [#allocation7], 0
    // Predicated region
    $region2: #{tpu_custom_call.1} parent=1 // pred_check
      _
    $region3: #{tpu_custom_call.1} parent=1 // pred_check_branch
      %15 = sbr.rel (0) target = $region5
    $region4: #{tpu_custom_call.1} parent=1 // pred_region
      %s17 = ssub.s32 1024, 1024
      %18 = vsyncadd [#allocation5], %s17
      %s19 = sshll.u32 [#allocation4], 4
      %s20 = int_to_ptr.vmem [resolvable:$true] %s19
      %25 = dma.hbm_to_vmem [thread:$0]  %s0, 1024, %s20, [#allocation5], 128, 128, 8
    $region5: #{tpu_custom_call.1} parent=1 // pred_fallthru
      _
    // Predicated region
    $region6: #{tpu_custom_call.1} parent=1 // pred_check
      _
    $region7: #{tpu_custom_call.1} parent=1 // pred_check_branch
      %27 = sbr.rel (0) target = $region9
    $region8: #{tpu_custom_call.1} parent=1 // pred_region
      _
    $region9: #{tpu_custom_call.1} parent=1 // pred_fallthru
      _
    // Predicated region
    $region10: #{tpu_custom_call.1} parent=1 // pred_check
      _
    $region11: #{tpu_custom_call.1} parent=1 // pred_check_branch
      %29 = sbr.rel (0) target = $region13
    $region12: #{tpu_custom_call.1} parent=1 // pred_region
      %s31 = ssub.s32 512, 512
      %32 = vsyncadd [#allocation7], %s31
      %s33 = sshll.u32 [#allocation6], 4
      %s34 = int_to_ptr.vmem [resolvable:$true] %s33
      %39 = dma.hbm_to_vmem [thread:$0]  %s2, 512, %s34, [#allocation7], 128, 128, 8
    $region13: #{tpu_custom_call.1} parent=1 // pred_fallthru
      _
    // Predicated region
    $region14: #{tpu_custom_call.1} parent=1 // pred_check
      _
    $region15: #{tpu_custom_call.1} parent=1 // pred_check_branch
      %41 = sbr.rel (0) target = $region17
    $region16: #{tpu_custom_call.1} parent=1 // pred_region
      _
    $region17: #{tpu_custom_call.1} parent=1 // pred_fallthru
      _
    // Predicated region
    $region18: #{tpu_custom_call.1} parent=1 // pred_check
      _
    $region19: #{tpu_custom_call.1} parent=1 // pred_check_branch
      %43 = sbr.rel (0) target = $region21
    $region20: #{tpu_custom_call.1} parent=1 // pred_region
      _
    $region21: #{tpu_custom_call.1} parent=1 // pred_fallthru
      _
    // Predicated region
    $region22: #{tpu_custom_call.1} parent=1 // pred_check
      _
    $region23: #{tpu_custom_call.1} parent=1 // pred_check_branch
      %45 = sbr.rel (0) target = $region25
    $region24: #{tpu_custom_call.1} parent=1 // pred_region
      _
    $region25: #{tpu_custom_call.1} parent=1 // pred_fallthru
      _
    // Predicated region
    $region26: #{tpu_custom_call.1} parent=1 // pred_check
      _
    $region27: #{tpu_custom_call.1} parent=1 // pred_check_branch
      %47 = sbr.rel (0) target = $region29
    $region28: #{tpu_custom_call.1} parent=1 // pred_region
      _
    $region29: #{tpu_custom_call.1} parent=1 // pred_fallthru
      _
    // Predicated region
    $region30: #{tpu_custom_call.1} parent=1 // pred_check
      _
    $region31: #{tpu_custom_call.1} parent=1 // pred_check_branch
      %49 = sbr.rel (0) target = $region33
    $region32: #{tpu_custom_call.1} parent=1 // pred_region
      %50 = dma.done [#allocation5], 1024
    $region33: #{tpu_custom_call.1} parent=1 // pred_fallthru
      _
    // Predicated region
    $region34: #{tpu_custom_call.1} parent=1 // pred_check
      _
    $region35: #{tpu_custom_call.1} parent=1 // pred_check_branch
      %52 = sbr.rel (0) target = $region37
    $region36: #{tpu_custom_call.1} parent=1 // pred_region
      %53 = dma.done [#allocation7], 512
    $region37: #{tpu_custom_call.1} parent=1 // pred_fallthru
      _
    %v54 = vld [vmem:[#allocation4] sm:$0xff]
    %v55 = vld [vmem:[#allocation4 + $0x8] sm:$0xff]
    %v56 = vld [vmem:[#allocation4 + $0x10] sm:$0xff]
    %v57 = vld [vmem:[#allocation4 + $0x18] sm:$0xff]
    %v58 = vld [vmem:[#allocation4 + $0x20] sm:$0xff]
    %v59 = vld [vmem:[#allocation4 + $0x28] sm:$0xff]
    %v60 = vld [vmem:[#allocation4 + $0x30] sm:$0xff]
    %v61 = vld [vmem:[#allocation4 + $0x38] sm:$0xff]
    %v62 = vld [vmem:[%s1] sm:$0xff]
    %v63 = vld [vmem:[%s1 + $0x8] sm:$0xff]
    %v64 = vld [vmem:[%s1 + $0x10] sm:$0xff]
    %v65 = vld [vmem:[%s1 + $0x18] sm:$0xff]
    %v66 = vld [vmem:[#allocation6] sm:$0xff]
    %v67 = vld [vmem:[#allocation6 + $0x8] sm:$0xff]
    %v68 = vld [vmem:[#allocation6 + $0x10] sm:$0xff]
    %v69 = vld [vmem:[#allocation6 + $0x18] sm:$0xff]
    %v70 = vld [vmem:[%s3] sm:$0x1]
    %v71 = vld [vmem:[%s4] sm:$0x1]
    %v73 = vlaneseq
    %v74 = vshrl.u32 %v73, 7
    %v75 = vsub.s32 0, %v74
    %v76 = vrot.slane %v70, %v75
    %vm78 = vcmask 261120
    %v80 = vsel %vm78, %v54, 0
    %v83 = vsel %vm78, %v55, 0
    %v86 = vsel %vm78, %v56, 0
    %v89 = vsel %vm78, %v57, 0
    %v92 = vsel %vm78, %v58, 0
    %v95 = vsel %vm78, %v59, 0
    %v98 = vsel %vm78, %v60, 0
    %v101 = vsel %vm78, %v61, 0
    %103 = vmatprep.subr.mxu0 0.0
    %104 = vmatpush1.msra.mxu0 0.0
    %105 = vmatprep.subr.mxu0 0.0
    %106 = vmatpush1.msra.mxu0 0.0
    %107 = vmatprep.subr.mxu0 0.0
    %108 = vmatpush1.msra.mxu0 0.0
    %109 = vmatprep.subr.mxu0 0.0
    %110 = vmatpush1.msra.mxu0 0.0
    %111 = vmatprep.subr.mxu0 0.0
    %112 = vmatpush1.msra.mxu0 0.0
    %113 = vmatprep.subr.mxu0 0.0
    %114 = vmatpush1.msra.mxu0 0.0
    %115 = vmatprep.subr.mxu0 0.0
    %116 = vmatpush1.msra.mxu0 0.0
    %117 = vmatprep.subr.mxu0 0.0
    %118 = vmatpush1.msra.mxu0 0.0
    %119 = vmatprep.subr.mxu0 0.0
    %120 = vmatpush1.msra.mxu0 0.0
    %121 = vmatprep.subr.mxu0 0.0
    %122 = vmatpush1.msra.mxu0 0.0
    %123 = vmatprep.subr.mxu0 0.0
    %124 = vmatpush1.msra.mxu0 0.0
    %125 = vmatprep.subr.mxu0 0.0
    %126 = vmatpush1.msra.mxu0 0.0
    %127 = vmatprep.subr.mxu0 0.0
    %128 = vmatpush1.msra.mxu0 %v65
    %129 = vmatprep.subr.mxu0 0.0
    %130 = vmatpush1.msra.mxu0 %v64
    %131 = vmatprep.subr.mxu0 0.0
    %132 = vmatpush1.msra.mxu0 %v63
    %133 = vmatprep.subr.mxu0 0.0
    %134 = vmatpush1.msra.mxu0 %v62
    %135 = vmatprep.subr.mxu0 0.0
    %136 = vmatpush2.msra.mxu0 0.0
    %137 = vmatprep.subr.mxu0 0.0
    %138 = vmatpush2.msra.mxu0 0.0
    %139 = vmatprep.subr.mxu0 0.0
    %140 = vmatpush2.msra.mxu0 0.0
    %141 = vmatprep.subr.mxu0 0.0
    %142 = vmatpush2.msra.mxu0 0.0
    %143 = vmatprep.subr.mxu0 0.0
    %144 = vmatpush2.msra.mxu0 0.0
    %145 = vmatprep.subr.mxu0 0.0
    %146 = vmatpush2.msra.mxu0 0.0
    %147 = vmatprep.subr.mxu0 0.0
    %148 = vmatpush2.msra.mxu0 0.0
    %149 = vmatprep.subr.mxu0 0.0
    %150 = vmatpush2.msra.mxu0 0.0
    %151 = vmatprep.subr.mxu0 0.0
    %152 = vmatpush2.msra.mxu0 0.0
    %153 = vmatprep.subr.mxu0 0.0
    %154 = vmatpush2.msra.mxu0 0.0
    %155 = vmatprep.subr.mxu0 0.0
    %156 = vmatpush2.msra.mxu0 0.0
    %157 = vmatprep.subr.mxu0 0.0
    %158 = vmatpush2.msra.mxu0 0.0
    %159 = vmatprep.subr.mxu0 0.0
    %160 = vmatpush2.msra.mxu0 0.0
    %161 = vmatprep.subr.mxu0 0.0
    %162 = vmatpush2.msra.mxu0 0.0
    %163 = vmatprep.subr.mxu0 0.0
    %164 = vmatpush2.msra.mxu0 0.0
    %165 = vmatprep.subr.mxu0 0.0
    %166 = vmatpush2.msra.mxu0 0.0
    %167 = vmatprep.mubr.f32.mxu0 0.0
    %168 = vmatmul.mubr.f32.gmra.mxu0 %v80
    %v169 = vpop.f32.mrf.mxu0
    %v170 = vadd.f32 %v76, %v169
    %v171 = vpop.f32.mrf.mxu0
    %172 = vmatprep.mubr.f32.mxu0 0.0
    %173 = vmatmul.mubr.f32.gmra.mxu0 %v83
    %v174 = vpop.f32.mrf.mxu0
    %v175 = vadd.f32 %v76, %v174
    %v176 = vpop.f32.mrf.mxu0
    %177 = vmatprep.mubr.f32.mxu0 0.0
    %178 = vmatmul.mubr.f32.gmra.mxu0 %v86
    %v179 = vpop.f32.mrf.mxu0
    %v180 = vadd.f32 %v76, %v179
    %v181 = vpop.f32.mrf.mxu0
    %182 = vmatprep.mubr.f32.mxu0 0.0
    %183 = vmatmul.mubr.f32.gmra.mxu0 %v89
    %v184 = vpop.f32.mrf.mxu0
    %v185 = vadd.f32 %v76, %v184
    %v186 = vpop.f32.mrf.mxu0
    %187 = vmatprep.mubr.f32.mxu0 0.0
    %188 = vmatmul.mubr.f32.gmra.mxu0 %v92
    %v189 = vpop.f32.mrf.mxu0
    %v190 = vadd.f32 %v76, %v189
    %v191 = vpop.f32.mrf.mxu0
    %192 = vmatprep.mubr.f32.mxu0 0.0
    %193 = vmatmul.mubr.f32.gmra.mxu0 %v95
    %v194 = vpop.f32.mrf.mxu0
    %v195 = vadd.f32 %v76, %v194
    %v196 = vpop.f32.mrf.mxu0
    %197 = vmatprep.mubr.f32.mxu0 0.0
    %198 = vmatmul.mubr.f32.gmra.mxu0 %v98
    %v199 = vpop.f32.mrf.mxu0
    %v200 = vadd.f32 %v76, %v199
    %v201 = vpop.f32.mrf.mxu0
    %202 = vmatprep.mubr.f32.mxu0 0.0
    %203 = vmatmul.mubr.f32.gmra.mxu0 %v101
    %v204 = vpop.f32.mrf.mxu0
    %v205 = vadd.f32 %v76, %v204
    %v206 = vpop.f32.mrf.mxu0
    %207 = vdwg.mxu0
    %vm208 = vcmask 785408
    %209 = vst.msk [vmem:[#allocation2] sm:$0xff] %vm208, %v170
    %210 = vst.msk [vmem:[#allocation2 + $0x8] sm:$0xff] %vm208, %v175
    %211 = vst.msk [vmem:[#allocation2 + $0x10] sm:$0xff] %vm208, %v180
    %212 = vst.msk [vmem:[#allocation2 + $0x18] sm:$0xff] %vm208, %v185
    %213 = vst.msk [vmem:[#allocation2 + $0x20] sm:$0xff] %vm208, %v190
    %214 = vst.msk [vmem:[#allocation2 + $0x28] sm:$0xff] %vm208, %v195
    %215 = vst.msk [vmem:[#allocation2 + $0x30] sm:$0xff] %vm208, %v200
    %216 = vst.msk [vmem:[#allocation2 + $0x38] sm:$0xff] %vm208, %v205
    %v217 = vld [vmem:[#allocation2] sm:$0xff]
    %v219 = vsel %vm78, 0.0, 0
    %221 = vmatprep.subr.mxu0 0.0
    %222 = vmatpush1.msra.mxu0 0.0
    %223 = vmatprep.subr.mxu0 0.0
    %224 = vmatpush1.msra.mxu0 0.0
    %225 = vmatprep.subr.mxu0 0.0
    %226 = vmatpush1.msra.mxu0 0.0
    %227 = vmatprep.subr.mxu0 0.0
    %228 = vmatpush1.msra.mxu0 0.0
    %229 = vmatprep.subr.mxu0 0.0
    %230 = vmatpush1.msra.mxu0 0.0
    %231 = vmatprep.subr.mxu0 0.0
    %232 = vmatpush1.msra.mxu0 0.0
    %233 = vmatprep.subr.mxu0 0.0
    %234 = vmatpush1.msra.mxu0 0.0
    %235 = vmatprep.subr.mxu0 0.0
    %236 = vmatpush1.msra.mxu0 0.0
    %237 = vmatprep.subr.mxu0 0.0
    %238 = vmatpush1.msra.mxu0 0.0
    %239 = vmatprep.subr.mxu0 0.0
    %240 = vmatpush1.msra.mxu0 0.0
    %241 = vmatprep.subr.mxu0 0.0
    %242 = vmatpush1.msra.mxu0 0.0
    %243 = vmatprep.subr.mxu0 0.0
    %244 = vmatpush1.msra.mxu0 0.0
    %245 = vmatprep.subr.mxu0 0.0
    %246 = vmatpush1.msra.mxu0 %v69
    %247 = vmatprep.subr.mxu0 0.0
    %248 = vmatpush1.msra.mxu0 %v68
    %249 = vmatprep.subr.mxu0 0.0
    %250 = vmatpush1.msra.mxu0 %v67
    %251 = vmatprep.subr.mxu0 0.0
    %252 = vmatpush1.msra.mxu0 %v66
    %253 = vmatprep.subr.mxu0 0.0
    %254 = vmatpush2.msra.mxu0 0.0
    %255 = vmatprep.subr.mxu0 0.0
    %256 = vmatpush2.msra.mxu0 0.0
    %257 = vmatprep.subr.mxu0 0.0
    %258 = vmatpush2.msra.mxu0 0.0
    %259 = vmatprep.subr.mxu0 0.0
    %260 = vmatpush2.msra.mxu0 0.0
    %261 = vmatprep.subr.mxu0 0.0
    %262 = vmatpush2.msra.mxu0 0.0
    %263 = vmatprep.subr.mxu0 0.0
    %264 = vmatpush2.msra.mxu0 0.0
    %265 = vmatprep.subr.mxu0 0.0
    %266 = vmatpush2.msra.mxu0 0.0
    %267 = vmatprep.subr.mxu0 0.0
    %268 = vmatpush2.msra.mxu0 0.0
    %269 = vmatprep.subr.mxu0 0.0
    %270 = vmatpush2.msra.mxu0 0.0
    %271 = vmatprep.subr.mxu0 0.0
    %272 = vmatpush2.msra.mxu0 0.0
    %273 = vmatprep.subr.mxu0 0.0
    %274 = vmatpush2.msra.mxu0 0.0
    %275 = vmatprep.subr.mxu0 0.0
    %276 = vmatpush2.msra.mxu0 0.0
    %277 = vmatprep.subr.mxu0 0.0
    %278 = vmatpush2.msra.mxu0 0.0
    %279 = vmatprep.subr.mxu0 0.0
    %280 = vmatpush2.msra.mxu0 0.0
    %281 = vmatprep.subr.mxu0 0.0
    %282 = vmatpush2.msra.mxu0 0.0
    %283 = vmatprep.subr.mxu0 0.0
    %284 = vmatpush2.msra.mxu0 0.0
    %285 = vmatprep.mubr.f32.mxu0 0.0
    %286 = vmatmul.mubr.f32.gmra.mxu0 %v219
    %v287 = vpop.f32.mrf.mxu0
    %v288 = vadd.f32 0.0, %v287
    %v289 = vpop.f32.mrf.mxu0
    %290 = vdwg.mxu0
    %v291 = vadd.f32 %v217, %v288
    %v292 = vxor.u32 %v291, 2147483648
    %v293 = vmul.f32 %v292, 1.442695
    %v294 = vpow.pop %v293
    %v295 = vadd.f32 %v294, 1.0
    %v296 = vrcp.pop %v295
    %v297 = vmul.f32 1.0, %v296
    %v299 = vlaneseq
    %v300 = vshrl.u32 %v299, 7
    %v301 = vsub.s32 0, %v300
    %v302 = vrot.slane %v71, %v301
    %303 = vrot.lane.b32.xlu0 %v302, 64
    %v304 = vpop.permute.xlu0 %303
    %v306 = vadd.f32 %v288, %v304
    %308 = vrot.lane.b32.xlu0 %v306, 64
    %v309 = vpop.permute.xlu0 %308
    %v311 = vmul.f32 %v297, %v309
    %313 = vrot.lane.b32.xlu0 %v311, 64
    %v314 = vpop.permute.xlu0 %313
    %v316 = vadd.f32 %v217, %v314
    %v317 = vtanh.pop %v316
    %v318 = vsub.f32 1.0, %v297
    %320 = vrot.lane.b32.xlu0 %v317, 96
    %v321 = vpop.permute.xlu0 %320
    %v323 = vmul.f32 %v318, %v321
    %v324 = vmul.f32 %v297, 0.0
    %v325 = vadd.f32 %v323, %v324
    %327 = vrot.lane.b32.xlu0 %v325, 96
    %v328 = vpop.permute.xlu0 %327
    %330 = vst.msk [vmem:[#allocation3] sm:$0xff] %vm78, %v328
    %s331 = scalar_lea.vmem [#allocation2], 8
    %v332 = vld [vmem:[%s331] sm:$0xff]
    %v333 = vsel %vm78, %v328, 0
    %335 = vmatprep.subr.mxu0 0.0
    %336 = vmatpush1.msra.mxu0 0.0
    %337 = vmatprep.subr.mxu0 0.0
    %338 = vmatpush1.msra.mxu0 0.0
    %339 = vmatprep.subr.mxu0 0.0
    %340 = vmatpush1.msra.mxu0 0.0
    %341 = vmatprep.subr.mxu0 0.0
    %342 = vmatpush1.msra.mxu0 0.0
    %343 = vmatprep.subr.mxu0 0.0
    %344 = vmatpush1.msra.mxu0 0.0
    %345 = vmatprep.subr.mxu0 0.0
    %346 = vmatpush1.msra.mxu0 0.0
    %347 = vmatprep.subr.mxu0 0.0
    %348 = vmatpush1.msra.mxu0 0.0
    %349 = vmatprep.subr.mxu0 0.0
    %350 = vmatpush1.msra.mxu0 0.0
    %351 = vmatprep.subr.mxu0 0.0
    %352 = vmatpush1.msra.mxu0 0.0
    %353 = vmatprep.subr.mxu0 0.0
    %354 = vmatpush1.msra.mxu0 0.0
    %355 = vmatprep.subr.mxu0 0.0
    %356 = vmatpush1.msra.mxu0 0.0
    %357 = vmatprep.subr.mxu0 0.0
    %358 = vmatpush1.msra.mxu0 0.0
    %359 = vmatprep.subr.mxu0 0.0
    %360 = vmatpush1.msra.mxu0 %v69
    %361 = vmatprep.subr.mxu0 0.0
    %362 = vmatpush1.msra.mxu0 %v68
    %363 = vmatprep.subr.mxu0 0.0
    %364 = vmatpush1.msra.mxu0 %v67
    %365 = vmatprep.subr.mxu0 0.0
    %366 = vmatpush1.msra.mxu0 %v66
    %367 = vmatprep.subr.mxu0 0.0
    %368 = vmatpush2.msra.mxu0 0.0
    %369 = vmatprep.subr.mxu0 0.0
    %370 = vmatpush2.msra.mxu0 0.0
    %371 = vmatprep.subr.mxu0 0.0
    %372 = vmatpush2.msra.mxu0 0.0
    %373 = vmatprep.subr.mxu0 0.0
    %374 = vmatpush2.msra.mxu0 0.0
    %375 = vmatprep.subr.mxu0 0.0
    %376 = vmatpush2.msra.mxu0 0.0
    %377 = vmatprep.subr.mxu0 0.0
    %378 = vmatpush2.msra.mxu0 0.0
    %379 = vmatprep.subr.mxu0 0.0
    %380 = vmatpush2.msra.mxu0 0.0
    %381 = vmatprep.subr.mxu0 0.0
    %382 = vmatpush2.msra.mxu0 0.0
    %383 = vmatprep.subr.mxu0 0.0
    %384 = vmatpush2.msra.mxu0 0.0
    %385 = vmatprep.subr.mxu0 0.0
    %386 = vmatpush2.msra.mxu0 0.0
    %387 = vmatprep.subr.mxu0 0.0
    %388 = vmatpush2.msra.mxu0 0.0
    %389 = vmatprep.subr.mxu0 0.0
    %390 = vmatpush2.msra.mxu0 0.0
    %391 = vmatprep.subr.mxu0 0.0
    %392 = vmatpush2.msra.mxu0 0.0
    %393 = vmatprep.subr.mxu0 0.0
    %394 = vmatpush2.msra.mxu0 0.0
    %395 = vmatprep.subr.mxu0 0.0
    %396 = vmatpush2.msra.mxu0 0.0
    %397 = vmatprep.subr.mxu0 0.0
    %398 = vmatpush2.msra.mxu0 0.0
    %399 = vmatprep.mubr.f32.mxu0 0.0
    %400 = vmatmul.mubr.f32.gmra.mxu0 %v333
    %v401 = vpop.f32.mrf.mxu0
    %v402 = vadd.f32 0.0, %v401
    %v403 = vpop.f32.mrf.mxu0
    %404 = vdwg.mxu0
    %v405 = vadd.f32 %v332, %v402
    %v406 = vxor.u32 %v405, 2147483648
    %v407 = vmul.f32 %v406, 1.442695
    %v408 = vpow.pop %v407
    %v409 = vadd.f32 %v408, 1.0
    %v410 = vrcp.pop %v409
    %v411 = vmul.f32 1.0, %v410
    %v412 = vadd.f32 %v402, %v304
    %414 = vrot.lane.b32.xlu0 %v412, 64
    %v415 = vpop.permute.xlu0 %414
    %v417 = vmul.f32 %v411, %v415
    %419 = vrot.lane.b32.xlu0 %v417, 64
    %v420 = vpop.permute.xlu0 %419
    %v422 = vadd.f32 %v332, %v420
    %v423 = vtanh.pop %v422
    %v424 = vsub.f32 1.0, %v411
    %426 = vrot.lane.b32.xlu0 %v423, 96
    %v427 = vpop.permute.xlu0 %426
    %v429 = vmul.f32 %v424, %v427
    %v430 = vmul.f32 %v411, %v325
    %v431 = vadd.f32 %v429, %v430
    %433 = vrot.lane.b32.xlu0 %v431, 96
    %v434 = vpop.permute.xlu0 %433
    %s436 = scalar_lea.vmem [#allocation3], 8
    %437 = vst.msk [vmem:[%s436] sm:$0xff] %vm78, %v434
    %s438 = scalar_lea.vmem [#allocation2], 16
    %v439 = vld [vmem:[%s438] sm:$0xff]
    %v440 = vsel %vm78, %v434, 0
    %442 = vmatprep.subr.mxu0 0.0
    %443 = vmatpush1.msra.mxu0 0.0
    %444 = vmatprep.subr.mxu0 0.0
    %445 = vmatpush1.msra.mxu0 0.0
    %446 = vmatprep.subr.mxu0 0.0
    %447 = vmatpush1.msra.mxu0 0.0
    %448 = vmatprep.subr.mxu0 0.0
    %449 = vmatpush1.msra.mxu0 0.0
    %450 = vmatprep.subr.mxu0 0.0
    %451 = vmatpush1.msra.mxu0 0.0
    %452 = vmatprep.subr.mxu0 0.0
    %453 = vmatpush1.msra.mxu0 0.0
    %454 = vmatprep.subr.mxu0 0.0
    %455 = vmatpush1.msra.mxu0 0.0
    %456 = vmatprep.subr.mxu0 0.0
    %457 = vmatpush1.msra.mxu0 0.0
    %458 = vmatprep.subr.mxu0 0.0
    %459 = vmatpush1.msra.mxu0 0.0
    %460 = vmatprep.subr.mxu0 0.0
    %461 = vmatpush1.msra.mxu0 0.0
    %462 = vmatprep.subr.mxu0 0.0
    %463 = vmatpush1.msra.mxu0 0.0
    %464 = vmatprep.subr.mxu0 0.0
    %465 = vmatpush1.msra.mxu0 0.0
    %466 = vmatprep.subr.mxu0 0.0
    %467 = vmatpush1.msra.mxu0 %v69
    %468 = vmatprep.subr.mxu0 0.0
    %469 = vmatpush1.msra.mxu0 %v68
    %470 = vmatprep.subr.mxu0 0.0
    %471 = vmatpush1.msra.mxu0 %v67
    %472 = vmatprep.subr.mxu0 0.0
    %473 = vmatpush1.msra.mxu0 %v66
    %474 = vmatprep.subr.mxu0 0.0
    %475 = vmatpush2.msra.mxu0 0.0
    %476 = vmatprep.subr.mxu0 0.0
    %477 = vmatpush2.msra.mxu0 0.0
    %478 = vmatprep.subr.mxu0 0.0
    %479 = vmatpush2.msra.mxu0 0.0
    %480 = vmatprep.subr.mxu0 0.0
    %481 = vmatpush2.msra.mxu0 0.0
    %482 = vmatprep.subr.mxu0 0.0
    %483 = vmatpush2.msra.mxu0 0.0
    %484 = vmatprep.subr.mxu0 0.0
    %485 = vmatpush2.msra.mxu0 0.0
    %486 = vmatprep.subr.mxu0 0.0
    %487 = vmatpush2.msra.mxu0 0.0
    %488 = vmatprep.subr.mxu0 0.0
    %489 = vmatpush2.msra.mxu0 0.0
    %490 = vmatprep.subr.mxu0 0.0
    %491 = vmatpush2.msra.mxu0 0.0
    %492 = vmatprep.subr.mxu0 0.0
    %493 = vmatpush2.msra.mxu0 0.0
    %494 = vmatprep.subr.mxu0 0.0
    %495 = vmatpush2.msra.mxu0 0.0
    %496 = vmatprep.subr.mxu0 0.0
    %497 = vmatpush2.msra.mxu0 0.0
    %498 = vmatprep.subr.mxu0 0.0
    %499 = vmatpush2.msra.mxu0 0.0
    %500 = vmatprep.subr.mxu0 0.0
    %501 = vmatpush2.msra.mxu0 0.0
    %502 = vmatprep.subr.mxu0 0.0
    %503 = vmatpush2.msra.mxu0 0.0
    %504 = vmatprep.subr.mxu0 0.0
    %505 = vmatpush2.msra.mxu0 0.0
    %506 = vmatprep.mubr.f32.mxu0 0.0
    %507 = vmatmul.mubr.f32.gmra.mxu0 %v440
    %v508 = vpop.f32.mrf.mxu0
    %v509 = vadd.f32 0.0, %v508
    %v510 = vpop.f32.mrf.mxu0
    %511 = vdwg.mxu0
    %v512 = vadd.f32 %v439, %v509
    %v513 = vxor.u32 %v512, 2147483648
    %v514 = vmul.f32 %v513, 1.442695
    %v515 = vpow.pop %v514
    %v516 = vadd.f32 %v515, 1.0
    %v517 = vrcp.pop %v516
    %v518 = vmul.f32 1.0, %v517
    %v519 = vadd.f32 %v509, %v304
    %521 = vrot.lane.b32.xlu0 %v519, 64
    %v522 = vpop.permute.xlu0 %521
    %v524 = vmul.f32 %v518, %v522
    %526 = vrot.lane.b32.xlu0 %v524, 64
    %v527 = vpop.permute.xlu0 %526
    %v529 = vadd.f32 %v439, %v527
    %v530 = vtanh.pop %v529
    %v531 = vsub.f32 1.0, %v518
    %533 = vrot.lane.b32.xlu0 %v530, 96
    %v534 = vpop.permute.xlu0 %533
    %v536 = vmul.f32 %v531, %v534
    %v537 = vmul.f32 %v518, %v431
    %v538 = vadd.f32 %v536, %v537
    %540 = vrot.lane.b32.xlu0 %v538, 96
    %v541 = vpop.permute.xlu0 %540
    %s543 = scalar_lea.vmem [#allocation3], 16
    %544 = vst.msk [vmem:[%s543] sm:$0xff] %vm78, %v541
    %s545 = scalar_lea.vmem [#allocation2], 24
    %v546 = vld [vmem:[%s545] sm:$0xff]
    %v547 = vsel %vm78, %v541, 0
    %549 = vmatprep.subr.mxu0 0.0
    %550 = vmatpush1.msra.mxu0 0.0
    %551 = vmatprep.subr.mxu0 0.0
    %552 = vmatpush1.msra.mxu0 0.0
    %553 = vmatprep.subr.mxu0 0.0
    %554 = vmatpush1.msra.mxu0 0.0
    %555 = vmatprep.subr.mxu0 0.0
    %556 = vmatpush1.msra.mxu0 0.0
    %557 = vmatprep.subr.mxu0 0.0
    %558 = vmatpush1.msra.mxu0 0.0
    %559 = vmatprep.subr.mxu0 0.0
    %560 = vmatpush1.msra.mxu0 0.0
    %561 = vmatprep.subr.mxu0 0.0
    %562 = vmatpush1.msra.mxu0 0.0
    %563 = vmatprep.subr.mxu0 0.0
    %564 = vmatpush1.msra.mxu0 0.0
    %565 = vmatprep.subr.mxu0 0.0
    %566 = vmatpush1.msra.mxu0 0.0
    %567 = vmatprep.subr.mxu0 0.0
    %568 = vmatpush1.msra.mxu0 0.0
    %569 = vmatprep.subr.mxu0 0.0
    %570 = vmatpush1.msra.mxu0 0.0
    %571 = vmatprep.subr.mxu0 0.0
    %572 = vmatpush1.msra.mxu0 0.0
    %573 = vmatprep.subr.mxu0 0.0
    %574 = vmatpush1.msra.mxu0 %v69
    %575 = vmatprep.subr.mxu0 0.0
    %576 = vmatpush1.msra.mxu0 %v68
    %577 = vmatprep.subr.mxu0 0.0
    %578 = vmatpush1.msra.mxu0 %v67
    %579 = vmatprep.subr.mxu0 0.0
    %580 = vmatpush1.msra.mxu0 %v66
    %581 = vmatprep.subr.mxu0 0.0
    %582 = vmatpush2.msra.mxu0 0.0
    %583 = vmatprep.subr.mxu0 0.0
    %584 = vmatpush2.msra.mxu0 0.0
    %585 = vmatprep.subr.mxu0 0.0
    %586 = vmatpush2.msra.mxu0 0.0
    %587 = vmatprep.subr.mxu0 0.0
    %588 = vmatpush2.msra.mxu0 0.0
    %589 = vmatprep.subr.mxu0 0.0
    %590 = vmatpush2.msra.mxu0 0.0
    %591 = vmatprep.subr.mxu0 0.0
    %592 = vmatpush2.msra.mxu0 0.0
    %593 = vmatprep.subr.mxu0 0.0
    %594 = vmatpush2.msra.mxu0 0.0
    %595 = vmatprep.subr.mxu0 0.0
    %596 = vmatpush2.msra.mxu0 0.0
    %597 = vmatprep.subr.mxu0 0.0
    %598 = vmatpush2.msra.mxu0 0.0
    %599 = vmatprep.subr.mxu0 0.0
    %600 = vmatpush2.msra.mxu0 0.0
    %601 = vmatprep.subr.mxu0 0.0
    %602 = vmatpush2.msra.mxu0 0.0
    %603 = vmatprep.subr.mxu0 0.0
    %604 = vmatpush2.msra.mxu0 0.0
    %605 = vmatprep.subr.mxu0 0.0
    %606 = vmatpush2.msra.mxu0 0.0
    %607 = vmatprep.subr.mxu0 0.0
    %608 = vmatpush2.msra.mxu0 0.0
    %609 = vmatprep.subr.mxu0 0.0
    %610 = vmatpush2.msra.mxu0 0.0
    %611 = vmatprep.subr.mxu0 0.0
    %612 = vmatpush2.msra.mxu0 0.0
    %613 = vmatprep.mubr.f32.mxu0 0.0
    %614 = vmatmul.mubr.f32.gmra.mxu0 %v547
    %v615 = vpop.f32.mrf.mxu0
    %v616 = vadd.f32 0.0, %v615
    %v617 = vpop.f32.mrf.mxu0
    %618 = vdwg.mxu0
    %v619 = vadd.f32 %v546, %v616
    %v620 = vxor.u32 %v619, 2147483648
    %v621 = vmul.f32 %v620, 1.442695
    %v622 = vpow.pop %v621
    %v623 = vadd.f32 %v622, 1.0
    %v624 = vrcp.pop %v623
    %v625 = vmul.f32 1.0, %v624
    %v626 = vadd.f32 %v616, %v304
    %628 = vrot.lane.b32.xlu0 %v626, 64
    %v629 = vpop.permute.xlu0 %628
    %v631 = vmul.f32 %v625, %v629
    %633 = vrot.lane.b32.xlu0 %v631, 64
    %v634 = vpop.permute.xlu0 %633
    %v636 = vadd.f32 %v546, %v634
    %v637 = vtanh.pop %v636
    %v638 = vsub.f32 1.0, %v625
    %640 = vrot.lane.b32.xlu0 %v637, 96
    %v641 = vpop.permute.xlu0 %640
    %v643 = vmul.f32 %v638, %v641
    %v644 = vmul.f32 %v625, %v538
    %v645 = vadd.f32 %v643, %v644
    %647 = vrot.lane.b32.xlu0 %v645, 96
    %v648 = vpop.permute.xlu0 %647
    %s650 = scalar_lea.vmem [#allocation3], 24
    %651 = vst.msk [vmem:[%s650] sm:$0xff] %vm78, %v648
    %s652 = scalar_lea.vmem [#allocation2], 32
    %v653 = vld [vmem:[%s652] sm:$0xff]
    %v654 = vsel %vm78, %v648, 0
    %656 = vmatprep.subr.mxu0 0.0
    %657 = vmatpush1.msra.mxu0 0.0
    %658 = vmatprep.subr.mxu0 0.0
    %659 = vmatpush1.msra.mxu0 0.0
    %660 = vmatprep.subr.mxu0 0.0
    %661 = vmatpush1.msra.mxu0 0.0
    %662 = vmatprep.subr.mxu0 0.0
    %663 = vmatpush1.msra.mxu0 0.0
    %664 = vmatprep.subr.mxu0 0.0
    %665 = vmatpush1.msra.mxu0 0.0
    %666 = vmatprep.subr.mxu0 0.0
    %667 = vmatpush1.msra.mxu0 0.0
    %668 = vmatprep.subr.mxu0 0.0
    %669 = vmatpush1.msra.mxu0 0.0
    %670 = vmatprep.subr.mxu0 0.0
    %671 = vmatpush1.msra.mxu0 0.0
    %672 = vmatprep.subr.mxu0 0.0
    %673 = vmatpush1.msra.mxu0 0.0
    %674 = vmatprep.subr.mxu0 0.0
    %675 = vmatpush1.msra.mxu0 0.0
    %676 = vmatprep.subr.mxu0 0.0
    %677 = vmatpush1.msra.mxu0 0.0
    %678 = vmatprep.subr.mxu0 0.0
    %679 = vmatpush1.msra.mxu0 0.0
    %680 = vmatprep.subr.mxu0 0.0
    %681 = vmatpush1.msra.mxu0 %v69
    %682 = vmatprep.subr.mxu0 0.0
    %683 = vmatpush1.msra.mxu0 %v68
    %684 = vmatprep.subr.mxu0 0.0
    %685 = vmatpush1.msra.mxu0 %v67
    %686 = vmatprep.subr.mxu0 0.0
    %687 = vmatpush1.msra.mxu0 %v66
    %688 = vmatprep.subr.mxu0 0.0
    %689 = vmatpush2.msra.mxu0 0.0
    %690 = vmatprep.subr.mxu0 0.0
    %691 = vmatpush2.msra.mxu0 0.0
    %692 = vmatprep.subr.mxu0 0.0
    %693 = vmatpush2.msra.mxu0 0.0
    %694 = vmatprep.subr.mxu0 0.0
    %695 = vmatpush2.msra.mxu0 0.0
    %696 = vmatprep.subr.mxu0 0.0
    %697 = vmatpush2.msra.mxu0 0.0
    %698 = vmatprep.subr.mxu0 0.0
    %699 = vmatpush2.msra.mxu0 0.0
    %700 = vmatprep.subr.mxu0 0.0
    %701 = vmatpush2.msra.mxu0 0.0
    %702 = vmatprep.subr.mxu0 0.0
    %703 = vmatpush2.msra.mxu0 0.0
    %704 = vmatprep.subr.mxu0 0.0
    %705 = vmatpush2.msra.mxu0 0.0
    %706 = vmatprep.subr.mxu0 0.0
    %707 = vmatpush2.msra.mxu0 0.0
    %708 = vmatprep.subr.mxu0 0.0
    %709 = vmatpush2.msra.mxu0 0.0
    %710 = vmatprep.subr.mxu0 0.0
    %711 = vmatpush2.msra.mxu0 0.0
    %712 = vmatprep.subr.mxu0 0.0
    %713 = vmatpush2.msra.mxu0 0.0
    %714 = vmatprep.subr.mxu0 0.0
    %715 = vmatpush2.msra.mxu0 0.0
    %716 = vmatprep.subr.mxu0 0.0
    %717 = vmatpush2.msra.mxu0 0.0
    %718 = vmatprep.subr.mxu0 0.0
    %719 = vmatpush2.msra.mxu0 0.0
    %720 = vmatprep.mubr.f32.mxu0 0.0
    %721 = vmatmul.mubr.f32.gmra.mxu0 %v654
    %v722 = vpop.f32.mrf.mxu0
    %v723 = vadd.f32 0.0, %v722
    %v724 = vpop.f32.mrf.mxu0
    %725 = vdwg.mxu0
    %v726 = vadd.f32 %v653, %v723
    %v727 = vxor.u32 %v726, 2147483648
    %v728 = vmul.f32 %v727, 1.442695
    %v729 = vpow.pop %v728
    %v730 = vadd.f32 %v729, 1.0
    %v731 = vrcp.pop %v730
    %v732 = vmul.f32 1.0, %v731
    %v733 = vadd.f32 %v723, %v304
    %735 = vrot.lane.b32.xlu0 %v733, 64
    %v736 = vpop.permute.xlu0 %735
    %v738 = vmul.f32 %v732, %v736
    %740 = vrot.lane.b32.xlu0 %v738, 64
    %v741 = vpop.permute.xlu0 %740
    %v743 = vadd.f32 %v653, %v741
    %v744 = vtanh.pop %v743
    %v745 = vsub.f32 1.0, %v732
    %747 = vrot.lane.b32.xlu0 %v744, 96
    %v748 = vpop.permute.xlu0 %747
    %v750 = vmul.f32 %v745, %v748
    %v751 = vmul.f32 %v732, %v645
    %v752 = vadd.f32 %v750, %v751
    %754 = vrot.lane.b32.xlu0 %v752, 96
    %v755 = vpop.permute.xlu0 %754
    %s757 = scalar_lea.vmem [#allocation3], 32
    %758 = vst.msk [vmem:[%s757] sm:$0xff] %vm78, %v755
    %s759 = scalar_lea.vmem [#allocation2], 40
    %v760 = vld [vmem:[%s759] sm:$0xff]
    %v761 = vsel %vm78, %v755, 0
    %763 = vmatprep.subr.mxu0 0.0
    %764 = vmatpush1.msra.mxu0 0.0
    %765 = vmatprep.subr.mxu0 0.0
    %766 = vmatpush1.msra.mxu0 0.0
    %767 = vmatprep.subr.mxu0 0.0
    %768 = vmatpush1.msra.mxu0 0.0
    %769 = vmatprep.subr.mxu0 0.0
    %770 = vmatpush1.msra.mxu0 0.0
    %771 = vmatprep.subr.mxu0 0.0
    %772 = vmatpush1.msra.mxu0 0.0
    %773 = vmatprep.subr.mxu0 0.0
    %774 = vmatpush1.msra.mxu0 0.0
    %775 = vmatprep.subr.mxu0 0.0
    %776 = vmatpush1.msra.mxu0 0.0
    %777 = vmatprep.subr.mxu0 0.0
    %778 = vmatpush1.msra.mxu0 0.0
    %779 = vmatprep.subr.mxu0 0.0
    %780 = vmatpush1.msra.mxu0 0.0
    %781 = vmatprep.subr.mxu0 0.0
    %782 = vmatpush1.msra.mxu0 0.0
    %783 = vmatprep.subr.mxu0 0.0
    %784 = vmatpush1.msra.mxu0 0.0
    %785 = vmatprep.subr.mxu0 0.0
    %786 = vmatpush1.msra.mxu0 0.0
    %787 = vmatprep.subr.mxu0 0.0
    %788 = vmatpush1.msra.mxu0 %v69
    %789 = vmatprep.subr.mxu0 0.0
    %790 = vmatpush1.msra.mxu0 %v68
    %791 = vmatprep.subr.mxu0 0.0
    %792 = vmatpush1.msra.mxu0 %v67
    %793 = vmatprep.subr.mxu0 0.0
    %794 = vmatpush1.msra.mxu0 %v66
    %795 = vmatprep.subr.mxu0 0.0
    %796 = vmatpush2.msra.mxu0 0.0
    %797 = vmatprep.subr.mxu0 0.0
    %798 = vmatpush2.msra.mxu0 0.0
    %799 = vmatprep.subr.mxu0 0.0
    %800 = vmatpush2.msra.mxu0 0.0
    %801 = vmatprep.subr.mxu0 0.0
    %802 = vmatpush2.msra.mxu0 0.0
    %803 = vmatprep.subr.mxu0 0.0
    %804 = vmatpush2.msra.mxu0 0.0
    %805 = vmatprep.subr.mxu0 0.0
    %806 = vmatpush2.msra.mxu0 0.0
    %807 = vmatprep.subr.mxu0 0.0
    %808 = vmatpush2.msra.mxu0 0.0
    %809 = vmatprep.subr.mxu0 0.0
    %810 = vmatpush2.msra.mxu0 0.0
    %811 = vmatprep.subr.mxu0 0.0
    %812 = vmatpush2.msra.mxu0 0.0
    %813 = vmatprep.subr.mxu0 0.0
    %814 = vmatpush2.msra.mxu0 0.0
    %815 = vmatprep.subr.mxu0 0.0
    %816 = vmatpush2.msra.mxu0 0.0
    %817 = vmatprep.subr.mxu0 0.0
    %818 = vmatpush2.msra.mxu0 0.0
    %819 = vmatprep.subr.mxu0 0.0
    %820 = vmatpush2.msra.mxu0 0.0
    %821 = vmatprep.subr.mxu0 0.0
    %822 = vmatpush2.msra.mxu0 0.0
    %823 = vmatprep.subr.mxu0 0.0
    %824 = vmatpush2.msra.mxu0 0.0
    %825 = vmatprep.subr.mxu0 0.0
    %826 = vmatpush2.msra.mxu0 0.0
    %827 = vmatprep.mubr.f32.mxu0 0.0
    %828 = vmatmul.mubr.f32.gmra.mxu0 %v761
    %v829 = vpop.f32.mrf.mxu0
    %v830 = vadd.f32 0.0, %v829
    %v831 = vpop.f32.mrf.mxu0
    %832 = vdwg.mxu0
    %v833 = vadd.f32 %v760, %v830
    %v834 = vxor.u32 %v833, 2147483648
    %v835 = vmul.f32 %v834, 1.442695
    %v836 = vpow.pop %v835
    %v837 = vadd.f32 %v836, 1.0
    %v838 = vrcp.pop %v837
    %v839 = vmul.f32 1.0, %v838
    %v840 = vadd.f32 %v830, %v304
    %842 = vrot.lane.b32.xlu0 %v840, 64
    %v843 = vpop.permute.xlu0 %842
    %v845 = vmul.f32 %v839, %v843
    %847 = vrot.lane.b32.xlu0 %v845, 64
    %v848 = vpop.permute.xlu0 %847
    %v850 = vadd.f32 %v760, %v848
    %v851 = vtanh.pop %v850
    %v852 = vsub.f32 1.0, %v839
    %854 = vrot.lane.b32.xlu0 %v851, 96
    %v855 = vpop.permute.xlu0 %854
    %v857 = vmul.f32 %v852, %v855
    %v858 = vmul.f32 %v839, %v752
    %v859 = vadd.f32 %v857, %v858
    %861 = vrot.lane.b32.xlu0 %v859, 96
    %v862 = vpop.permute.xlu0 %861
    %s864 = scalar_lea.vmem [#allocation3], 40
    %865 = vst.msk [vmem:[%s864] sm:$0xff] %vm78, %v862
    %s866 = scalar_lea.vmem [#allocation2], 48
    %v867 = vld [vmem:[%s866] sm:$0xff]
    %v868 = vsel %vm78, %v862, 0
    %870 = vmatprep.subr.mxu0 0.0
    %871 = vmatpush1.msra.mxu0 0.0
    %872 = vmatprep.subr.mxu0 0.0
    %873 = vmatpush1.msra.mxu0 0.0
    %874 = vmatprep.subr.mxu0 0.0
    %875 = vmatpush1.msra.mxu0 0.0
    %876 = vmatprep.subr.mxu0 0.0
    %877 = vmatpush1.msra.mxu0 0.0
    %878 = vmatprep.subr.mxu0 0.0
    %879 = vmatpush1.msra.mxu0 0.0
    %880 = vmatprep.subr.mxu0 0.0
    %881 = vmatpush1.msra.mxu0 0.0
    %882 = vmatprep.subr.mxu0 0.0
    %883 = vmatpush1.msra.mxu0 0.0
    %884 = vmatprep.subr.mxu0 0.0
    %885 = vmatpush1.msra.mxu0 0.0
    %886 = vmatprep.subr.mxu0 0.0
    %887 = vmatpush1.msra.mxu0 0.0
    %888 = vmatprep.subr.mxu0 0.0
    %889 = vmatpush1.msra.mxu0 0.0
    %890 = vmatprep.subr.mxu0 0.0
    %891 = vmatpush1.msra.mxu0 0.0
    %892 = vmatprep.subr.mxu0 0.0
    %893 = vmatpush1.msra.mxu0 0.0
    %894 = vmatprep.subr.mxu0 0.0
    %895 = vmatpush1.msra.mxu0 %v69
    %896 = vmatprep.subr.mxu0 0.0
    %897 = vmatpush1.msra.mxu0 %v68
    %898 = vmatprep.subr.mxu0 0.0
    %899 = vmatpush1.msra.mxu0 %v67
    %900 = vmatprep.subr.mxu0 0.0
    %901 = vmatpush1.msra.mxu0 %v66
    %902 = vmatprep.subr.mxu0 0.0
    %903 = vmatpush2.msra.mxu0 0.0
    %904 = vmatprep.subr.mxu0 0.0
    %905 = vmatpush2.msra.mxu0 0.0
    %906 = vmatprep.subr.mxu0 0.0
    %907 = vmatpush2.msra.mxu0 0.0
    %908 = vmatprep.subr.mxu0 0.0
    %909 = vmatpush2.msra.mxu0 0.0
    %910 = vmatprep.subr.mxu0 0.0
    %911 = vmatpush2.msra.mxu0 0.0
    %912 = vmatprep.subr.mxu0 0.0
    %913 = vmatpush2.msra.mxu0 0.0
    %914 = vmatprep.subr.mxu0 0.0
    %915 = vmatpush2.msra.mxu0 0.0
    %916 = vmatprep.subr.mxu0 0.0
    %917 = vmatpush2.msra.mxu0 0.0
    %918 = vmatprep.subr.mxu0 0.0
    %919 = vmatpush2.msra.mxu0 0.0
    %920 = vmatprep.subr.mxu0 0.0
    %921 = vmatpush2.msra.mxu0 0.0
    %922 = vmatprep.subr.mxu0 0.0
    %923 = vmatpush2.msra.mxu0 0.0
    %924 = vmatprep.subr.mxu0 0.0
    %925 = vmatpush2.msra.mxu0 0.0
    %926 = vmatprep.subr.mxu0 0.0
    %927 = vmatpush2.msra.mxu0 0.0
    %928 = vmatprep.subr.mxu0 0.0
    %929 = vmatpush2.msra.mxu0 0.0
    %930 = vmatprep.subr.mxu0 0.0
    %931 = vmatpush2.msra.mxu0 0.0
    %932 = vmatprep.subr.mxu0 0.0
    %933 = vmatpush2.msra.mxu0 0.0
    %934 = vmatprep.mubr.f32.mxu0 0.0
    %935 = vmatmul.mubr.f32.gmra.mxu0 %v868
    %v936 = vpop.f32.mrf.mxu0
    %v937 = vadd.f32 0.0, %v936
    %v938 = vpop.f32.mrf.mxu0
    %939 = vdwg.mxu0
    %v940 = vadd.f32 %v867, %v937
    %v941 = vxor.u32 %v940, 2147483648
    %v942 = vmul.f32 %v941, 1.442695
    %v943 = vpow.pop %v942
    %v944 = vadd.f32 %v943, 1.0
    %v945 = vrcp.pop %v944
    %v946 = vmul.f32 1.0, %v945
    %v947 = vadd.f32 %v937, %v304
    %949 = vrot.lane.b32.xlu0 %v947, 64
    %v950 = vpop.permute.xlu0 %949
    %v952 = vmul.f32 %v946, %v950
    %954 = vrot.lane.b32.xlu0 %v952, 64
    %v955 = vpop.permute.xlu0 %954
    %v957 = vadd.f32 %v867, %v955
    %v958 = vtanh.pop %v957
    %v959 = vsub.f32 1.0, %v946
    %961 = vrot.lane.b32.xlu0 %v958, 96
    %v962 = vpop.permute.xlu0 %961
    %v964 = vmul.f32 %v959, %v962
    %v965 = vmul.f32 %v946, %v859
    %v966 = vadd.f32 %v964, %v965
    %968 = vrot.lane.b32.xlu0 %v966, 96
    %v969 = vpop.permute.xlu0 %968
    %s971 = scalar_lea.vmem [#allocation3], 48
    %972 = vst.msk [vmem:[%s971] sm:$0xff] %vm78, %v969
    %s973 = scalar_lea.vmem [#allocation2], 56
    %v974 = vld [vmem:[%s973] sm:$0xff]
    %v975 = vsel %vm78, %v969, 0
    %977 = vmatprep.subr.mxu0 0.0
    %978 = vmatpush1.msra.mxu0 0.0
    %979 = vmatprep.subr.mxu0 0.0
    %980 = vmatpush1.msra.mxu0 0.0
    %981 = vmatprep.subr.mxu0 0.0
    %982 = vmatpush1.msra.mxu0 0.0
    %983 = vmatprep.subr.mxu0 0.0
    %984 = vmatpush1.msra.mxu0 0.0
    %985 = vmatprep.subr.mxu0 0.0
    %986 = vmatpush1.msra.mxu0 0.0
    %987 = vmatprep.subr.mxu0 0.0
    %988 = vmatpush1.msra.mxu0 0.0
    %989 = vmatprep.subr.mxu0 0.0
    %990 = vmatpush1.msra.mxu0 0.0
    %991 = vmatprep.subr.mxu0 0.0
    %992 = vmatpush1.msra.mxu0 0.0
    %993 = vmatprep.subr.mxu0 0.0
    %994 = vmatpush1.msra.mxu0 0.0
    %995 = vmatprep.subr.mxu0 0.0
    %996 = vmatpush1.msra.mxu0 0.0
    %997 = vmatprep.subr.mxu0 0.0
    %998 = vmatpush1.msra.mxu0 0.0
    %999 = vmatprep.subr.mxu0 0.0
    %1000 = vmatpush1.msra.mxu0 0.0
    %1001 = vmatprep.subr.mxu0 0.0
    %1002 = vmatpush1.msra.mxu0 %v69
    %1003 = vmatprep.subr.mxu0 0.0
    %1004 = vmatpush1.msra.mxu0 %v68
    %1005 = vmatprep.subr.mxu0 0.0
    %1006 = vmatpush1.msra.mxu0 %v67
    %1007 = vmatprep.subr.mxu0 0.0
    %1008 = vmatpush1.msra.mxu0 %v66
    %1009 = vmatprep.subr.mxu0 0.0
    %1010 = vmatpush2.msra.mxu0 0.0
    %1011 = vmatprep.subr.mxu0 0.0
    %1012 = vmatpush2.msra.mxu0 0.0
    %1013 = vmatprep.subr.mxu0 0.0
    %1014 = vmatpush2.msra.mxu0 0.0
    %1015 = vmatprep.subr.mxu0 0.0
    %1016 = vmatpush2.msra.mxu0 0.0
    %1017 = vmatprep.subr.mxu0 0.0
    %1018 = vmatpush2.msra.mxu0 0.0
    %1019 = vmatprep.subr.mxu0 0.0
    %1020 = vmatpush2.msra.mxu0 0.0
    %1021 = vmatprep.subr.mxu0 0.0
    %1022 = vmatpush2.msra.mxu0 0.0
    %1023 = vmatprep.subr.mxu0 0.0
    %1024 = vmatpush2.msra.mxu0 0.0
    %1025 = vmatprep.subr.mxu0 0.0
    %1026 = vmatpush2.msra.mxu0 0.0
    %1027 = vmatprep.subr.mxu0 0.0
    %1028 = vmatpush2.msra.mxu0 0.0
    %1029 = vmatprep.subr.mxu0 0.0
    %1030 = vmatpush2.msra.mxu0 0.0
    %1031 = vmatprep.subr.mxu0 0.0
    %1032 = vmatpush2.msra.mxu0 0.0
    %1033 = vmatprep.subr.mxu0 0.0
    %1034 = vmatpush2.msra.mxu0 0.0
    %1035 = vmatprep.subr.mxu0 0.0
    %1036 = vmatpush2.msra.mxu0 0.0
    %1037 = vmatprep.subr.mxu0 0.0
    %1038 = vmatpush2.msra.mxu0 0.0
    %1039 = vmatprep.subr.mxu0 0.0
    %1040 = vmatpush2.msra.mxu0 0.0
    %1041 = vmatprep.mubr.f32.mxu0 0.0
    %1042 = vmatmul.mubr.f32.gmra.mxu0 %v975
    %v1043 = vpop.f32.mrf.mxu0
    %v1044 = vadd.f32 0.0, %v1043
    %v1045 = vpop.f32.mrf.mxu0
    %1046 = vdwg.mxu0
    %v1047 = vadd.f32 %v974, %v1044
    %v1048 = vxor.u32 %v1047, 2147483648
    %v1049 = vmul.f32 %v1048, 1.442695
    %v1050 = vpow.pop %v1049
    %v1051 = vadd.f32 %v1050, 1.0
    %v1052 = vrcp.pop %v1051
    %v1053 = vmul.f32 1.0, %v1052
    %v1054 = vadd.f32 %v1044, %v304
    %1056 = vrot.lane.b32.xlu0 %v1054, 64
    %v1057 = vpop.permute.xlu0 %1056
    %v1059 = vmul.f32 %v1053, %v1057
    %1061 = vrot.lane.b32.xlu0 %v1059, 64
    %v1062 = vpop.permute.xlu0 %1061
    %v1064 = vadd.f32 %v974, %v1062
    %v1065 = vtanh.pop %v1064
    %v1066 = vsub.f32 1.0, %v1053
    %1068 = vrot.lane.b32.xlu0 %v1065, 96
    %v1069 = vpop.permute.xlu0 %1068
    %v1071 = vmul.f32 %v1066, %v1069
    %v1072 = vmul.f32 %v1053, %v966
    %v1073 = vadd.f32 %v1071, %v1072
    %1075 = vrot.lane.b32.xlu0 %v1073, 96
    %v1076 = vpop.permute.xlu0 %1075
    %s1078 = scalar_lea.vmem [#allocation3], 56
    %1079 = vst.msk [vmem:[%s1078] sm:$0xff] %vm78, %v1076
    %v1080 = vld [vmem:[#allocation2] sm:$0xff]
    %v1081 = vsel %vm78, %v1076, 0
    %1083 = vmatprep.subr.mxu0 0.0
    %1084 = vmatpush1.msra.mxu0 0.0
    %1085 = vmatprep.subr.mxu0 0.0
    %1086 = vmatpush1.msra.mxu0 0.0
    %1087 = vmatprep.subr.mxu0 0.0
    %1088 = vmatpush1.msra.mxu0 0.0
    %1089 = vmatprep.subr.mxu0 0.0
    %1090 = vmatpush1.msra.mxu0 0.0
    %1091 = vmatprep.subr.mxu0 0.0
    %1092 = vmatpush1.msra.mxu0 0.0
    %1093 = vmatprep.subr.mxu0 0.0
    %1094 = vmatpush1.msra.mxu0 0.0
    %1095 = vmatprep.subr.mxu0 0.0
    %1096 = vmatpush1.msra.mxu0 0.0
    %1097 = vmatprep.subr.mxu0 0.0
    %1098 = vmatpush1.msra.mxu0 0.0
    %1099 = vmatprep.subr.mxu0 0.0
    %1100 = vmatpush1.msra.mxu0 0.0
    %1101 = vmatprep.subr.mxu0 0.0
    %1102 = vmatpush1.msra.mxu0 0.0
    %1103 = vmatprep.subr.mxu0 0.0
    %1104 = vmatpush1.msra.mxu0 0.0
    %1105 = vmatprep.subr.mxu0 0.0
    %1106 = vmatpush1.msra.mxu0 0.0
    %1107 = vmatprep.subr.mxu0 0.0
    %1108 = vmatpush1.msra.mxu0 %v69
    %1109 = vmatprep.subr.mxu0 0.0
    %1110 = vmatpush1.msra.mxu0 %v68
    %1111 = vmatprep.subr.mxu0 0.0
    %1112 = vmatpush1.msra.mxu0 %v67
    %1113 = vmatprep.subr.mxu0 0.0
    %1114 = vmatpush1.msra.mxu0 %v66
    %1115 = vmatprep.subr.mxu0 0.0
    %1116 = vmatpush2.msra.mxu0 0.0
    %1117 = vmatprep.subr.mxu0 0.0
    %1118 = vmatpush2.msra.mxu0 0.0
    %1119 = vmatprep.subr.mxu0 0.0
    %1120 = vmatpush2.msra.mxu0 0.0
    %1121 = vmatprep.subr.mxu0 0.0
    %1122 = vmatpush2.msra.mxu0 0.0
    %1123 = vmatprep.subr.mxu0 0.0
    %1124 = vmatpush2.msra.mxu0 0.0
    %1125 = vmatprep.subr.mxu0 0.0
    %1126 = vmatpush2.msra.mxu0 0.0
    %1127 = vmatprep.subr.mxu0 0.0
    %1128 = vmatpush2.msra.mxu0 0.0
    %1129 = vmatprep.subr.mxu0 0.0
    %1130 = vmatpush2.msra.mxu0 0.0
    %1131 = vmatprep.subr.mxu0 0.0
    %1132 = vmatpush2.msra.mxu0 0.0
    %1133 = vmatprep.subr.mxu0 0.0
    %1134 = vmatpush2.msra.mxu0 0.0
    %1135 = vmatprep.subr.mxu0 0.0
    %1136 = vmatpush2.msra.mxu0 0.0
    %1137 = vmatprep.subr.mxu0 0.0
    %1138 = vmatpush2.msra.mxu0 0.0
    %1139 = vmatprep.subr.mxu0 0.0
    %1140 = vmatpush2.msra.mxu0 0.0
    %1141 = vmatprep.subr.mxu0 0.0
    %1142 = vmatpush2.msra.mxu0 0.0
    %1143 = vmatprep.subr.mxu0 0.0
    %1144 = vmatpush2.msra.mxu0 0.0
    %1145 = vmatprep.subr.mxu0 0.0
    %1146 = vmatpush2.msra.mxu0 0.0
    %1147 = vmatprep.mubr.f32.mxu0 0.0
    %1148 = vmatmul.mubr.f32.gmra.mxu0 %v1081
    %v1149 = vpop.f32.mrf.mxu0
    %v1150 = vadd.f32 0.0, %v1149
    %v1151 = vpop.f32.mrf.mxu0
    %1152 = vdwg.mxu0
    %v1153 = vadd.f32 %v1080, %v1150
    %v1154 = vxor.u32 %v1153, 2147483648
    %v1155 = vmul.f32 %v1154, 1.442695
    %v1156 = vpow.pop %v1155
    %v1157 = vadd.f32 %v1156, 1.0
    %v1158 = vrcp.pop %v1157
    %v1159 = vmul.f32 1.0, %v1158
    %v1160 = vadd.f32 %v1150, %v304
    %1162 = vrot.lane.b32.xlu0 %v1160, 64
    %v1163 = vpop.permute.xlu0 %1162
    %v1165 = vmul.f32 %v1159, %v1163
    %1167 = vrot.lane.b32.xlu0 %v1165, 64
    %v1168 = vpop.permute.xlu0 %1167
    %v1170 = vadd.f32 %v1080, %v1168
    %v1171 = vtanh.pop %v1170
    %v1172 = vsub.f32 1.0, %v1159
    %1174 = vrot.lane.b32.xlu0 %v1171, 96
    %v1175 = vpop.permute.xlu0 %1174
    %v1177 = vmul.f32 %v1172, %v1175
    %v1178 = vmul.f32 %v1159, %v1073
    %v1179 = vadd.f32 %v1177, %v1178
    %1181 = vrot.lane.b32.xlu0 %v1179, 96
    %v1182 = vpop.permute.xlu0 %1181
    %s1184 = scalar_lea.vmem [#allocation3], 64
    %1185 = vst.msk [vmem:[%s1184] sm:$0xff] %vm78, %v1182
    %v1186 = vld [vmem:[%s331] sm:$0xff]
    %v1187 = vsel %vm78, %v1182, 0
    %1189 = vmatprep.subr.mxu0 0.0
    %1190 = vmatpush1.msra.mxu0 0.0
    %1191 = vmatprep.subr.mxu0 0.0
    %1192 = vmatpush1.msra.mxu0 0.0
    %1193 = vmatprep.subr.mxu0 0.0
    %1194 = vmatpush1.msra.mxu0 0.0
    %1195 = vmatprep.subr.mxu0 0.0
    %1196 = vmatpush1.msra.mxu0 0.0
    %1197 = vmatprep.subr.mxu0 0.0
    %1198 = vmatpush1.msra.mxu0 0.0
    %1199 = vmatprep.subr.mxu0 0.0
    %1200 = vmatpush1.msra.mxu0 0.0
    %1201 = vmatprep.subr.mxu0 0.0
    %1202 = vmatpush1.msra.mxu0 0.0
    %1203 = vmatprep.subr.mxu0 0.0
    %1204 = vmatpush1.msra.mxu0 0.0
    %1205 = vmatprep.subr.mxu0 0.0
    %1206 = vmatpush1.msra.mxu0 0.0
    %1207 = vmatprep.subr.mxu0 0.0
    %1208 = vmatpush1.msra.mxu0 0.0
    %1209 = vmatprep.subr.mxu0 0.0
    %1210 = vmatpush1.msra.mxu0 0.0
    %1211 = vmatprep.subr.mxu0 0.0
    %1212 = vmatpush1.msra.mxu0 0.0
    %1213 = vmatprep.subr.mxu0 0.0
    %1214 = vmatpush1.msra.mxu0 %v69
    %1215 = vmatprep.subr.mxu0 0.0
    %1216 = vmatpush1.msra.mxu0 %v68
    %1217 = vmatprep.subr.mxu0 0.0
    %1218 = vmatpush1.msra.mxu0 %v67
    %1219 = vmatprep.subr.mxu0 0.0
    %1220 = vmatpush1.msra.mxu0 %v66
    %1221 = vmatprep.subr.mxu0 0.0
    %1222 = vmatpush2.msra.mxu0 0.0
    %1223 = vmatprep.subr.mxu0 0.0
    %1224 = vmatpush2.msra.mxu0 0.0
    %1225 = vmatprep.subr.mxu0 0.0
    %1226 = vmatpush2.msra.mxu0 0.0
    %1227 = vmatprep.subr.mxu0 0.0
    %1228 = vmatpush2.msra.mxu0 0.0
    %1229 = vmatprep.subr.mxu0 0.0
    %1230 = vmatpush2.msra.mxu0 0.0
    %1231 = vmatprep.subr.mxu0 0.0
    %1232 = vmatpush2.msra.mxu0 0.0
    %1233 = vmatprep.subr.mxu0 0.0
    %1234 = vmatpush2.msra.mxu0 0.0
    %1235 = vmatprep.subr.mxu0 0.0
    %1236 = vmatpush2.msra.mxu0 0.0
    %1237 = vmatprep.subr.mxu0 0.0
    %1238 = vmatpush2.msra.mxu0 0.0
    %1239 = vmatprep.subr.mxu0 0.0
    %1240 = vmatpush2.msra.mxu0 0.0
    %1241 = vmatprep.subr.mxu0 0.0
    %1242 = vmatpush2.msra.mxu0 0.0
    %1243 = vmatprep.subr.mxu0 0.0
    %1244 = vmatpush2.msra.mxu0 0.0
    %1245 = vmatprep.subr.mxu0 0.0
    %1246 = vmatpush2.msra.mxu0 0.0
    %1247 = vmatprep.subr.mxu0 0.0
    %1248 = vmatpush2.msra.mxu0 0.0
    %1249 = vmatprep.subr.mxu0 0.0
    %1250 = vmatpush2.msra.mxu0 0.0
    %1251 = vmatprep.subr.mxu0 0.0
    %1252 = vmatpush2.msra.mxu0 0.0
    %1253 = vmatprep.mubr.f32.mxu0 0.0
    %1254 = vmatmul.mubr.f32.gmra.mxu0 %v1187
    %v1255 = vpop.f32.mrf.mxu0
    %v1256 = vadd.f32 0.0, %v1255
    %v1257 = vpop.f32.mrf.mxu0
    %1258 = vdwg.mxu0
    %v1259 = vadd.f32 %v1186, %v1256
    %v1260 = vxor.u32 %v1259, 2147483648
    %v1261 = vmul.f32 %v1260, 1.442695
    %v1262 = vpow.pop %v1261
    %v1263 = vadd.f32 %v1262, 1.0
    %v1264 = vrcp.pop %v1263
    %v1265 = vmul.f32 1.0, %v1264
    %v1266 = vadd.f32 %v1256, %v304
    %1268 = vrot.lane.b32.xlu0 %v1266, 64
    %v1269 = vpop.permute.xlu0 %1268
    %v1271 = vmul.f32 %v1265, %v1269
    %1273 = vrot.lane.b32.xlu0 %v1271, 64
    %v1274 = vpop.permute.xlu0 %1273
    %v1276 = vadd.f32 %v1186, %v1274
    %v1277 = vtanh.pop %v1276
    %v1278 = vsub.f32 1.0, %v1265
    %1280 = vrot.lane.b32.xlu0 %v1277, 96
    %v1281 = vpop.permute.xlu0 %1280
    %v1283 = vmul.f32 %v1278, %v1281
    %v1284 = vmul.f32 %v1265, %v1179
    %v1285 = vadd.f32 %v1283, %v1284
    %1287 = vrot.lane.b32.xlu0 %v1285, 96
    %v1288 = vpop.permute.xlu0 %1287
    %s1290 = scalar_lea.vmem [#allocation3], 72
    %1291 = vst.msk [vmem:[%s1290] sm:$0xff] %vm78, %v1288
    %v1292 = vld [vmem:[%s438] sm:$0xff]
    %v1293 = vsel %vm78, %v1288, 0
    %1295 = vmatprep.subr.mxu0 0.0
    %1296 = vmatpush1.msra.mxu0 0.0
    %1297 = vmatprep.subr.mxu0 0.0
    %1298 = vmatpush1.msra.mxu0 0.0
    %1299 = vmatprep.subr.mxu0 0.0
    %1300 = vmatpush1.msra.mxu0 0.0
    %1301 = vmatprep.subr.mxu0 0.0
    %1302 = vmatpush1.msra.mxu0 0.0
    %1303 = vmatprep.subr.mxu0 0.0
    %1304 = vmatpush1.msra.mxu0 0.0
    %1305 = vmatprep.subr.mxu0 0.0
    %1306 = vmatpush1.msra.mxu0 0.0
    %1307 = vmatprep.subr.mxu0 0.0
    %1308 = vmatpush1.msra.mxu0 0.0
    %1309 = vmatprep.subr.mxu0 0.0
    %1310 = vmatpush1.msra.mxu0 0.0
    %1311 = vmatprep.subr.mxu0 0.0
    %1312 = vmatpush1.msra.mxu0 0.0
    %1313 = vmatprep.subr.mxu0 0.0
    %1314 = vmatpush1.msra.mxu0 0.0
    %1315 = vmatprep.subr.mxu0 0.0
    %1316 = vmatpush1.msra.mxu0 0.0
    %1317 = vmatprep.subr.mxu0 0.0
    %1318 = vmatpush1.msra.mxu0 0.0
    %1319 = vmatprep.subr.mxu0 0.0
    %1320 = vmatpush1.msra.mxu0 %v69
    %1321 = vmatprep.subr.mxu0 0.0
    %1322 = vmatpush1.msra.mxu0 %v68
    %1323 = vmatprep.subr.mxu0 0.0
    %1324 = vmatpush1.msra.mxu0 %v67
    %1325 = vmatprep.subr.mxu0 0.0
    %1326 = vmatpush1.msra.mxu0 %v66
    %1327 = vmatprep.subr.mxu0 0.0
    %1328 = vmatpush2.msra.mxu0 0.0
    %1329 = vmatprep.subr.mxu0 0.0
    %1330 = vmatpush2.msra.mxu0 0.0
    %1331 = vmatprep.subr.mxu0 0.0
    %1332 = vmatpush2.msra.mxu0 0.0
    %1333 = vmatprep.subr.mxu0 0.0
    %1334 = vmatpush2.msra.mxu0 0.0
    %1335 = vmatprep.subr.mxu0 0.0
    %1336 = vmatpush2.msra.mxu0 0.0
    %1337 = vmatprep.subr.mxu0 0.0
    %1338 = vmatpush2.msra.mxu0 0.0
    %1339 = vmatprep.subr.mxu0 0.0
    %1340 = vmatpush2.msra.mxu0 0.0
    %1341 = vmatprep.subr.mxu0 0.0
    %1342 = vmatpush2.msra.mxu0 0.0
    %1343 = vmatprep.subr.mxu0 0.0
    %1344 = vmatpush2.msra.mxu0 0.0
    %1345 = vmatprep.subr.mxu0 0.0
    %1346 = vmatpush2.msra.mxu0 0.0
    %1347 = vmatprep.subr.mxu0 0.0
    %1348 = vmatpush2.msra.mxu0 0.0
    %1349 = vmatprep.subr.mxu0 0.0
    %1350 = vmatpush2.msra.mxu0 0.0
    %1351 = vmatprep.subr.mxu0 0.0
    %1352 = vmatpush2.msra.mxu0 0.0
    %1353 = vmatprep.subr.mxu0 0.0
    %1354 = vmatpush2.msra.mxu0 0.0
    %1355 = vmatprep.subr.mxu0 0.0
    %1356 = vmatpush2.msra.mxu0 0.0
    %1357 = vmatprep.subr.mxu0 0.0
    %1358 = vmatpush2.msra.mxu0 0.0
    %1359 = vmatprep.mubr.f32.mxu0 0.0
    %1360 = vmatmul.mubr.f32.gmra.mxu0 %v1293
    %v1361 = vpop.f32.mrf.mxu0
    %v1362 = vadd.f32 0.0, %v1361
    %v1363 = vpop.f32.mrf.mxu0
    %1364 = vdwg.mxu0
    %v1365 = vadd.f32 %v1292, %v1362
    %v1366 = vxor.u32 %v1365, 2147483648
    %v1367 = vmul.f32 %v1366, 1.442695
    %v1368 = vpow.pop %v1367
    %v1369 = vadd.f32 %v1368, 1.0
    %v1370 = vrcp.pop %v1369
    %v1371 = vmul.f32 1.0, %v1370
    %v1372 = vadd.f32 %v1362, %v304
    %1374 = vrot.lane.b32.xlu0 %v1372, 64
    %v1375 = vpop.permute.xlu0 %1374
    %v1377 = vmul.f32 %v1371, %v1375
    %1379 = vrot.lane.b32.xlu0 %v1377, 64
    %v1380 = vpop.permute.xlu0 %1379
    %v1382 = vadd.f32 %v1292, %v1380
    %v1383 = vtanh.pop %v1382
    %v1384 = vsub.f32 1.0, %v1371
    %1386 = vrot.lane.b32.xlu0 %v1383, 96
    %v1387 = vpop.permute.xlu0 %1386
    %v1389 = vmul.f32 %v1384, %v1387
    %v1390 = vmul.f32 %v1371, %v1285
    %v1391 = vadd.f32 %v1389, %v1390
    %1393 = vrot.lane.b32.xlu0 %v1391, 96
    %v1394 = vpop.permute.xlu0 %1393
    %s1396 = scalar_lea.vmem [#allocation3], 80
    %1397 = vst.msk [vmem:[%s1396] sm:$0xff] %vm78, %v1394
    %v1398 = vld [vmem:[%s545] sm:$0xff]
    %v1399 = vsel %vm78, %v1394, 0
    %1401 = vmatprep.subr.mxu0 0.0
    %1402 = vmatpush1.msra.mxu0 0.0
    %1403 = vmatprep.subr.mxu0 0.0
    %1404 = vmatpush1.msra.mxu0 0.0
    %1405 = vmatprep.subr.mxu0 0.0
    %1406 = vmatpush1.msra.mxu0 0.0
    %1407 = vmatprep.subr.mxu0 0.0
    %1408 = vmatpush1.msra.mxu0 0.0
    %1409 = vmatprep.subr.mxu0 0.0
    %1410 = vmatpush1.msra.mxu0 0.0
    %1411 = vmatprep.subr.mxu0 0.0
    %1412 = vmatpush1.msra.mxu0 0.0
    %1413 = vmatprep.subr.mxu0 0.0
    %1414 = vmatpush1.msra.mxu0 0.0
    %1415 = vmatprep.subr.mxu0 0.0
    %1416 = vmatpush1.msra.mxu0 0.0
    %1417 = vmatprep.subr.mxu0 0.0
    %1418 = vmatpush1.msra.mxu0 0.0
    %1419 = vmatprep.subr.mxu0 0.0
    %1420 = vmatpush1.msra.mxu0 0.0
    %1421 = vmatprep.subr.mxu0 0.0
    %1422 = vmatpush1.msra.mxu0 0.0
    %1423 = vmatprep.subr.mxu0 0.0
    %1424 = vmatpush1.msra.mxu0 0.0
    %1425 = vmatprep.subr.mxu0 0.0
    %1426 = vmatpush1.msra.mxu0 %v69
    %1427 = vmatprep.subr.mxu0 0.0
    %1428 = vmatpush1.msra.mxu0 %v68
    %1429 = vmatprep.subr.mxu0 0.0
    %1430 = vmatpush1.msra.mxu0 %v67
    %1431 = vmatprep.subr.mxu0 0.0
    %1432 = vmatpush1.msra.mxu0 %v66
    %1433 = vmatprep.subr.mxu0 0.0
    %1434 = vmatpush2.msra.mxu0 0.0
    %1435 = vmatprep.subr.mxu0 0.0
    %1436 = vmatpush2.msra.mxu0 0.0
    %1437 = vmatprep.subr.mxu0 0.0
    %1438 = vmatpush2.msra.mxu0 0.0
    %1439 = vmatprep.subr.mxu0 0.0
    %1440 = vmatpush2.msra.mxu0 0.0
    %1441 = vmatprep.subr.mxu0 0.0
    %1442 = vmatpush2.msra.mxu0 0.0
    %1443 = vmatprep.subr.mxu0 0.0
    %1444 = vmatpush2.msra.mxu0 0.0
    %1445 = vmatprep.subr.mxu0 0.0
    %1446 = vmatpush2.msra.mxu0 0.0
    %1447 = vmatprep.subr.mxu0 0.0
    %1448 = vmatpush2.msra.mxu0 0.0
    %1449 = vmatprep.subr.mxu0 0.0
    %1450 = vmatpush2.msra.mxu0 0.0
    %1451 = vmatprep.subr.mxu0 0.0
    %1452 = vmatpush2.msra.mxu0 0.0
    %1453 = vmatprep.subr.mxu0 0.0
    %1454 = vmatpush2.msra.mxu0 0.0
    %1455 = vmatprep.subr.mxu0 0.0
    %1456 = vmatpush2.msra.mxu0 0.0
    %1457 = vmatprep.subr.mxu0 0.0
    %1458 = vmatpush2.msra.mxu0 0.0
    %1459 = vmatprep.subr.mxu0 0.0
    %1460 = vmatpush2.msra.mxu0 0.0
    %1461 = vmatprep.subr.mxu0 0.0
    %1462 = vmatpush2.msra.mxu0 0.0
    %1463 = vmatprep.subr.mxu0 0.0
    %1464 = vmatpush2.msra.mxu0 0.0
    %1465 = vmatprep.mubr.f32.mxu0 0.0
    %1466 = vmatmul.mubr.f32.gmra.mxu0 %v1399
    %v1467 = vpop.f32.mrf.mxu0
    %v1468 = vadd.f32 0.0, %v1467
    %v1469 = vpop.f32.mrf.mxu0
    %1470 = vdwg.mxu0
    %v1471 = vadd.f32 %v1398, %v1468
    %v1472 = vxor.u32 %v1471, 2147483648
    %v1473 = vmul.f32 %v1472, 1.442695
    %v1474 = vpow.pop %v1473
    %v1475 = vadd.f32 %v1474, 1.0
    %v1476 = vrcp.pop %v1475
    %v1477 = vmul.f32 1.0, %v1476
    %v1478 = vadd.f32 %v1468, %v304
    %1480 = vrot.lane.b32.xlu0 %v1478, 64
    %v1481 = vpop.permute.xlu0 %1480
    %v1483 = vmul.f32 %v1477, %v1481
    %1485 = vrot.lane.b32.xlu0 %v1483, 64
    %v1486 = vpop.permute.xlu0 %1485
    %v1488 = vadd.f32 %v1398, %v1486
    %v1489 = vtanh.pop %v1488
    %v1490 = vsub.f32 1.0, %v1477
    %1492 = vrot.lane.b32.xlu0 %v1489, 96
    %v1493 = vpop.permute.xlu0 %1492
    %v1495 = vmul.f32 %v1490, %v1493
    %v1496 = vmul.f32 %v1477, %v1391
    %v1497 = vadd.f32 %v1495, %v1496
    %1499 = vrot.lane.b32.xlu0 %v1497, 96
    %v1500 = vpop.permute.xlu0 %1499
    %s1502 = scalar_lea.vmem [#allocation3], 88
    %1503 = vst.msk [vmem:[%s1502] sm:$0xff] %vm78, %v1500
    %v1504 = vld [vmem:[%s652] sm:$0xff]
    %v1505 = vsel %vm78, %v1500, 0
    %1507 = vmatprep.subr.mxu0 0.0
    %1508 = vmatpush1.msra.mxu0 0.0
    %1509 = vmatprep.subr.mxu0 0.0
    %1510 = vmatpush1.msra.mxu0 0.0
    %1511 = vmatprep.subr.mxu0 0.0
    %1512 = vmatpush1.msra.mxu0 0.0
    %1513 = vmatprep.subr.mxu0 0.0
    %1514 = vmatpush1.msra.mxu0 0.0
    %1515 = vmatprep.subr.mxu0 0.0
    %1516 = vmatpush1.msra.mxu0 0.0
    %1517 = vmatprep.subr.mxu0 0.0
    %1518 = vmatpush1.msra.mxu0 0.0
    %1519 = vmatprep.subr.mxu0 0.0
    %1520 = vmatpush1.msra.mxu0 0.0
    %1521 = vmatprep.subr.mxu0 0.0
    %1522 = vmatpush1.msra.mxu0 0.0
    %1523 = vmatprep.subr.mxu0 0.0
    %1524 = vmatpush1.msra.mxu0 0.0
    %1525 = vmatprep.subr.mxu0 0.0
    %1526 = vmatpush1.msra.mxu0 0.0
    %1527 = vmatprep.subr.mxu0 0.0
    %1528 = vmatpush1.msra.mxu0 0.0
    %1529 = vmatprep.subr.mxu0 0.0
    %1530 = vmatpush1.msra.mxu0 0.0
    %1531 = vmatprep.subr.mxu0 0.0
    %1532 = vmatpush1.msra.mxu0 %v69
    %1533 = vmatprep.subr.mxu0 0.0
    %1534 = vmatpush1.msra.mxu0 %v68
    %1535 = vmatprep.subr.mxu0 0.0
    %1536 = vmatpush1.msra.mxu0 %v67
    %1537 = vmatprep.subr.mxu0 0.0
    %1538 = vmatpush1.msra.mxu0 %v66
    %1539 = vmatprep.subr.mxu0 0.0
    %1540 = vmatpush2.msra.mxu0 0.0
    %1541 = vmatprep.subr.mxu0 0.0
    %1542 = vmatpush2.msra.mxu0 0.0
    %1543 = vmatprep.subr.mxu0 0.0
    %1544 = vmatpush2.msra.mxu0 0.0
    %1545 = vmatprep.subr.mxu0 0.0
    %1546 = vmatpush2.msra.mxu0 0.0
    %1547 = vmatprep.subr.mxu0 0.0
    %1548 = vmatpush2.msra.mxu0 0.0
    %1549 = vmatprep.subr.mxu0 0.0
    %1550 = vmatpush2.msra.mxu0 0.0
    %1551 = vmatprep.subr.mxu0 0.0
    %1552 = vmatpush2.msra.mxu0 0.0
    %1553 = vmatprep.subr.mxu0 0.0
    %1554 = vmatpush2.msra.mxu0 0.0
    %1555 = vmatprep.subr.mxu0 0.0
    %1556 = vmatpush2.msra.mxu0 0.0
    %1557 = vmatprep.subr.mxu0 0.0
    %1558 = vmatpush2.msra.mxu0 0.0
    %1559 = vmatprep.subr.mxu0 0.0
    %1560 = vmatpush2.msra.mxu0 0.0
    %1561 = vmatprep.subr.mxu0 0.0
    %1562 = vmatpush2.msra.mxu0 0.0
    %1563 = vmatprep.subr.mxu0 0.0
    %1564 = vmatpush2.msra.mxu0 0.0
    %1565 = vmatprep.subr.mxu0 0.0
    %1566 = vmatpush2.msra.mxu0 0.0
    %1567 = vmatprep.subr.mxu0 0.0
    %1568 = vmatpush2.msra.mxu0 0.0
    %1569 = vmatprep.subr.mxu0 0.0
    %1570 = vmatpush2.msra.mxu0 0.0
    %1571 = vmatprep.mubr.f32.mxu0 0.0
    %1572 = vmatmul.mubr.f32.gmra.mxu0 %v1505
    %v1573 = vpop.f32.mrf.mxu0
    %v1574 = vadd.f32 0.0, %v1573
    %v1575 = vpop.f32.mrf.mxu0
    %1576 = vdwg.mxu0
    %v1577 = vadd.f32 %v1504, %v1574
    %v1578 = vxor.u32 %v1577, 2147483648
    %v1579 = vmul.f32 %v1578, 1.442695
    %v1580 = vpow.pop %v1579
    %v1581 = vadd.f32 %v1580, 1.0
    %v1582 = vrcp.pop %v1581
    %v1583 = vmul.f32 1.0, %v1582
    %v1584 = vadd.f32 %v1574, %v304
    %1586 = vrot.lane.b32.xlu0 %v1584, 64
    %v1587 = vpop.permute.xlu0 %1586
    %v1589 = vmul.f32 %v1583, %v1587
    %1591 = vrot.lane.b32.xlu0 %v1589, 64
    %v1592 = vpop.permute.xlu0 %1591
    %v1594 = vadd.f32 %v1504, %v1592
    %v1595 = vtanh.pop %v1594
    %v1596 = vsub.f32 1.0, %v1583
    %1598 = vrot.lane.b32.xlu0 %v1595, 96
    %v1599 = vpop.permute.xlu0 %1598
    %v1601 = vmul.f32 %v1596, %v1599
    %v1602 = vmul.f32 %v1583, %v1497
    %v1603 = vadd.f32 %v1601, %v1602
    %1605 = vrot.lane.b32.xlu0 %v1603, 96
    %v1606 = vpop.permute.xlu0 %1605
    %s1608 = scalar_lea.vmem [#allocation3], 96
    %1609 = vst.msk [vmem:[%s1608] sm:$0xff] %vm78, %v1606
    %v1610 = vld [vmem:[%s759] sm:$0xff]
    %v1611 = vsel %vm78, %v1606, 0
    %1613 = vmatprep.subr.mxu0 0.0
    %1614 = vmatpush1.msra.mxu0 0.0
    %1615 = vmatprep.subr.mxu0 0.0
    %1616 = vmatpush1.msra.mxu0 0.0
    %1617 = vmatprep.subr.mxu0 0.0
    %1618 = vmatpush1.msra.mxu0 0.0
    %1619 = vmatprep.subr.mxu0 0.0
    %1620 = vmatpush1.msra.mxu0 0.0
    %1621 = vmatprep.subr.mxu0 0.0
    %1622 = vmatpush1.msra.mxu0 0.0
    %1623 = vmatprep.subr.mxu0 0.0
    %1624 = vmatpush1.msra.mxu0 0.0
    %1625 = vmatprep.subr.mxu0 0.0
    %1626 = vmatpush1.msra.mxu0 0.0
    %1627 = vmatprep.subr.mxu0 0.0
    %1628 = vmatpush1.msra.mxu0 0.0
    %1629 = vmatprep.subr.mxu0 0.0
    %1630 = vmatpush1.msra.mxu0 0.0
    %1631 = vmatprep.subr.mxu0 0.0
    %1632 = vmatpush1.msra.mxu0 0.0
    %1633 = vmatprep.subr.mxu0 0.0
    %1634 = vmatpush1.msra.mxu0 0.0
    %1635 = vmatprep.subr.mxu0 0.0
    %1636 = vmatpush1.msra.mxu0 0.0
    %1637 = vmatprep.subr.mxu0 0.0
    %1638 = vmatpush1.msra.mxu0 %v69
    %1639 = vmatprep.subr.mxu0 0.0
    %1640 = vmatpush1.msra.mxu0 %v68
    %1641 = vmatprep.subr.mxu0 0.0
    %1642 = vmatpush1.msra.mxu0 %v67
    %1643 = vmatprep.subr.mxu0 0.0
    %1644 = vmatpush1.msra.mxu0 %v66
    %1645 = vmatprep.subr.mxu0 0.0
    %1646 = vmatpush2.msra.mxu0 0.0
    %1647 = vmatprep.subr.mxu0 0.0
    %1648 = vmatpush2.msra.mxu0 0.0
    %1649 = vmatprep.subr.mxu0 0.0
    %1650 = vmatpush2.msra.mxu0 0.0
    %1651 = vmatprep.subr.mxu0 0.0
    %1652 = vmatpush2.msra.mxu0 0.0
    %1653 = vmatprep.subr.mxu0 0.0
    %1654 = vmatpush2.msra.mxu0 0.0
    %1655 = vmatprep.subr.mxu0 0.0
    %1656 = vmatpush2.msra.mxu0 0.0
    %1657 = vmatprep.subr.mxu0 0.0
    %1658 = vmatpush2.msra.mxu0 0.0
    %1659 = vmatprep.subr.mxu0 0.0
    %1660 = vmatpush2.msra.mxu0 0.0
    %1661 = vmatprep.subr.mxu0 0.0
    %1662 = vmatpush2.msra.mxu0 0.0
    %1663 = vmatprep.subr.mxu0 0.0
    %1664 = vmatpush2.msra.mxu0 0.0
    %1665 = vmatprep.subr.mxu0 0.0
    %1666 = vmatpush2.msra.mxu0 0.0
    %1667 = vmatprep.subr.mxu0 0.0
    %1668 = vmatpush2.msra.mxu0 0.0
    %1669 = vmatprep.subr.mxu0 0.0
    %1670 = vmatpush2.msra.mxu0 0.0
    %1671 = vmatprep.subr.mxu0 0.0
    %1672 = vmatpush2.msra.mxu0 0.0
    %1673 = vmatprep.subr.mxu0 0.0
    %1674 = vmatpush2.msra.mxu0 0.0
    %1675 = vmatprep.subr.mxu0 0.0
    %1676 = vmatpush2.msra.mxu0 0.0
    %1677 = vmatprep.mubr.f32.mxu0 0.0
    %1678 = vmatmul.mubr.f32.gmra.mxu0 %v1611
    %v1679 = vpop.f32.mrf.mxu0
    %v1680 = vadd.f32 0.0, %v1679
    %v1681 = vpop.f32.mrf.mxu0
    %1682 = vdwg.mxu0
    %v1683 = vadd.f32 %v1610, %v1680
    %v1684 = vxor.u32 %v1683, 2147483648
    %v1685 = vmul.f32 %v1684, 1.442695
    %v1686 = vpow.pop %v1685
    %v1687 = vadd.f32 %v1686, 1.0
    %v1688 = vrcp.pop %v1687
    %v1689 = vmul.f32 1.0, %v1688
    %v1690 = vadd.f32 %v1680, %v304
    %1692 = vrot.lane.b32.xlu0 %v1690, 64
    %v1693 = vpop.permute.xlu0 %1692
    %v1695 = vmul.f32 %v1689, %v1693
    %1697 = vrot.lane.b32.xlu0 %v1695, 64
    %v1698 = vpop.permute.xlu0 %1697
    %v1700 = vadd.f32 %v1610, %v1698
    %v1701 = vtanh.pop %v1700
    %v1702 = vsub.f32 1.0, %v1689
    %1704 = vrot.lane.b32.xlu0 %v1701, 96
    %v1705 = vpop.permute.xlu0 %1704
    %v1707 = vmul.f32 %v1702, %v1705
    %v1708 = vmul.f32 %v1689, %v1603
    %v1709 = vadd.f32 %v1707, %v1708
    %1711 = vrot.lane.b32.xlu0 %v1709, 96
    %v1712 = vpop.permute.xlu0 %1711
    %s1714 = scalar_lea.vmem [#allocation3], 104
    %1715 = vst.msk [vmem:[%s1714] sm:$0xff] %vm78, %v1712
    %v1716 = vld [vmem:[%s866] sm:$0xff]
    %v1717 = vsel %vm78, %v1712, 0
    %1719 = vmatprep.subr.mxu0 0.0
    %1720 = vmatpush1.msra.mxu0 0.0
    %1721 = vmatprep.subr.mxu0 0.0
    %1722 = vmatpush1.msra.mxu0 0.0
    %1723 = vmatprep.subr.mxu0 0.0
    %1724 = vmatpush1.msra.mxu0 0.0
    %1725 = vmatprep.subr.mxu0 0.0
    %1726 = vmatpush1.msra.mxu0 0.0
    %1727 = vmatprep.subr.mxu0 0.0
    %1728 = vmatpush1.msra.mxu0 0.0
    %1729 = vmatprep.subr.mxu0 0.0
    %1730 = vmatpush1.msra.mxu0 0.0
    %1731 = vmatprep.subr.mxu0 0.0
    %1732 = vmatpush1.msra.mxu0 0.0
    %1733 = vmatprep.subr.mxu0 0.0
    %1734 = vmatpush1.msra.mxu0 0.0
    %1735 = vmatprep.subr.mxu0 0.0
    %1736 = vmatpush1.msra.mxu0 0.0
    %1737 = vmatprep.subr.mxu0 0.0
    %1738 = vmatpush1.msra.mxu0 0.0
    %1739 = vmatprep.subr.mxu0 0.0
    %1740 = vmatpush1.msra.mxu0 0.0
    %1741 = vmatprep.subr.mxu0 0.0
    %1742 = vmatpush1.msra.mxu0 0.0
    %1743 = vmatprep.subr.mxu0 0.0
    %1744 = vmatpush1.msra.mxu0 %v69
    %1745 = vmatprep.subr.mxu0 0.0
    %1746 = vmatpush1.msra.mxu0 %v68
    %1747 = vmatprep.subr.mxu0 0.0
    %1748 = vmatpush1.msra.mxu0 %v67
    %1749 = vmatprep.subr.mxu0 0.0
    %1750 = vmatpush1.msra.mxu0 %v66
    %1751 = vmatprep.subr.mxu0 0.0
    %1752 = vmatpush2.msra.mxu0 0.0
    %1753 = vmatprep.subr.mxu0 0.0
    %1754 = vmatpush2.msra.mxu0 0.0
    %1755 = vmatprep.subr.mxu0 0.0
    %1756 = vmatpush2.msra.mxu0 0.0
    %1757 = vmatprep.subr.mxu0 0.0
    %1758 = vmatpush2.msra.mxu0 0.0
    %1759 = vmatprep.subr.mxu0 0.0
    %1760 = vmatpush2.msra.mxu0 0.0
    %1761 = vmatprep.subr.mxu0 0.0
    %1762 = vmatpush2.msra.mxu0 0.0
    %1763 = vmatprep.subr.mxu0 0.0
    %1764 = vmatpush2.msra.mxu0 0.0
    %1765 = vmatprep.subr.mxu0 0.0
    %1766 = vmatpush2.msra.mxu0 0.0
    %1767 = vmatprep.subr.mxu0 0.0
    %1768 = vmatpush2.msra.mxu0 0.0
    %1769 = vmatprep.subr.mxu0 0.0
    %1770 = vmatpush2.msra.mxu0 0.0
    %1771 = vmatprep.subr.mxu0 0.0
    %1772 = vmatpush2.msra.mxu0 0.0
    %1773 = vmatprep.subr.mxu0 0.0
    %1774 = vmatpush2.msra.mxu0 0.0
    %1775 = vmatprep.subr.mxu0 0.0
    %1776 = vmatpush2.msra.mxu0 0.0
    %1777 = vmatprep.subr.mxu0 0.0
    %1778 = vmatpush2.msra.mxu0 0.0
    %1779 = vmatprep.subr.mxu0 0.0
    %1780 = vmatpush2.msra.mxu0 0.0
    %1781 = vmatprep.subr.mxu0 0.0
    %1782 = vmatpush2.msra.mxu0 0.0
    %1783 = vmatprep.mubr.f32.mxu0 0.0
    %1784 = vmatmul.mubr.f32.gmra.mxu0 %v1717
    %v1785 = vpop.f32.mrf.mxu0
    %v1786 = vadd.f32 0.0, %v1785
    %v1787 = vpop.f32.mrf.mxu0
    %1788 = vdwg.mxu0
    %v1789 = vadd.f32 %v1716, %v1786
    %v1790 = vxor.u32 %v1789, 2147483648
    %v1791 = vmul.f32 %v1790, 1.442695
    %v1792 = vpow.pop %v1791
    %v1793 = vadd.f32 %v1792, 1.0
    %v1794 = vrcp.pop %v1793
    %v1795 = vmul.f32 1.0, %v1794
    %v1796 = vadd.f32 %v1786, %v304
    %1798 = vrot.lane.b32.xlu0 %v1796, 64
    %v1799 = vpop.permute.xlu0 %1798
    %v1801 = vmul.f32 %v1795, %v1799
    %1803 = vrot.lane.b32.xlu0 %v1801, 64
    %v1804 = vpop.permute.xlu0 %1803
    %v1806 = vadd.f32 %v1716, %v1804
    %v1807 = vtanh.pop %v1806
    %v1808 = vsub.f32 1.0, %v1795
    %1810 = vrot.lane.b32.xlu0 %v1807, 96
    %v1811 = vpop.permute.xlu0 %1810
    %v1813 = vmul.f32 %v1808, %v1811
    %v1814 = vmul.f32 %v1795, %v1709
    %v1815 = vadd.f32 %v1813, %v1814
    %1817 = vrot.lane.b32.xlu0 %v1815, 96
    %v1818 = vpop.permute.xlu0 %1817
    %s1820 = scalar_lea.vmem [#allocation3], 112
    %1821 = vst.msk [vmem:[%s1820] sm:$0xff] %vm78, %v1818
    %v1822 = vld [vmem:[%s973] sm:$0xff]
    %v1823 = vsel %vm78, %v1818, 0
    %1825 = vmatprep.subr.mxu0 0.0
    %1826 = vmatpush1.msra.mxu0 0.0
    %1827 = vmatprep.subr.mxu0 0.0
    %1828 = vmatpush1.msra.mxu0 0.0
    %1829 = vmatprep.subr.mxu0 0.0
    %1830 = vmatpush1.msra.mxu0 0.0
    %1831 = vmatprep.subr.mxu0 0.0
    %1832 = vmatpush1.msra.mxu0 0.0
    %1833 = vmatprep.subr.mxu0 0.0
    %1834 = vmatpush1.msra.mxu0 0.0
    %1835 = vmatprep.subr.mxu0 0.0
    %1836 = vmatpush1.msra.mxu0 0.0
    %1837 = vmatprep.subr.mxu0 0.0
    %1838 = vmatpush1.msra.mxu0 0.0
    %1839 = vmatprep.subr.mxu0 0.0
    %1840 = vmatpush1.msra.mxu0 0.0
    %1841 = vmatprep.subr.mxu0 0.0
    %1842 = vmatpush1.msra.mxu0 0.0
    %1843 = vmatprep.subr.mxu0 0.0
    %1844 = vmatpush1.msra.mxu0 0.0
    %1845 = vmatprep.subr.mxu0 0.0
    %1846 = vmatpush1.msra.mxu0 0.0
    %1847 = vmatprep.subr.mxu0 0.0
    %1848 = vmatpush1.msra.mxu0 0.0
    %1849 = vmatprep.subr.mxu0 0.0
    %1850 = vmatpush1.msra.mxu0 %v69
    %1851 = vmatprep.subr.mxu0 0.0
    %1852 = vmatpush1.msra.mxu0 %v68
    %1853 = vmatprep.subr.mxu0 0.0
    %1854 = vmatpush1.msra.mxu0 %v67
    %1855 = vmatprep.subr.mxu0 0.0
    %1856 = vmatpush1.msra.mxu0 %v66
    %1857 = vmatprep.subr.mxu0 0.0
    %1858 = vmatpush2.msra.mxu0 0.0
    %1859 = vmatprep.subr.mxu0 0.0
    %1860 = vmatpush2.msra.mxu0 0.0
    %1861 = vmatprep.subr.mxu0 0.0
    %1862 = vmatpush2.msra.mxu0 0.0
    %1863 = vmatprep.subr.mxu0 0.0
    %1864 = vmatpush2.msra.mxu0 0.0
    %1865 = vmatprep.subr.mxu0 0.0
    %1866 = vmatpush2.msra.mxu0 0.0
    %1867 = vmatprep.subr.mxu0 0.0
    %1868 = vmatpush2.msra.mxu0 0.0
    %1869 = vmatprep.subr.mxu0 0.0
    %1870 = vmatpush2.msra.mxu0 0.0
    %1871 = vmatprep.subr.mxu0 0.0
    %1872 = vmatpush2.msra.mxu0 0.0
    %1873 = vmatprep.subr.mxu0 0.0
    %1874 = vmatpush2.msra.mxu0 0.0
    %1875 = vmatprep.subr.mxu0 0.0
    %1876 = vmatpush2.msra.mxu0 0.0
    %1877 = vmatprep.subr.mxu0 0.0
    %1878 = vmatpush2.msra.mxu0 0.0
    %1879 = vmatprep.subr.mxu0 0.0
    %1880 = vmatpush2.msra.mxu0 0.0
    %1881 = vmatprep.subr.mxu0 0.0
    %1882 = vmatpush2.msra.mxu0 0.0
    %1883 = vmatprep.subr.mxu0 0.0
    %1884 = vmatpush2.msra.mxu0 0.0
    %1885 = vmatprep.subr.mxu0 0.0
    %1886 = vmatpush2.msra.mxu0 0.0
    %1887 = vmatprep.subr.mxu0 0.0
    %1888 = vmatpush2.msra.mxu0 0.0
    %1889 = vmatprep.mubr.f32.mxu0 0.0
    %1890 = vmatmul.mubr.f32.gmra.mxu0 %v1823
    %v1891 = vpop.f32.mrf.mxu0
    %v1892 = vadd.f32 0.0, %v1891
    %v1893 = vpop.f32.mrf.mxu0
    %1894 = vdwg.mxu0
    %v1895 = vadd.f32 %v1822, %v1892
    %v1896 = vxor.u32 %v1895, 2147483648
    %v1897 = vmul.f32 %v1896, 1.442695
    %v1898 = vpow.pop %v1897
    %v1899 = vadd.f32 %v1898, 1.0
    %v1900 = vrcp.pop %v1899
    %v1901 = vmul.f32 1.0, %v1900
    %v1902 = vadd.f32 %v1892, %v304
    %1904 = vrot.lane.b32.xlu0 %v1902, 64
    %v1905 = vpop.permute.xlu0 %1904
    %v1907 = vmul.f32 %v1901, %v1905
    %1909 = vrot.lane.b32.xlu0 %v1907, 64
    %v1910 = vpop.permute.xlu0 %1909
    %v1912 = vadd.f32 %v1822, %v1910
    %v1913 = vtanh.pop %v1912
    %v1914 = vsub.f32 1.0, %v1901
    %1916 = vrot.lane.b32.xlu0 %v1913, 96
    %v1917 = vpop.permute.xlu0 %1916
    %v1919 = vmul.f32 %v1914, %v1917
    %v1920 = vmul.f32 %v1901, %v1815
    %v1921 = vadd.f32 %v1919, %v1920
    %1923 = vrot.lane.b32.xlu0 %v1921, 96
    %v1924 = vpop.permute.xlu0 %1923
    %s1926 = scalar_lea.vmem [#allocation3], 120
    %1927 = vst.msk [vmem:[%s1926] sm:$0xff] %vm78, %v1924
    %v1928 = vld [vmem:[#allocation3] sm:$0xff]
    %v1929 = vld [vmem:[#allocation3 + $0x8] sm:$0xff]
    %v1930 = vld [vmem:[#allocation3 + $0x10] sm:$0xff]
    %v1931 = vld [vmem:[#allocation3 + $0x18] sm:$0xff]
    %v1932 = vld [vmem:[#allocation3 + $0x20] sm:$0xff]
    %v1933 = vld [vmem:[#allocation3 + $0x28] sm:$0xff]
    %v1934 = vld [vmem:[#allocation3 + $0x30] sm:$0xff]
    %v1935 = vld [vmem:[#allocation3 + $0x38] sm:$0xff]
    %v1936 = vld [vmem:[#allocation3 + $0x40] sm:$0xff]
    %v1937 = vld [vmem:[#allocation3 + $0x48] sm:$0xff]
    %v1938 = vld [vmem:[#allocation3 + $0x50] sm:$0xff]
    %v1939 = vld [vmem:[#allocation3 + $0x58] sm:$0xff]
    %v1940 = vld [vmem:[#allocation3 + $0x60] sm:$0xff]
    %v1941 = vld [vmem:[#allocation3 + $0x68] sm:$0xff]
    %v1942 = vld [vmem:[#allocation3 + $0x70] sm:$0xff]
    %v1943 = vld [vmem:[#allocation3 + $0x78] sm:$0xff]
    %v1944 = vsel %vm78, %v1928, -inf
    %v1945 = vsel %vm78, %v1929, -inf
    %v1946 = vsel %vm78, %v1930, -inf
    %v1947 = vsel %vm78, %v1931, -inf
    %v1948 = vsel %vm78, %v1932, -inf
    %v1949 = vmax.f32 %v1944, %v1948
    %v1950 = vsel %vm78, %v1933, -inf
    %v1951 = vmax.f32 %v1945, %v1950
    %v1952 = vsel %vm78, %v1934, -inf
    %v1953 = vmax.f32 %v1946, %v1952
    %v1954 = vsel %vm78, %v1935, -inf
    %v1955 = vmax.f32 %v1947, %v1954
    %v1956 = vsel %vm78, %v1936, -inf
    %v1957 = vmax.f32 %v1949, %v1956
    %v1958 = vsel %vm78, %v1937, -inf
    %v1959 = vmax.f32 %v1951, %v1958
    %v1960 = vsel %vm78, %v1938, -inf
    %v1961 = vmax.f32 %v1953, %v1960
    %v1962 = vsel %vm78, %v1939, -inf
    %v1963 = vmax.f32 %v1955, %v1962
    %v1964 = vsel %vm78, %v1940, -inf
    %v1965 = vmax.f32 %v1957, %v1964
    %v1966 = vsel %vm78, %v1941, -inf
    %v1967 = vmax.f32 %v1959, %v1966
    %v1968 = vsel %vm78, %v1942, -inf
    %v1969 = vmax.f32 %v1961, %v1968
    %v1970 = vsel %vm78, %v1943, -inf
    %v1971 = vmax.f32 %v1963, %v1970
    %v1972 = vmax.f32 %v1965, %v1967
    %v1973 = vmax.f32 %v1969, %v1971
    %v1974 = vmax.f32 %v1972, %v1973
    %v1975 = vsub.f32 %v1928, %v1974
    %v1976 = vsub.f32 %v1929, %v1974
    %v1977 = vsub.f32 %v1930, %v1974
    %v1978 = vsub.f32 %v1931, %v1974
    %v1979 = vsub.f32 %v1932, %v1974
    %v1980 = vsub.f32 %v1933, %v1974
    %v1981 = vsub.f32 %v1934, %v1974
    %v1982 = vsub.f32 %v1935, %v1974
    %v1983 = vsub.f32 %v1936, %v1974
    %v1984 = vsub.f32 %v1937, %v1974
    %v1985 = vsub.f32 %v1938, %v1974
    %v1986 = vsub.f32 %v1939, %v1974
    %v1987 = vsub.f32 %v1940, %v1974
    %v1988 = vsub.f32 %v1941, %v1974
    %v1989 = vsub.f32 %v1942, %v1974
    %v1990 = vsub.f32 %v1943, %v1974
    %v1991 = vmul.f32 %v1975, 1.442695
    %v1992 = vpow.pop %v1991
    %v1993 = vmul.f32 %v1976, 1.442695
    %v1994 = vpow.pop %v1993
    %v1995 = vmul.f32 %v1977, 1.442695
    %v1996 = vpow.pop %v1995
    %v1997 = vmul.f32 %v1978, 1.442695
    %v1998 = vpow.pop %v1997
    %v1999 = vmul.f32 %v1979, 1.442695
    %v2000 = vpow.pop %v1999
    %v2001 = vmul.f32 %v1980, 1.442695
    %v2002 = vpow.pop %v2001
    %v2003 = vmul.f32 %v1981, 1.442695
    %v2004 = vpow.pop %v2003
    %v2005 = vmul.f32 %v1982, 1.442695
    %v2006 = vpow.pop %v2005
    %v2007 = vmul.f32 %v1983, 1.442695
    %v2008 = vpow.pop %v2007
    %v2009 = vmul.f32 %v1984, 1.442695
    %v2010 = vpow.pop %v2009
    %v2011 = vmul.f32 %v1985, 1.442695
    %v2012 = vpow.pop %v2011
    %v2013 = vmul.f32 %v1986, 1.442695
    %v2014 = vpow.pop %v2013
    %v2015 = vmul.f32 %v1987, 1.442695
    %v2016 = vpow.pop %v2015
    %v2017 = vmul.f32 %v1988, 1.442695
    %v2018 = vpow.pop %v2017
    %v2019 = vmul.f32 %v1989, 1.442695
    %v2020 = vpow.pop %v2019
    %v2021 = vmul.f32 %v1990, 1.442695
    %v2022 = vpow.pop %v2021
    %v2023 = vsel %vm78, %v1992, 0.0
    %v2024 = vsel %vm78, %v1994, 0.0
    %v2025 = vadd.f32 %v2023, %v2024
    %v2026 = vsel %vm78, %v1996, 0.0
    %v2027 = vadd.f32 %v2025, %v2026
    %v2028 = vsel %vm78, %v1998, 0.0
    %v2029 = vadd.f32 %v2027, %v2028
    %v2030 = vsel %vm78, %v2000, 0.0
    %v2031 = vadd.f32 %v2029, %v2030
    %v2032 = vsel %vm78, %v2002, 0.0
    %v2033 = vadd.f32 %v2031, %v2032
    %v2034 = vsel %vm78, %v2004, 0.0
    %v2035 = vadd.f32 %v2033, %v2034
    %v2036 = vsel %vm78, %v2006, 0.0
    %v2037 = vadd.f32 %v2035, %v2036
    %v2038 = vsel %vm78, %v2008, 0.0
    %v2039 = vadd.f32 %v2037, %v2038
    %v2040 = vsel %vm78, %v2010, 0.0
    %v2041 = vadd.f32 %v2039, %v2040
    %v2042 = vsel %vm78, %v2012, 0.0
    %v2043 = vadd.f32 %v2041, %v2042
    %v2044 = vsel %vm78, %v2014, 0.0
    %v2045 = vadd.f32 %v2043, %v2044
    %v2046 = vsel %vm78, %v2016, 0.0
    %v2047 = vadd.f32 %v2045, %v2046
    %v2048 = vsel %vm78, %v2018, 0.0
    %v2049 = vadd.f32 %v2047, %v2048
    %v2050 = vsel %vm78, %v2020, 0.0
    %v2051 = vadd.f32 %v2049, %v2050
    %v2052 = vsel %vm78, %v2022, 0.0
    %v2053 = vadd.f32 %v2051, %v2052
    %v2054 = vrcp.pop %v2053
    %v2055 = vmul.f32 %v1992, %v2054
    %v2056 = vmul.f32 %v1994, %v2054
    %v2057 = vmul.f32 %v1996, %v2054
    %v2058 = vmul.f32 %v1998, %v2054
    %v2059 = vmul.f32 %v2000, %v2054
    %v2060 = vmul.f32 %v2002, %v2054
    %v2061 = vmul.f32 %v2004, %v2054
    %v2062 = vmul.f32 %v2006, %v2054
    %v2063 = vmul.f32 %v2008, %v2054
    %v2064 = vmul.f32 %v2010, %v2054
    %v2065 = vmul.f32 %v2012, %v2054
    %v2066 = vmul.f32 %v2014, %v2054
    %v2067 = vmul.f32 %v2016, %v2054
    %v2068 = vmul.f32 %v2018, %v2054
    %v2069 = vmul.f32 %v2020, %v2054
    %v2070 = vmul.f32 %v2022, %v2054
    %v2071 = vmul.f32 %v54, %v2055
    %v2072 = vmul.f32 %v55, %v2056
    %v2073 = vmul.f32 %v56, %v2057
    %v2074 = vmul.f32 %v57, %v2058
    %v2075 = vmul.f32 %v58, %v2059
    %v2076 = vmul.f32 %v59, %v2060
    %v2077 = vmul.f32 %v60, %v2061
    %v2078 = vmul.f32 %v61, %v2062
    %v2079 = vmul.f32 %v54, %v2063
    %v2080 = vmul.f32 %v55, %v2064
    %v2081 = vmul.f32 %v56, %v2065
    %v2082 = vmul.f32 %v57, %v2066
    %v2083 = vmul.f32 %v58, %v2067
    %v2084 = vmul.f32 %v59, %v2068
    %v2085 = vmul.f32 %v60, %v2069
    %v2086 = vmul.f32 %v61, %v2070
    %v2087 = vmax.f32 %v2071, 0.0
    %v2088 = vmax.f32 %v2072, 0.0
    %v2089 = vmax.f32 %v2073, 0.0
    %v2090 = vmax.f32 %v2074, 0.0
    %v2091 = vmax.f32 %v2075, 0.0
    %v2092 = vmax.f32 %v2076, 0.0
    %v2093 = vmax.f32 %v2077, 0.0
    %v2094 = vmax.f32 %v2078, 0.0
    %v2095 = vmax.f32 %v2079, 0.0
    %v2096 = vmax.f32 %v2080, 0.0
    %v2097 = vmax.f32 %v2081, 0.0
    %v2098 = vmax.f32 %v2082, 0.0
    %v2099 = vmax.f32 %v2083, 0.0
    %v2100 = vmax.f32 %v2084, 0.0
    %v2101 = vmax.f32 %v2085, 0.0
    %v2102 = vmax.f32 %v2086, 0.0
    %v2103 = vld [vmem:[%s5] sm:$0xff]
    %v2104 = vld [vmem:[%s5 + $0x8] sm:$0xff]
    %v2105 = vld [vmem:[%s5 + $0x10] sm:$0xff]
    %v2106 = vld [vmem:[%s5 + $0x18] sm:$0xff]
    %v2107 = vld [vmem:[%s6] sm:$0x1]
    %v2109 = vlaneseq
    %v2110 = vshrl.u32 %v2109, 7
    %v2111 = vsub.s32 0, %v2110
    %v2112 = vrot.slane %v2107, %v2111
    %v2115 = vsel %vm78, %v2087, 0
    %v2118 = vsel %vm78, %v2088, 0
    %v2121 = vsel %vm78, %v2089, 0
    %v2124 = vsel %vm78, %v2090, 0
    %v2127 = vsel %vm78, %v2091, 0
    %v2130 = vsel %vm78, %v2092, 0
    %v2133 = vsel %vm78, %v2093, 0
    %v2136 = vsel %vm78, %v2094, 0
    %v2139 = vsel %vm78, %v2095, 0
    %v2142 = vsel %vm78, %v2096, 0
    %v2145 = vsel %vm78, %v2097, 0
    %v2148 = vsel %vm78, %v2098, 0
    %v2151 = vsel %vm78, %v2099, 0
    %v2154 = vsel %vm78, %v2100, 0
    %v2157 = vsel %vm78, %v2101, 0
    %v2160 = vsel %vm78, %v2102, 0
    %2162 = vmatprep.subr.mxu0 0.0
    %2163 = vmatpush1.msra.mxu0 0.0
    %2164 = vmatprep.subr.mxu0 0.0
    %2165 = vmatpush1.msra.mxu0 0.0
    %2166 = vmatprep.subr.mxu0 0.0
    %2167 = vmatpush1.msra.mxu0 0.0
    %2168 = vmatprep.subr.mxu0 0.0
    %2169 = vmatpush1.msra.mxu0 0.0
    %2170 = vmatprep.subr.mxu0 0.0
    %2171 = vmatpush1.msra.mxu0 0.0
    %2172 = vmatprep.subr.mxu0 0.0
    %2173 = vmatpush1.msra.mxu0 0.0
    %2174 = vmatprep.subr.mxu0 0.0
    %2175 = vmatpush1.msra.mxu0 0.0
    %2176 = vmatprep.subr.mxu0 0.0
    %2177 = vmatpush1.msra.mxu0 0.0
    %2178 = vmatprep.subr.mxu0 0.0
    %2179 = vmatpush1.msra.mxu0 0.0
    %2180 = vmatprep.subr.mxu0 0.0
    %2181 = vmatpush1.msra.mxu0 0.0
    %2182 = vmatprep.subr.mxu0 0.0
    %2183 = vmatpush1.msra.mxu0 0.0
    %2184 = vmatprep.subr.mxu0 0.0
    %2185 = vmatpush1.msra.mxu0 0.0
    %2186 = vmatprep.subr.mxu0 0.0
    %2187 = vmatpush1.msra.mxu0 %v2106
    %2188 = vmatprep.subr.mxu0 0.0
    %2189 = vmatpush1.msra.mxu0 %v2105
    %2190 = vmatprep.subr.mxu0 0.0
    %2191 = vmatpush1.msra.mxu0 %v2104
    %2192 = vmatprep.subr.mxu0 0.0
    %2193 = vmatpush1.msra.mxu0 %v2103
    %2194 = vmatprep.subr.mxu0 0.0
    %2195 = vmatpush2.msra.mxu0 0.0
    %2196 = vmatprep.subr.mxu0 0.0
    %2197 = vmatpush2.msra.mxu0 0.0
    %2198 = vmatprep.subr.mxu0 0.0
    %2199 = vmatpush2.msra.mxu0 0.0
    %2200 = vmatprep.subr.mxu0 0.0
    %2201 = vmatpush2.msra.mxu0 0.0
    %2202 = vmatprep.subr.mxu0 0.0
    %2203 = vmatpush2.msra.mxu0 0.0
    %2204 = vmatprep.subr.mxu0 0.0
    %2205 = vmatpush2.msra.mxu0 0.0
    %2206 = vmatprep.subr.mxu0 0.0
    %2207 = vmatpush2.msra.mxu0 0.0
    %2208 = vmatprep.subr.mxu0 0.0
    %2209 = vmatpush2.msra.mxu0 0.0
    %2210 = vmatprep.subr.mxu0 0.0
    %2211 = vmatpush2.msra.mxu0 0.0
    %2212 = vmatprep.subr.mxu0 0.0
    %2213 = vmatpush2.msra.mxu0 0.0
    %2214 = vmatprep.subr.mxu0 0.0
    %2215 = vmatpush2.msra.mxu0 0.0
    %2216 = vmatprep.subr.mxu0 0.0
    %2217 = vmatpush2.msra.mxu0 0.0
    %2218 = vmatprep.subr.mxu0 0.0
    %2219 = vmatpush2.msra.mxu0 0.0
    %2220 = vmatprep.subr.mxu0 0.0
    %2221 = vmatpush2.msra.mxu0 0.0
    %2222 = vmatprep.subr.mxu0 0.0
    %2223 = vmatpush2.msra.mxu0 0.0
    %2224 = vmatprep.subr.mxu0 0.0
    %2225 = vmatpush2.msra.mxu0 0.0
    %2226 = vmatprep.mubr.f32.mxu0 0.0
    %2227 = vmatmul.mubr.f32.gmra.mxu0 %v2115
    %v2228 = vpop.f32.mrf.mxu0
    %v2229 = vadd.f32 %v2112, %v2228
    %v2230 = vpop.f32.mrf.mxu0
    %2231 = vmatprep.mubr.f32.mxu0 0.0
    %2232 = vmatmul.mubr.f32.gmra.mxu0 %v2118
    %v2233 = vpop.f32.mrf.mxu0
    %v2234 = vadd.f32 %v2112, %v2233
    %v2235 = vpop.f32.mrf.mxu0
    %2236 = vmatprep.mubr.f32.mxu0 0.0
    %2237 = vmatmul.mubr.f32.gmra.mxu0 %v2121
    %v2238 = vpop.f32.mrf.mxu0
    %v2239 = vadd.f32 %v2112, %v2238
    %v2240 = vpop.f32.mrf.mxu0
    %2241 = vmatprep.mubr.f32.mxu0 0.0
    %2242 = vmatmul.mubr.f32.gmra.mxu0 %v2124
    %v2243 = vpop.f32.mrf.mxu0
    %v2244 = vadd.f32 %v2112, %v2243
    %v2245 = vpop.f32.mrf.mxu0
    %2246 = vmatprep.mubr.f32.mxu0 0.0
    %2247 = vmatmul.mubr.f32.gmra.mxu0 %v2127
    %v2248 = vpop.f32.mrf.mxu0
    %v2249 = vadd.f32 %v2112, %v2248
    %v2250 = vpop.f32.mrf.mxu0
    %2251 = vmatprep.mubr.f32.mxu0 0.0
    %2252 = vmatmul.mubr.f32.gmra.mxu0 %v2130
    %v2253 = vpop.f32.mrf.mxu0
    %v2254 = vadd.f32 %v2112, %v2253
    %v2255 = vpop.f32.mrf.mxu0
    %2256 = vmatprep.mubr.f32.mxu0 0.0
    %2257 = vmatmul.mubr.f32.gmra.mxu0 %v2133
    %v2258 = vpop.f32.mrf.mxu0
    %v2259 = vadd.f32 %v2112, %v2258
    %v2260 = vpop.f32.mrf.mxu0
    %2261 = vmatprep.mubr.f32.mxu0 0.0
    %2262 = vmatmul.mubr.f32.gmra.mxu0 %v2136
    %v2263 = vpop.f32.mrf.mxu0
    %v2264 = vadd.f32 %v2112, %v2263
    %v2265 = vpop.f32.mrf.mxu0
    %2266 = vmatprep.mubr.f32.mxu0 0.0
    %2267 = vmatmul.mubr.f32.gmra.mxu0 %v2139
    %v2268 = vpop.f32.mrf.mxu0
    %v2269 = vadd.f32 %v2112, %v2268
    %v2270 = vpop.f32.mrf.mxu0
    %2271 = vmatprep.mubr.f32.mxu0 0.0
    %2272 = vmatmul.mubr.f32.gmra.mxu0 %v2142
    %v2273 = vpop.f32.mrf.mxu0
    %v2274 = vadd.f32 %v2112, %v2273
    %v2275 = vpop.f32.mrf.mxu0
    %2276 = vmatprep.mubr.f32.mxu0 0.0
    %2277 = vmatmul.mubr.f32.gmra.mxu0 %v2145
    %v2278 = vpop.f32.mrf.mxu0
    %v2279 = vadd.f32 %v2112, %v2278
    %v2280 = vpop.f32.mrf.mxu0
    %2281 = vmatprep.mubr.f32.mxu0 0.0
    %2282 = vmatmul.mubr.f32.gmra.mxu0 %v2148
    %v2283 = vpop.f32.mrf.mxu0
    %v2284 = vadd.f32 %v2112, %v2283
    %v2285 = vpop.f32.mrf.mxu0
    %2286 = vmatprep.mubr.f32.mxu0 0.0
    %2287 = vmatmul.mubr.f32.gmra.mxu0 %v2151
    %v2288 = vpop.f32.mrf.mxu0
    %v2289 = vadd.f32 %v2112, %v2288
    %v2290 = vpop.f32.mrf.mxu0
    %2291 = vmatprep.mubr.f32.mxu0 0.0
    %2292 = vmatmul.mubr.f32.gmra.mxu0 %v2154
    %v2293 = vpop.f32.mrf.mxu0
    %v2294 = vadd.f32 %v2112, %v2293
    %v2295 = vpop.f32.mrf.mxu0
    %2296 = vmatprep.mubr.f32.mxu0 0.0
    %2297 = vmatmul.mubr.f32.gmra.mxu0 %v2157
    %v2298 = vpop.f32.mrf.mxu0
    %v2299 = vadd.f32 %v2112, %v2298
    %v2300 = vpop.f32.mrf.mxu0
    %2301 = vmatprep.mubr.f32.mxu0 0.0
    %2302 = vmatmul.mubr.f32.gmra.mxu0 %v2160
    %v2303 = vpop.f32.mrf.mxu0
    %v2304 = vadd.f32 %v2112, %v2303
    %v2305 = vpop.f32.mrf.mxu0
    %2306 = vdwg.mxu0
    %vm2307 = vcmask 15360
    %2308 = vst.msk [vmem:[%s7] sm:$0xff] %vm2307, %v2229
    %2309 = vst.msk [vmem:[%s7 + $0x8] sm:$0xff] %vm2307, %v2234
    %2310 = vst.msk [vmem:[%s7 + $0x10] sm:$0xff] %vm2307, %v2239
    %2311 = vst.msk [vmem:[%s7 + $0x18] sm:$0xff] %vm2307, %v2244
    %2312 = vst.msk [vmem:[%s7 + $0x20] sm:$0xff] %vm2307, %v2249
    %2313 = vst.msk [vmem:[%s7 + $0x28] sm:$0xff] %vm2307, %v2254
    %2314 = vst.msk [vmem:[%s7 + $0x30] sm:$0xff] %vm2307, %v2259
    %2315 = vst.msk [vmem:[%s7 + $0x38] sm:$0xff] %vm2307, %v2264
    %2316 = vst.msk [vmem:[%s7 + $0x40] sm:$0xff] %vm2307, %v2269
    %2317 = vst.msk [vmem:[%s7 + $0x48] sm:$0xff] %vm2307, %v2274
    %2318 = vst.msk [vmem:[%s7 + $0x50] sm:$0xff] %vm2307, %v2279
    %2319 = vst.msk [vmem:[%s7 + $0x58] sm:$0xff] %vm2307, %v2284
    %2320 = vst.msk [vmem:[%s7 + $0x60] sm:$0xff] %vm2307, %v2289
    %2321 = vst.msk [vmem:[%s7 + $0x68] sm:$0xff] %vm2307, %v2294
    %2322 = vst.msk [vmem:[%s7 + $0x70] sm:$0xff] %vm2307, %v2299
    %2323 = vst.msk [vmem:[%s7 + $0x78] sm:$0xff] %vm2307, %v2304
    // Predicated region
    $region38: #{tpu_custom_call.1} parent=1 // pred_check
      _
    $region39: #{tpu_custom_call.1} parent=1 // pred_check_branch
      %2325 = sbr.rel (0) target = $region41
    $region40: #{tpu_custom_call.1} parent=1 // pred_region
      _
    $region41: #{tpu_custom_call.1} parent=1 // pred_fallthru
      _
    // Predicated region
    $region42: #{tpu_custom_call.1} parent=1 // pred_check
      _
    $region43: #{tpu_custom_call.1} parent=1 // pred_check_branch
      %2327 = sbr.rel (0) target = $region45
    $region44: #{tpu_custom_call.1} parent=1 // pred_region
      _
    $region45: #{tpu_custom_call.1} parent=1 // pred_fallthru
      _
    %2328 = vsyncpa [#allocation5], 1
    %2329 = vsyncpa [#allocation7], 1

</llo_original>
